<compile_context>
chip_gen: v7x
topology: tpu7x:2x2x1
jax: 0.10.0
libtpu: 0.0.40
codegen_flags: <defaults>
</compile_context>

<pallas_src>
import jax
import jax.numpy as jnp
from jax.experimental import pallas as pl
from jax.experimental.pallas import tpu as pltpu


def fused_mlp_kernel(x_ref, w1_ref, b1_ref, w2_ref, b2_ref, o_ref, h_acc_ref):
    """One (tm, N) output slab; layer-1 reduction accumulated over grid axis 1."""
    k = pl.program_id(1)

    @pl.when(k == 0)
    def _():
        h_acc_ref[...] = jnp.zeros_like(h_acc_ref)

    # Layer 1 partial product: (tm, tk) @ (tk, H) accumulated in f32 (MXU).
    h_acc_ref[...] += jnp.dot(
        x_ref[...], w1_ref[...], preferred_element_type=jnp.float32
    )

    @pl.when(k == pl.num_programs(1) - 1)
    def _():
        # Epilogue: bias + ReLU (f32), then layer 2 entirely in VMEM.
        h = jnp.maximum(h_acc_ref[...] + b1_ref[...], 0.0)
        y = jnp.dot(
            h.astype(w2_ref.dtype), w2_ref[...],
            preferred_element_type=jnp.float32,
        ) + b2_ref[...]
        o_ref[...] = jnp.maximum(y, 0.0).astype(o_ref.dtype)


def _pick_tile(dim, preferred):
    """Largest tile from `preferred` that evenly divides `dim`, else `dim`."""
    for t in preferred:
        if t <= dim and dim % t == 0:
            return t
    return dim


def fused_mlp(x, w1, b1, w2, b2, *, tm=None, tk=None):
    """relu(relu(x @ w1 + b1) @ w2 + b2).

    x: (M, K); w1: (K, H); b1: (H,); w2: (H, N); b2: (N,)  -- weights already
    stored as (in_features, out_features), no runtime transpose.
    """
    M, K = x.shape
    K1, H = w1.shape
    H2, N = w2.shape
    assert K == K1 and H == H2 and b1.shape == (H,) and b2.shape == (N,)

    if tm is None:
        # Small batches: take the whole batch in one tile; otherwise large M tiles.
        tm = M if M <= 256 else _pick_tile(M, (256, 128, 64, 32, 16, 8))
    if tk is None:
        # Keep the whole layer-1 reduction in one step when it fits comfortably
        # in VMEM; otherwise tile it with large (>=512 preferred) chunks.
        tk = K if K <= 4096 else _pick_tile(K, (2048, 1024, 512, 256, 128))
    assert M % tm == 0 and K % tk == 0
    # TODO(synk): arbitrary (non-divisible) M/K would need wrapper-side
    # zero-padding or pl.cdiv-based ragged handling; not required here.

    b1_2d = b1.reshape(1, H)
    b2_2d = b2.reshape(1, N)

    itemsize = jnp.dtype(x.dtype).itemsize
    cost = pl.CostEstimate(
        flops=2 * M * K * H + 2 * M * H * N,
        transcendentals=0,
        bytes_accessed=itemsize
        * (M * K + K * H + H + H * N + N + M * N),
    )

    return pl.pallas_call(
        fused_mlp_kernel,
        out_shape=jax.ShapeDtypeStruct((M, N), x.dtype),
        grid_spec=pltpu.PrefetchScalarGridSpec(
            num_scalar_prefetch=0,
            grid=(M // tm, K // tk),
            in_specs=[
                pl.BlockSpec((tm, tk), lambda i, k: (i, k)),   # x tile
                pl.BlockSpec((tk, H), lambda i, k: (k, 0)),    # W1 tile
                pl.BlockSpec((1, H), lambda i, k: (0, 0)),     # b1 (VMEM-resident)
                pl.BlockSpec((H, N), lambda i, k: (0, 0)),     # W2 (VMEM-resident)
                pl.BlockSpec((1, N), lambda i, k: (0, 0)),     # b2 (VMEM-resident)
            ],
            out_specs=pl.BlockSpec((tm, N), lambda i, k: (i, 0)),
            scratch_shapes=[pltpu.VMEM((tm, H), jnp.float32)],  # hidden act h
        ),
        compiler_params=pltpu.CompilerParams(
            dimension_semantics=("parallel", "arbitrary"),
            # Explicit cap with headroom; stays within v7x's 64 MiB physical VMEM.
            vmem_limit_bytes=48 * 1024 * 1024,
        ),
        cost_estimate=cost,
    )(x, w1, b1_2d, w2, b2_2d)


def mlp_forward(x, params):
    """Forward pass equivalent to the PyTorch MLP module."""
    w1, b1, w2, b2 = params
    return fused_mlp(x, w1, b1, w2, b2)


def init_params(key, input_dim, hidden_dim, output_dim, dtype=jnp.float32):
    k1, k2, k3, k4 = jax.random.split(key, 4)
    # Mimic PyTorch Linear's default uniform(-1/sqrt(in), 1/sqrt(in)) init, but
    # store weights pre-transposed as (in_features, out_features) so the kernel
    # computes x @ W directly (no per-call transpose).
    bound1 = 1.0 / jnp.sqrt(input_dim)
    bound2 = 1.0 / jnp.sqrt(hidden_dim)
    w1 = jax.random.uniform(k1, (input_dim, hidden_dim), dtype, -bound1, bound1)
    b1 = jax.random.uniform(k2, (hidden_dim,), dtype, -bound1, bound1)
    w2 = jax.random.uniform(k3, (hidden_dim, output_dim), dtype, -bound2, bound2)
    b2 = jax.random.uniform(k4, (output_dim,), dtype, -bound2, bound2)
    return w1, b1, w2, b2


if __name__ == "__main__":
    # Small shapes consistent with the module: hidden_dim matches the real
    # module (768); input/output scaled down, batch=8.  Everything fits VMEM,
    # so the grid collapses to a single step.
    batch, input_dim, hidden_dim, output_dim = 8, 1024, 768, 512

    key = jax.random.PRNGKey(0)
    kx, kp = jax.random.split(key)
    x = jax.random.normal(kx, (batch, input_dim), jnp.float32)
    params = init_params(kp, input_dim, hidden_dim, output_dim)
    w1, b1, w2, b2 = params

    out = mlp_forward(x, params)
    out = jax.block_until_ready(out)

    # Plain-JAX reference.
    ref = jnp.maximum(jnp.maximum(x @ w1 + b1, 0.0) @ w2 + b2, 0.0)
    assert out.shape == (batch, output_dim)
    assert jnp.allclose(out, ref, atol=1e-4, rtol=1e-4)

    # Also exercise the K-tiled accumulation path (grid > 1 along the
    # reduction axis) to confirm the generic tiling stays correct.
    out_tiled = jax.block_until_ready(fused_mlp(x, w1, b1, w2, b2, tk=256))
    assert jnp.allclose(out_tiled, ref, atol=1e-4, rtol=1e-4)

    print("KERNEL_OK")
</pallas_src>

<mosaic_0001>
module attributes {stable_mosaic.version = 11 : i64} {
  func.func @fused_mlp_kernel(%arg0: i32, %arg1: i32, %arg2: memref<8x1024xf32, #tpu.memory_space<vmem>>, %arg3: memref<1024x768xf32, #tpu.memory_space<vmem>>, %arg4: memref<1x768xf32, #tpu.memory_space<vmem>>, %arg5: memref<768x512xf32, #tpu.memory_space<vmem>>, %arg6: memref<1x512xf32, #tpu.memory_space<vmem>>, %arg7: memref<8x512xf32, #tpu.memory_space<vmem>>, %arg8: memref<8x768xf32, #tpu.memory_space<vmem>>) attributes {dimension_semantics = [#tpu.dimension_semantics<parallel>, #tpu.dimension_semantics<arbitrary>], iteration_bounds = array<i64: 1, 1>, scalar_prefetch = 0 : i64, scratch_operands = 1 : i64, tpu.core_type = #tpu.core_type<tc>, window_params = [{transform_indices = @transform_0, window_bounds = array<i64: 8, 1024>}, {transform_indices = @transform_1, window_bounds = array<i64: 1024, 768>}, {pipeline_mode = #tpu.pipeline_mode<synchronous>, transform_indices = @transform_2, window_bounds = array<i64: 1, 768>}, {pipeline_mode = #tpu.pipeline_mode<synchronous>, transform_indices = @transform_3, window_bounds = array<i64: 768, 512>}, {pipeline_mode = #tpu.pipeline_mode<synchronous>, transform_indices = @transform_4, window_bounds = array<i64: 1, 512>}, {transform_indices = @transform_5, window_bounds = array<i64: 8, 512>}]} {
    %c0_i32 = arith.constant 0 : i32
    %0 = arith.cmpi eq, %arg1, %c0_i32 : i32
    %1 = arith.extui %0 : i1 to i32
    %c0_i32_0 = arith.constant 0 : i32
    %2 = arith.cmpi ne, %1, %c0_i32_0 : i32
    scf.if %2 {
      %cst_10 = arith.constant 0.000000e+00 : f32
      %12 = vector.broadcast %cst_10 : f32 to vector<8x768xf32>
      %c0_11 = arith.constant 0 : index
      %c0_12 = arith.constant 0 : index
      %13 = vector.load %arg8[%c0_11, %c0_12] : memref<8x768xf32, #tpu.memory_space<vmem>>, vector<8x768xf32>
      tpu.vector_store %arg8[%c0_11, %c0_12], %12 {strides = array<i32>} : memref<8x768xf32, #tpu.memory_space<vmem>>, vector<8x768xf32>,
    } else {
    }
    %c0 = arith.constant 0 : index
    %c0_1 = arith.constant 0 : index
    %3 = vector.load %arg8[%c0, %c0_1] : memref<8x768xf32, #tpu.memory_space<vmem>>, vector<8x768xf32>
    %c0_2 = arith.constant 0 : index
    %c0_3 = arith.constant 0 : index
    %4 = vector.load %arg2[%c0_2, %c0_3] : memref<8x1024xf32, #tpu.memory_space<vmem>>, vector<8x1024xf32>
    %c0_4 = arith.constant 0 : index
    %c0_5 = arith.constant 0 : index
    %5 = vector.load %arg3[%c0_4, %c0_5] : memref<1024x768xf32, #tpu.memory_space<vmem>>, vector<1024x768xf32>
    %cst = arith.constant dense<0.000000e+00> : vector<8x768xf32>
    %6 = tpu.matmul %4, %5, %cst {dimension_numbers = #tpu.dot_dimension_numbers<[1], [0], [0], [1], [0, 0, 1, 1], [], []>} : vector<8x1024xf32>, vector<1024x768xf32>, vector<8x768xf32> -> vector<8x768xf32>
    %7 = arith.addf %3, %6 : vector<8x768xf32>
    %c0_6 = arith.constant 0 : index
    %c0_7 = arith.constant 0 : index
    %8 = vector.load %arg8[%c0_6, %c0_7] : memref<8x768xf32, #tpu.memory_space<vmem>>, vector<8x768xf32>
    tpu.vector_store %arg8[%c0_6, %c0_7], %7 {strides = array<i32>} : memref<8x768xf32, #tpu.memory_space<vmem>>, vector<8x768xf32>,
    %c0_i32_8 = arith.constant 0 : i32
    %9 = arith.cmpi eq, %arg1, %c0_i32_8 : i32
    %10 = arith.extui %9 : i1 to i32
    %c0_i32_9 = arith.constant 0 : i32
    %11 = arith.cmpi ne, %10, %c0_i32_9 : i32
    scf.if %11 {
      %c0_10 = arith.constant 0 : index
      %c0_11 = arith.constant 0 : index
      %12 = vector.load %arg8[%c0_10, %c0_11] : memref<8x768xf32, #tpu.memory_space<vmem>>, vector<8x768xf32>
      %c0_12 = arith.constant 0 : index
      %c0_13 = arith.constant 0 : index
      %13 = vector.load %arg4[%c0_12, %c0_13] : memref<1x768xf32, #tpu.memory_space<vmem>>, vector<1x768xf32>
      %14 = vector.broadcast %13 : vector<1x768xf32> to vector<8x768xf32>
      %15 = arith.addf %12, %14 : vector<8x768xf32>
      %cst_14 = arith.constant 0.000000e+00 : f32
      %16 = vector.broadcast %cst_14 : f32 to vector<8x768xf32>
      %17 = arith.maximumf %15, %16 : vector<8x768xf32>
      %c0_15 = arith.constant 0 : index
      %c0_16 = arith.constant 0 : index
      %18 = vector.load %arg5[%c0_15, %c0_16] : memref<768x512xf32, #tpu.memory_space<vmem>>, vector<768x512xf32>
      %cst_17 = arith.constant dense<0.000000e+00> : vector<8x512xf32>
      %19 = tpu.matmul %17, %18, %cst_17 {dimension_numbers = #tpu.dot_dimension_numbers<[1], [0], [0], [1], [0, 0, 1, 1], [], []>} : vector<8x768xf32>, vector<768x512xf32>, vector<8x512xf32> -> vector<8x512xf32>
      %c0_18 = arith.constant 0 : index
      %c0_19 = arith.constant 0 : index
      %20 = vector.load %arg6[%c0_18, %c0_19] : memref<1x512xf32, #tpu.memory_space<vmem>>, vector<1x512xf32>
      %21 = vector.broadcast %20 : vector<1x512xf32> to vector<8x512xf32>
      %22 = arith.addf %19, %21 : vector<8x512xf32>
      %cst_20 = arith.constant 0.000000e+00 : f32
      %23 = vector.broadcast %cst_20 : f32 to vector<8x512xf32>
      %24 = arith.maximumf %22, %23 : vector<8x512xf32>
      %c0_21 = arith.constant 0 : index
      %c0_22 = arith.constant 0 : index
      %25 = vector.load %arg7[%c0_21, %c0_22] : memref<8x512xf32, #tpu.memory_space<vmem>>, vector<8x512xf32>
      tpu.vector_store %arg7[%c0_21, %c0_22], %24 {strides = array<i32>} : memref<8x512xf32, #tpu.memory_space<vmem>>, vector<8x512xf32>,
    } else {
    }
    return
  }
  func.func @transform_0(%arg0: i32, %arg1: i32) -> (i32, i32) {
    %c0_i32 = arith.constant 0 : i32
    return %arg0, %arg1 : i32, i32
  }
  func.func @transform_1(%arg0: i32, %arg1: i32) -> (i32, i32) {
    %c0_i32 = arith.constant 0 : i32
    %c0_i32_0 = arith.constant 0 : i32
    return %arg1, %c0_i32 : i32, i32
  }
  func.func @transform_2(%arg0: i32, %arg1: i32) -> (i32, i32) {
    %c0_i32 = arith.constant 0 : i32
    %c0_i32_0 = arith.constant 0 : i32
    %c0_i32_1 = arith.constant 0 : i32
    return %c0_i32, %c0_i32_0 : i32, i32
  }
  func.func @transform_3(%arg0: i32, %arg1: i32) -> (i32, i32) {
    %c0_i32 = arith.constant 0 : i32
    %c0_i32_0 = arith.constant 0 : i32
    %c0_i32_1 = arith.constant 0 : i32
    return %c0_i32, %c0_i32_0 : i32, i32
  }
  func.func @transform_4(%arg0: i32, %arg1: i32) -> (i32, i32) {
    %c0_i32 = arith.constant 0 : i32
    %c0_i32_0 = arith.constant 0 : i32
    %c0_i32_1 = arith.constant 0 : i32
    return %c0_i32, %c0_i32_0 : i32, i32
  }
  func.func @transform_5(%arg0: i32, %arg1: i32) -> (i32, i32) {
    %c0_i32 = arith.constant 0 : i32
    %c0_i32_0 = arith.constant 0 : i32
    return %arg0, %c0_i32 : i32, i32
  }
}

</mosaic_0001>

<llo_original>
// kernel: tpu_custom_call.1
$region0: #{tpu_custom_call.1}
  #allocation0 [shape = 'u32[]', space=smem, size = 0x4, offset = 0x4, fixed_abs, tag = 'smem constant byte address 0x4 - core index']
  #allocation1 [shape = 'u32[144,128]{1,0:T(1,128)}', space=vmem, size = 0x12000, scoped, tag = 'internal scratch']
  #allocation2 [shape = 'f32[8,768]{1,0:T(8,128)}', space=vmem, size = 0x6000, scoped, tag = 'scratch operand']
  %s0 = inlined_call_operand.hbm [shape: f32[8,1024], index: 0, kind: input, shape index: {}]
  %s1 = inlined_call_operand.hbm [shape: f32[1024,768], index: 1, kind: input, shape index: {}]
  %s2 = inlined_call_operand.hbm [shape: f32[1,768], index: 2, kind: input, shape index: {}]
  %s3 = inlined_call_operand.hbm [shape: f32[768,512], index: 3, kind: input, shape index: {}]
  %s4 = inlined_call_operand.hbm [shape: f32[1,512], index: 4, kind: input, shape index: {}]
  %s5 = inlined_call_operand.hbm [shape: f32[8,512], index: 5, kind: output, shape index: {}]
  %s6 = sld [smem:[#allocation0]]
  $region58: #{tpu_custom_call.1} parent=0
    _
  %s8 = ssub.s32 1, %s6
  %s9 = scalar_select 0, %s8, %s6
  $region1: #{tpu_custom_call.1} parent=0
    #allocation3 [shape = 'u8[32768]{0}', space=vmem, size = 0x8000, scoped, tag = 'input window, operand 0, single buffered']
    #allocation4 [shape = 's32[1]{0}', space=sflag, size = 0x4, scoped, tag = 'scoped memory for tpu_custom_call.1']
    #allocation5 [shape = 's32[1]{0}', space=sflag, size = 0x4, scoped, tag = 'scoped memory for tpu_custom_call.1']
    #allocation6 [shape = 'u8[3145728]{0}', space=vmem, size = 0x300000, scoped, tag = 'input window, operand 1, single buffered']
    #allocation7 [shape = 's32[1]{0}', space=sflag, size = 0x4, scoped, tag = 'scoped memory for tpu_custom_call.1']
    #allocation8 [shape = 'u8[3072]{0}', space=vmem, size = 0xc00, scoped, tag = 'input window, operand 2, single buffered']
    #allocation9 [shape = 'u8[1572864]{0}', space=vmem, size = 0x180000, scoped, tag = 'input window, operand 3, single buffered']
    #allocation10 [shape = 's32[1]{0}', space=sflag, size = 0x4, scoped, tag = 'scoped memory for tpu_custom_call.1']
    #allocation11 [shape = 'u8[2048]{0}', space=vmem, size = 0x800, scoped, tag = 'input window, operand 4, single buffered']
    #allocation12 [shape = 'u8[16384]{0}', space=vmem, size = 0x4000, scoped, tag = 'output window, operand 0, single buffered']
    %10 = vsyncpa [#allocation4], 0
    %11 = vsyncpa [#allocation7], 0
    %12 = vsyncpa [#allocation10], 0
    %13 = vsyncpa [#allocation5], 0
    // Predicated region
    $region2: #{tpu_custom_call.1} parent=1 // pred_check
      _
    $region3: #{tpu_custom_call.1} parent=1 // pred_check_branch
      %15 = sbr.rel (0) target = $region5
    $region4: #{tpu_custom_call.1} parent=1 // pred_region
      %s17 = ssub.s32 1024, 1024
      %18 = vsyncadd [#allocation4], %s17
      %s20 = sshll.u32 [#allocation3], 4
      %s21 = int_to_ptr.vmem [resolvable:$true] %s20
      %23 = dma.hbm_to_vmem [thread:$0]  %s0, 1024, %s21, [#allocation4]
    $region5: #{tpu_custom_call.1} parent=1 // pred_fallthru
      _
    // Predicated region
    $region6: #{tpu_custom_call.1} parent=1 // pred_check
      _
    $region7: #{tpu_custom_call.1} parent=1 // pred_check_branch
      %25 = sbr.rel (0) target = $region9
    $region8: #{tpu_custom_call.1} parent=1 // pred_region
      %s27 = ssub.s32 98304, 98304
      %28 = vsyncadd [#allocation7], %s27
      %s29 = sshll.u32 [#allocation6], 4
      %s30 = int_to_ptr.vmem [resolvable:$true] %s29
      %35 = dma.hbm_to_vmem [thread:$0]  %s1, 98304, %s30, [#allocation7], 768, 768, 48
    $region9: #{tpu_custom_call.1} parent=1 // pred_fallthru
      _
    // Predicated region
    $region10: #{tpu_custom_call.1} parent=1 // pred_check
      _
    $region11: #{tpu_custom_call.1} parent=1 // pred_check_branch
      %37 = sbr.rel (0) target = $region13
    $region12: #{tpu_custom_call.1} parent=1 // pred_region
      %s39 = ssub.s32 96, 96
      %40 = vsyncadd [#allocation7], %s39
      %s42 = sshll.u32 [#allocation8], 4
      %s43 = int_to_ptr.vmem [resolvable:$true] %s42
      %45 = dma.hbm_to_vmem [thread:$0]  %s2, 96, %s43, [#allocation7]
    $region13: #{tpu_custom_call.1} parent=1 // pred_fallthru
      _
    // Predicated region
    $region14: #{tpu_custom_call.1} parent=1 // pred_check
      _
    $region15: #{tpu_custom_call.1} parent=1 // pred_check_branch
      %47 = sbr.rel (0) target = $region17
    $region16: #{tpu_custom_call.1} parent=1 // pred_region
      %s49 = ssub.s32 49152, 49152
      %50 = vsyncadd [#allocation10], %s49
      %s51 = sshll.u32 [#allocation9], 4
      %s52 = int_to_ptr.vmem [resolvable:$true] %s51
      %57 = dma.hbm_to_vmem [thread:$0]  %s3, 49152, %s52, [#allocation10], 512, 512, 32
    $region17: #{tpu_custom_call.1} parent=1 // pred_fallthru
      _
    // Predicated region
    $region18: #{tpu_custom_call.1} parent=1 // pred_check
      _
    $region19: #{tpu_custom_call.1} parent=1 // pred_check_branch
      %59 = sbr.rel (0) target = $region21
    $region20: #{tpu_custom_call.1} parent=1 // pred_region
      %s61 = ssub.s32 64, 64
      %62 = vsyncadd [#allocation10], %s61
      %s64 = sshll.u32 [#allocation11], 4
      %s65 = int_to_ptr.vmem [resolvable:$true] %s64
      %67 = dma.hbm_to_vmem [thread:$0]  %s4, 64, %s65, [#allocation10]
    $region21: #{tpu_custom_call.1} parent=1 // pred_fallthru
      _
    // Predicated region
    $region22: #{tpu_custom_call.1} parent=1 // pred_check
      _
    $region23: #{tpu_custom_call.1} parent=1 // pred_check_branch
      %69 = sbr.rel (0) target = $region25
    $region24: #{tpu_custom_call.1} parent=1 // pred_region
      %70 = dma.done [#allocation4], 1024
    $region25: #{tpu_custom_call.1} parent=1 // pred_fallthru
      _
    // Predicated region
    $region26: #{tpu_custom_call.1} parent=1 // pred_check
      _
    $region27: #{tpu_custom_call.1} parent=1 // pred_check_branch
      %72 = sbr.rel (0) target = $region29
    $region28: #{tpu_custom_call.1} parent=1 // pred_region
      %73 = dma.done [#allocation7], 98304
    $region29: #{tpu_custom_call.1} parent=1 // pred_fallthru
      _
    // Predicated region
    $region30: #{tpu_custom_call.1} parent=1 // pred_check
      _
    $region31: #{tpu_custom_call.1} parent=1 // pred_check_branch
      %75 = sbr.rel (0) target = $region33
    $region32: #{tpu_custom_call.1} parent=1 // pred_region
      %76 = dma.done [#allocation7], 96
    $region33: #{tpu_custom_call.1} parent=1 // pred_fallthru
      _
    // Predicated region
    $region34: #{tpu_custom_call.1} parent=1 // pred_check
      _
    $region35: #{tpu_custom_call.1} parent=1 // pred_check_branch
      %78 = sbr.rel (0) target = $region37
    $region36: #{tpu_custom_call.1} parent=1 // pred_region
      %79 = dma.done [#allocation10], 49152
    $region37: #{tpu_custom_call.1} parent=1 // pred_fallthru
      _
    // Predicated region
    $region38: #{tpu_custom_call.1} parent=1 // pred_check
      _
    $region39: #{tpu_custom_call.1} parent=1 // pred_check_branch
      %81 = sbr.rel (0) target = $region41
    $region40: #{tpu_custom_call.1} parent=1 // pred_region
      %82 = dma.done [#allocation10], 64
    $region41: #{tpu_custom_call.1} parent=1 // pred_fallthru
      _
    %p83 = scmp.eq.s32.totalorder 0, 0
    // Predicated region
    $region42: #{tpu_custom_call.1} parent=1 // pred_check
      %p84 = pneg %p83
    $region43: #{tpu_custom_call.1} parent=1 // pred_check_branch
      %86 = sbr.rel (%p84) target = $region45
    $region44: #{tpu_custom_call.1} parent=1 // pred_region
      %87 = vst [vmem:[#allocation2] sm:$0xff] 0.0
      %88 = vst [vmem:[#allocation2 + $0x8] sm:$0xff] 0.0
      %89 = vst [vmem:[#allocation2 + $0x10] sm:$0xff] 0.0
      %90 = vst [vmem:[#allocation2 + $0x18] sm:$0xff] 0.0
      %91 = vst [vmem:[#allocation2 + $0x20] sm:$0xff] 0.0
      %92 = vst [vmem:[#allocation2 + $0x28] sm:$0xff] 0.0
    $region45: #{tpu_custom_call.1} parent=1 // pred_fallthru
      _
    %v93 = vld [vmem:[#allocation2] sm:$0xff]
    %v94 = vld [vmem:[#allocation2 + $0x8] sm:$0xff]
    %v95 = vld [vmem:[#allocation2 + $0x10] sm:$0xff]
    %v96 = vld [vmem:[#allocation2 + $0x18] sm:$0xff]
    %v97 = vld [vmem:[#allocation2 + $0x20] sm:$0xff]
    %v98 = vld [vmem:[#allocation2 + $0x28] sm:$0xff]
    %v99 = vld [vmem:[#allocation3] sm:$0xff]
    %v100 = vld [vmem:[#allocation3 + $0x8] sm:$0xff]
    %v101 = vld [vmem:[#allocation3 + $0x10] sm:$0xff]
    %v102 = vld [vmem:[#allocation3 + $0x18] sm:$0xff]
    %v103 = vld [vmem:[#allocation3 + $0x20] sm:$0xff]
    %v104 = vld [vmem:[#allocation3 + $0x28] sm:$0xff]
    %v105 = vld [vmem:[#allocation3 + $0x30] sm:$0xff]
    %v106 = vld [vmem:[#allocation3 + $0x38] sm:$0xff]
    %v107 = vld [vmem:[#allocation6] sm:$0xff]
    %v108 = vld [vmem:[#allocation6 + $0x8] sm:$0xff]
    %v109 = vld [vmem:[#allocation6 + $0x10] sm:$0xff]
    %v110 = vld [vmem:[#allocation6 + $0x18] sm:$0xff]
    %v111 = vld [vmem:[#allocation6 + $0x20] sm:$0xff]
    %v112 = vld [vmem:[#allocation6 + $0x28] sm:$0xff]
    %v113 = vld [vmem:[#allocation6 + $0x30] sm:$0xff]
    %v114 = vld [vmem:[#allocation6 + $0x38] sm:$0xff]
    %v115 = vld [vmem:[#allocation6 + $0x40] sm:$0xff]
    %v116 = vld [vmem:[#allocation6 + $0x48] sm:$0xff]
    %v117 = vld [vmem:[#allocation6 + $0x50] sm:$0xff]
    %v118 = vld [vmem:[#allocation6 + $0x58] sm:$0xff]
    %v119 = vld [vmem:[#allocation6 + $0x60] sm:$0xff]
    %v120 = vld [vmem:[#allocation6 + $0x68] sm:$0xff]
    %v121 = vld [vmem:[#allocation6 + $0x70] sm:$0xff]
    %v122 = vld [vmem:[#allocation6 + $0x78] sm:$0xff]
    %v123 = vld [vmem:[#allocation6 + $0x80] sm:$0xff]
    %v124 = vld [vmem:[#allocation6 + $0x88] sm:$0xff]
    %v125 = vld [vmem:[#allocation6 + $0x90] sm:$0xff]
    %v126 = vld [vmem:[#allocation6 + $0x98] sm:$0xff]
    %v127 = vld [vmem:[#allocation6 + $0xa0] sm:$0xff]
    %v128 = vld [vmem:[#allocation6 + $0xa8] sm:$0xff]
    %v129 = vld [vmem:[#allocation6 + $0xb0] sm:$0xff]
    %v130 = vld [vmem:[#allocation6 + $0xb8] sm:$0xff]
    %v131 = vld [vmem:[#allocation6 + $0xc0] sm:$0xff]
    %v132 = vld [vmem:[#allocation6 + $0xc8] sm:$0xff]
    %v133 = vld [vmem:[#allocation6 + $0xd0] sm:$0xff]
    %v134 = vld [vmem:[#allocation6 + $0xd8] sm:$0xff]
    %v135 = vld [vmem:[#allocation6 + $0xe0] sm:$0xff]
    %v136 = vld [vmem:[#allocation6 + $0xe8] sm:$0xff]
    %v137 = vld [vmem:[#allocation6 + $0xf0] sm:$0xff]
    %v138 = vld [vmem:[#allocation6 + $0xf8] sm:$0xff]
    %v139 = vld [vmem:[#allocation6 + $0x100] sm:$0xff]
    %v140 = vld [vmem:[#allocation6 + $0x108] sm:$0xff]
    %v141 = vld [vmem:[#allocation6 + $0x110] sm:$0xff]
    %v142 = vld [vmem:[#allocation6 + $0x118] sm:$0xff]
    %v143 = vld [vmem:[#allocation6 + $0x120] sm:$0xff]
    %v144 = vld [vmem:[#allocation6 + $0x128] sm:$0xff]
    %v145 = vld [vmem:[#allocation6 + $0x130] sm:$0xff]
    %v146 = vld [vmem:[#allocation6 + $0x138] sm:$0xff]
    %v147 = vld [vmem:[#allocation6 + $0x140] sm:$0xff]
    %v148 = vld [vmem:[#allocation6 + $0x148] sm:$0xff]
    %v149 = vld [vmem:[#allocation6 + $0x150] sm:$0xff]
    %v150 = vld [vmem:[#allocation6 + $0x158] sm:$0xff]
    %v151 = vld [vmem:[#allocation6 + $0x160] sm:$0xff]
    %v152 = vld [vmem:[#allocation6 + $0x168] sm:$0xff]
    %v153 = vld [vmem:[#allocation6 + $0x170] sm:$0xff]
    %v154 = vld [vmem:[#allocation6 + $0x178] sm:$0xff]
    %v155 = vld [vmem:[#allocation6 + $0x180] sm:$0xff]
    %v156 = vld [vmem:[#allocation6 + $0x188] sm:$0xff]
    %v157 = vld [vmem:[#allocation6 + $0x190] sm:$0xff]
    %v158 = vld [vmem:[#allocation6 + $0x198] sm:$0xff]
    %v159 = vld [vmem:[#allocation6 + $0x1a0] sm:$0xff]
    %v160 = vld [vmem:[#allocation6 + $0x1a8] sm:$0xff]
    %v161 = vld [vmem:[#allocation6 + $0x1b0] sm:$0xff]
    %v162 = vld [vmem:[#allocation6 + $0x1b8] sm:$0xff]
    %v163 = vld [vmem:[#allocation6 + $0x1c0] sm:$0xff]
    %v164 = vld [vmem:[#allocation6 + $0x1c8] sm:$0xff]
    %v165 = vld [vmem:[#allocation6 + $0x1d0] sm:$0xff]
    %v166 = vld [vmem:[#allocation6 + $0x1d8] sm:$0xff]
    %v167 = vld [vmem:[#allocation6 + $0x1e0] sm:$0xff]
    %v168 = vld [vmem:[#allocation6 + $0x1e8] sm:$0xff]
    %v169 = vld [vmem:[#allocation6 + $0x1f0] sm:$0xff]
    %v170 = vld [vmem:[#allocation6 + $0x1f8] sm:$0xff]
    %v171 = vld [vmem:[#allocation6 + $0x200] sm:$0xff]
    %v172 = vld [vmem:[#allocation6 + $0x208] sm:$0xff]
    %v173 = vld [vmem:[#allocation6 + $0x210] sm:$0xff]
    %v174 = vld [vmem:[#allocation6 + $0x218] sm:$0xff]
    %v175 = vld [vmem:[#allocation6 + $0x220] sm:$0xff]
    %v176 = vld [vmem:[#allocation6 + $0x228] sm:$0xff]
    %v177 = vld [vmem:[#allocation6 + $0x230] sm:$0xff]
    %v178 = vld [vmem:[#allocation6 + $0x238] sm:$0xff]
    %v179 = vld [vmem:[#allocation6 + $0x240] sm:$0xff]
    %v180 = vld [vmem:[#allocation6 + $0x248] sm:$0xff]
    %v181 = vld [vmem:[#allocation6 + $0x250] sm:$0xff]
    %v182 = vld [vmem:[#allocation6 + $0x258] sm:$0xff]
    %v183 = vld [vmem:[#allocation6 + $0x260] sm:$0xff]
    %v184 = vld [vmem:[#allocation6 + $0x268] sm:$0xff]
    %v185 = vld [vmem:[#allocation6 + $0x270] sm:$0xff]
    %v186 = vld [vmem:[#allocation6 + $0x278] sm:$0xff]
    %v187 = vld [vmem:[#allocation6 + $0x280] sm:$0xff]
    %v188 = vld [vmem:[#allocation6 + $0x288] sm:$0xff]
    %v189 = vld [vmem:[#allocation6 + $0x290] sm:$0xff]
    %v190 = vld [vmem:[#allocation6 + $0x298] sm:$0xff]
    %v191 = vld [vmem:[#allocation6 + $0x2a0] sm:$0xff]
    %v192 = vld [vmem:[#allocation6 + $0x2a8] sm:$0xff]
    %v193 = vld [vmem:[#allocation6 + $0x2b0] sm:$0xff]
    %v194 = vld [vmem:[#allocation6 + $0x2b8] sm:$0xff]
    %v195 = vld [vmem:[#allocation6 + $0x2c0] sm:$0xff]
    %v196 = vld [vmem:[#allocation6 + $0x2c8] sm:$0xff]
    %v197 = vld [vmem:[#allocation6 + $0x2d0] sm:$0xff]
    %v198 = vld [vmem:[#allocation6 + $0x2d8] sm:$0xff]
    %v199 = vld [vmem:[#allocation6 + $0x2e0] sm:$0xff]
    %v200 = vld [vmem:[#allocation6 + $0x2e8] sm:$0xff]
    %v201 = vld [vmem:[#allocation6 + $0x2f0] sm:$0xff]
    %v202 = vld [vmem:[#allocation6 + $0x2f8] sm:$0xff]
    %v203 = vld [vmem:[#allocation6 + $0x300] sm:$0xff]
    %v204 = vld [vmem:[#allocation6 + $0x308] sm:$0xff]
    %v205 = vld [vmem:[#allocation6 + $0x310] sm:$0xff]
    %v206 = vld [vmem:[#allocation6 + $0x318] sm:$0xff]
    %v207 = vld [vmem:[#allocation6 + $0x320] sm:$0xff]
    %v208 = vld [vmem:[#allocation6 + $0x328] sm:$0xff]
    %v209 = vld [vmem:[#allocation6 + $0x330] sm:$0xff]
    %v210 = vld [vmem:[#allocation6 + $0x338] sm:$0xff]
    %v211 = vld [vmem:[#allocation6 + $0x340] sm:$0xff]
    %v212 = vld [vmem:[#allocation6 + $0x348] sm:$0xff]
    %v213 = vld [vmem:[#allocation6 + $0x350] sm:$0xff]
    %v214 = vld [vmem:[#allocation6 + $0x358] sm:$0xff]
    %v215 = vld [vmem:[#allocation6 + $0x360] sm:$0xff]
    %v216 = vld [vmem:[#allocation6 + $0x368] sm:$0xff]
    %v217 = vld [vmem:[#allocation6 + $0x370] sm:$0xff]
    %v218 = vld [vmem:[#allocation6 + $0x378] sm:$0xff]
    %v219 = vld [vmem:[#allocation6 + $0x380] sm:$0xff]
    %v220 = vld [vmem:[#allocation6 + $0x388] sm:$0xff]
    %v221 = vld [vmem:[#allocation6 + $0x390] sm:$0xff]
    %v222 = vld [vmem:[#allocation6 + $0x398] sm:$0xff]
    %v223 = vld [vmem:[#allocation6 + $0x3a0] sm:$0xff]
    %v224 = vld [vmem:[#allocation6 + $0x3a8] sm:$0xff]
    %v225 = vld [vmem:[#allocation6 + $0x3b0] sm:$0xff]
    %v226 = vld [vmem:[#allocation6 + $0x3b8] sm:$0xff]
    %v227 = vld [vmem:[#allocation6 + $0x3c0] sm:$0xff]
    %v228 = vld [vmem:[#allocation6 + $0x3c8] sm:$0xff]
    %v229 = vld [vmem:[#allocation6 + $0x3d0] sm:$0xff]
    %v230 = vld [vmem:[#allocation6 + $0x3d8] sm:$0xff]
    %v231 = vld [vmem:[#allocation6 + $0x3e0] sm:$0xff]
    %v232 = vld [vmem:[#allocation6 + $0x3e8] sm:$0xff]
    %v233 = vld [vmem:[#allocation6 + $0x3f0] sm:$0xff]
    %v234 = vld [vmem:[#allocation6 + $0x3f8] sm:$0xff]
    %v235 = vld [vmem:[#allocation6 + $0x400] sm:$0xff]
    %v236 = vld [vmem:[#allocation6 + $0x408] sm:$0xff]
    %v237 = vld [vmem:[#allocation6 + $0x410] sm:$0xff]
    %v238 = vld [vmem:[#allocation6 + $0x418] sm:$0xff]
    %v239 = vld [vmem:[#allocation6 + $0x420] sm:$0xff]
    %v240 = vld [vmem:[#allocation6 + $0x428] sm:$0xff]
    %v241 = vld [vmem:[#allocation6 + $0x430] sm:$0xff]
    %v242 = vld [vmem:[#allocation6 + $0x438] sm:$0xff]
    %v243 = vld [vmem:[#allocation6 + $0x440] sm:$0xff]
    %v244 = vld [vmem:[#allocation6 + $0x448] sm:$0xff]
    %v245 = vld [vmem:[#allocation6 + $0x450] sm:$0xff]
    %v246 = vld [vmem:[#allocation6 + $0x458] sm:$0xff]
    %v247 = vld [vmem:[#allocation6 + $0x460] sm:$0xff]
    %v248 = vld [vmem:[#allocation6 + $0x468] sm:$0xff]
    %v249 = vld [vmem:[#allocation6 + $0x470] sm:$0xff]
    %v250 = vld [vmem:[#allocation6 + $0x478] sm:$0xff]
    %v251 = vld [vmem:[#allocation6 + $0x480] sm:$0xff]
    %v252 = vld [vmem:[#allocation6 + $0x488] sm:$0xff]
    %v253 = vld [vmem:[#allocation6 + $0x490] sm:$0xff]
    %v254 = vld [vmem:[#allocation6 + $0x498] sm:$0xff]
    %v255 = vld [vmem:[#allocation6 + $0x4a0] sm:$0xff]
    %v256 = vld [vmem:[#allocation6 + $0x4a8] sm:$0xff]
    %v257 = vld [vmem:[#allocation6 + $0x4b0] sm:$0xff]
    %v258 = vld [vmem:[#allocation6 + $0x4b8] sm:$0xff]
    %v259 = vld [vmem:[#allocation6 + $0x4c0] sm:$0xff]
    %v260 = vld [vmem:[#allocation6 + $0x4c8] sm:$0xff]
    %v261 = vld [vmem:[#allocation6 + $0x4d0] sm:$0xff]
    %v262 = vld [vmem:[#allocation6 + $0x4d8] sm:$0xff]
    %v263 = vld [vmem:[#allocation6 + $0x4e0] sm:$0xff]
    %v264 = vld [vmem:[#allocation6 + $0x4e8] sm:$0xff]
    %v265 = vld [vmem:[#allocation6 + $0x4f0] sm:$0xff]
    %v266 = vld [vmem:[#allocation6 + $0x4f8] sm:$0xff]
    %v267 = vld [vmem:[#allocation6 + $0x500] sm:$0xff]
    %v268 = vld [vmem:[#allocation6 + $0x508] sm:$0xff]
    %v269 = vld [vmem:[#allocation6 + $0x510] sm:$0xff]
    %v270 = vld [vmem:[#allocation6 + $0x518] sm:$0xff]
    %v271 = vld [vmem:[#allocation6 + $0x520] sm:$0xff]
    %v272 = vld [vmem:[#allocation6 + $0x528] sm:$0xff]
    %v273 = vld [vmem:[#allocation6 + $0x530] sm:$0xff]
    %v274 = vld [vmem:[#allocation6 + $0x538] sm:$0xff]
    %v275 = vld [vmem:[#allocation6 + $0x540] sm:$0xff]
    %v276 = vld [vmem:[#allocation6 + $0x548] sm:$0xff]
    %v277 = vld [vmem:[#allocation6 + $0x550] sm:$0xff]
    %v278 = vld [vmem:[#allocation6 + $0x558] sm:$0xff]
    %v279 = vld [vmem:[#allocation6 + $0x560] sm:$0xff]
    %v280 = vld [vmem:[#allocation6 + $0x568] sm:$0xff]
    %v281 = vld [vmem:[#allocation6 + $0x570] sm:$0xff]
    %v282 = vld [vmem:[#allocation6 + $0x578] sm:$0xff]
    %v283 = vld [vmem:[#allocation6 + $0x580] sm:$0xff]
    %v284 = vld [vmem:[#allocation6 + $0x588] sm:$0xff]
    %v285 = vld [vmem:[#allocation6 + $0x590] sm:$0xff]
    %v286 = vld [vmem:[#allocation6 + $0x598] sm:$0xff]
    %v287 = vld [vmem:[#allocation6 + $0x5a0] sm:$0xff]
    %v288 = vld [vmem:[#allocation6 + $0x5a8] sm:$0xff]
    %v289 = vld [vmem:[#allocation6 + $0x5b0] sm:$0xff]
    %v290 = vld [vmem:[#allocation6 + $0x5b8] sm:$0xff]
    %v291 = vld [vmem:[#allocation6 + $0x5c0] sm:$0xff]
    %v292 = vld [vmem:[#allocation6 + $0x5c8] sm:$0xff]
    %v293 = vld [vmem:[#allocation6 + $0x5d0] sm:$0xff]
    %v294 = vld [vmem:[#allocation6 + $0x5d8] sm:$0xff]
    %v295 = vld [vmem:[#allocation6 + $0x5e0] sm:$0xff]
    %v296 = vld [vmem:[#allocation6 + $0x5e8] sm:$0xff]
    %v297 = vld [vmem:[#allocation6 + $0x5f0] sm:$0xff]
    %v298 = vld [vmem:[#allocation6 + $0x5f8] sm:$0xff]
    %v299 = vld [vmem:[#allocation6 + $0x600] sm:$0xff]
    %v300 = vld [vmem:[#allocation6 + $0x608] sm:$0xff]
    %v301 = vld [vmem:[#allocation6 + $0x610] sm:$0xff]
    %v302 = vld [vmem:[#allocation6 + $0x618] sm:$0xff]
    %v303 = vld [vmem:[#allocation6 + $0x620] sm:$0xff]
    %v304 = vld [vmem:[#allocation6 + $0x628] sm:$0xff]
    %v305 = vld [vmem:[#allocation6 + $0x630] sm:$0xff]
    %v306 = vld [vmem:[#allocation6 + $0x638] sm:$0xff]
    %v307 = vld [vmem:[#allocation6 + $0x640] sm:$0xff]
    %v308 = vld [vmem:[#allocation6 + $0x648] sm:$0xff]
    %v309 = vld [vmem:[#allocation6 + $0x650] sm:$0xff]
    %v310 = vld [vmem:[#allocation6 + $0x658] sm:$0xff]
    %v311 = vld [vmem:[#allocation6 + $0x660] sm:$0xff]
    %v312 = vld [vmem:[#allocation6 + $0x668] sm:$0xff]
    %v313 = vld [vmem:[#allocation6 + $0x670] sm:$0xff]
    %v314 = vld [vmem:[#allocation6 + $0x678] sm:$0xff]
    %v315 = vld [vmem:[#allocation6 + $0x680] sm:$0xff]
    %v316 = vld [vmem:[#allocation6 + $0x688] sm:$0xff]
    %v317 = vld [vmem:[#allocation6 + $0x690] sm:$0xff]
    %v318 = vld [vmem:[#allocation6 + $0x698] sm:$0xff]
    %v319 = vld [vmem:[#allocation6 + $0x6a0] sm:$0xff]
    %v320 = vld [vmem:[#allocation6 + $0x6a8] sm:$0xff]
    %v321 = vld [vmem:[#allocation6 + $0x6b0] sm:$0xff]
    %v322 = vld [vmem:[#allocation6 + $0x6b8] sm:$0xff]
    %v323 = vld [vmem:[#allocation6 + $0x6c0] sm:$0xff]
    %v324 = vld [vmem:[#allocation6 + $0x6c8] sm:$0xff]
    %v325 = vld [vmem:[#allocation6 + $0x6d0] sm:$0xff]
    %v326 = vld [vmem:[#allocation6 + $0x6d8] sm:$0xff]
    %v327 = vld [vmem:[#allocation6 + $0x6e0] sm:$0xff]
    %v328 = vld [vmem:[#allocation6 + $0x6e8] sm:$0xff]
    %v329 = vld [vmem:[#allocation6 + $0x6f0] sm:$0xff]
    %v330 = vld [vmem:[#allocation6 + $0x6f8] sm:$0xff]
    %v331 = vld [vmem:[#allocation6 + $0x700] sm:$0xff]
    %v332 = vld [vmem:[#allocation6 + $0x708] sm:$0xff]
    %v333 = vld [vmem:[#allocation6 + $0x710] sm:$0xff]
    %v334 = vld [vmem:[#allocation6 + $0x718] sm:$0xff]
    %v335 = vld [vmem:[#allocation6 + $0x720] sm:$0xff]
    %v336 = vld [vmem:[#allocation6 + $0x728] sm:$0xff]
    %v337 = vld [vmem:[#allocation6 + $0x730] sm:$0xff]
    %v338 = vld [vmem:[#allocation6 + $0x738] sm:$0xff]
    %v339 = vld [vmem:[#allocation6 + $0x740] sm:$0xff]
    %v340 = vld [vmem:[#allocation6 + $0x748] sm:$0xff]
    %v341 = vld [vmem:[#allocation6 + $0x750] sm:$0xff]
    %v342 = vld [vmem:[#allocation6 + $0x758] sm:$0xff]
    %v343 = vld [vmem:[#allocation6 + $0x760] sm:$0xff]
    %v344 = vld [vmem:[#allocation6 + $0x768] sm:$0xff]
    %v345 = vld [vmem:[#allocation6 + $0x770] sm:$0xff]
    %v346 = vld [vmem:[#allocation6 + $0x778] sm:$0xff]
    %v347 = vld [vmem:[#allocation6 + $0x780] sm:$0xff]
    %v348 = vld [vmem:[#allocation6 + $0x788] sm:$0xff]
    %v349 = vld [vmem:[#allocation6 + $0x790] sm:$0xff]
    %v350 = vld [vmem:[#allocation6 + $0x798] sm:$0xff]
    %v351 = vld [vmem:[#allocation6 + $0x7a0] sm:$0xff]
    %v352 = vld [vmem:[#allocation6 + $0x7a8] sm:$0xff]
    %v353 = vld [vmem:[#allocation6 + $0x7b0] sm:$0xff]
    %v354 = vld [vmem:[#allocation6 + $0x7b8] sm:$0xff]
    %v355 = vld [vmem:[#allocation6 + $0x7c0] sm:$0xff]
    %v356 = vld [vmem:[#allocation6 + $0x7c8] sm:$0xff]
    %v357 = vld [vmem:[#allocation6 + $0x7d0] sm:$0xff]
    %v358 = vld [vmem:[#allocation6 + $0x7d8] sm:$0xff]
    %v359 = vld [vmem:[#allocation6 + $0x7e0] sm:$0xff]
    %v360 = vld [vmem:[#allocation6 + $0x7e8] sm:$0xff]
    %v361 = vld [vmem:[#allocation6 + $0x7f0] sm:$0xff]
    %v362 = vld [vmem:[#allocation6 + $0x7f8] sm:$0xff]
    %v363 = vld [vmem:[#allocation6 + $0x800] sm:$0xff]
    %v364 = vld [vmem:[#allocation6 + $0x808] sm:$0xff]
    %v365 = vld [vmem:[#allocation6 + $0x810] sm:$0xff]
    %v366 = vld [vmem:[#allocation6 + $0x818] sm:$0xff]
    %v367 = vld [vmem:[#allocation6 + $0x820] sm:$0xff]
    %v368 = vld [vmem:[#allocation6 + $0x828] sm:$0xff]
    %v369 = vld [vmem:[#allocation6 + $0x830] sm:$0xff]
    %v370 = vld [vmem:[#allocation6 + $0x838] sm:$0xff]
    %v371 = vld [vmem:[#allocation6 + $0x840] sm:$0xff]
    %v372 = vld [vmem:[#allocation6 + $0x848] sm:$0xff]
    %v373 = vld [vmem:[#allocation6 + $0x850] sm:$0xff]
    %v374 = vld [vmem:[#allocation6 + $0x858] sm:$0xff]
    %v375 = vld [vmem:[#allocation6 + $0x860] sm:$0xff]
    %v376 = vld [vmem:[#allocation6 + $0x868] sm:$0xff]
    %v377 = vld [vmem:[#allocation6 + $0x870] sm:$0xff]
    %v378 = vld [vmem:[#allocation6 + $0x878] sm:$0xff]
    %v379 = vld [vmem:[#allocation6 + $0x880] sm:$0xff]
    %v380 = vld [vmem:[#allocation6 + $0x888] sm:$0xff]
    %v381 = vld [vmem:[#allocation6 + $0x890] sm:$0xff]
    %v382 = vld [vmem:[#allocation6 + $0x898] sm:$0xff]
    %v383 = vld [vmem:[#allocation6 + $0x8a0] sm:$0xff]
    %v384 = vld [vmem:[#allocation6 + $0x8a8] sm:$0xff]
    %v385 = vld [vmem:[#allocation6 + $0x8b0] sm:$0xff]
    %v386 = vld [vmem:[#allocation6 + $0x8b8] sm:$0xff]
    %v387 = vld [vmem:[#allocation6 + $0x8c0] sm:$0xff]
    %v388 = vld [vmem:[#allocation6 + $0x8c8] sm:$0xff]
    %v389 = vld [vmem:[#allocation6 + $0x8d0] sm:$0xff]
    %v390 = vld [vmem:[#allocation6 + $0x8d8] sm:$0xff]
    %v391 = vld [vmem:[#allocation6 + $0x8e0] sm:$0xff]
    %v392 = vld [vmem:[#allocation6 + $0x8e8] sm:$0xff]
    %v393 = vld [vmem:[#allocation6 + $0x8f0] sm:$0xff]
    %v394 = vld [vmem:[#allocation6 + $0x8f8] sm:$0xff]
    %v395 = vld [vmem:[#allocation6 + $0x900] sm:$0xff]
    %v396 = vld [vmem:[#allocation6 + $0x908] sm:$0xff]
    %v397 = vld [vmem:[#allocation6 + $0x910] sm:$0xff]
    %v398 = vld [vmem:[#allocation6 + $0x918] sm:$0xff]
    %v399 = vld [vmem:[#allocation6 + $0x920] sm:$0xff]
    %v400 = vld [vmem:[#allocation6 + $0x928] sm:$0xff]
    %v401 = vld [vmem:[#allocation6 + $0x930] sm:$0xff]
    %v402 = vld [vmem:[#allocation6 + $0x938] sm:$0xff]
    %v403 = vld [vmem:[#allocation6 + $0x940] sm:$0xff]
    %v404 = vld [vmem:[#allocation6 + $0x948] sm:$0xff]
    %v405 = vld [vmem:[#allocation6 + $0x950] sm:$0xff]
    %v406 = vld [vmem:[#allocation6 + $0x958] sm:$0xff]
    %v407 = vld [vmem:[#allocation6 + $0x960] sm:$0xff]
    %v408 = vld [vmem:[#allocation6 + $0x968] sm:$0xff]
    %v409 = vld [vmem:[#allocation6 + $0x970] sm:$0xff]
    %v410 = vld [vmem:[#allocation6 + $0x978] sm:$0xff]
    %v411 = vld [vmem:[#allocation6 + $0x980] sm:$0xff]
    %v412 = vld [vmem:[#allocation6 + $0x988] sm:$0xff]
    %v413 = vld [vmem:[#allocation6 + $0x990] sm:$0xff]
    %v414 = vld [vmem:[#allocation6 + $0x998] sm:$0xff]
    %v415 = vld [vmem:[#allocation6 + $0x9a0] sm:$0xff]
    %v416 = vld [vmem:[#allocation6 + $0x9a8] sm:$0xff]
    %v417 = vld [vmem:[#allocation6 + $0x9b0] sm:$0xff]
    %v418 = vld [vmem:[#allocation6 + $0x9b8] sm:$0xff]
    %v419 = vld [vmem:[#allocation6 + $0x9c0] sm:$0xff]
    %v420 = vld [vmem:[#allocation6 + $0x9c8] sm:$0xff]
    %v421 = vld [vmem:[#allocation6 + $0x9d0] sm:$0xff]
    %v422 = vld [vmem:[#allocation6 + $0x9d8] sm:$0xff]
    %v423 = vld [vmem:[#allocation6 + $0x9e0] sm:$0xff]
    %v424 = vld [vmem:[#allocation6 + $0x9e8] sm:$0xff]
    %v425 = vld [vmem:[#allocation6 + $0x9f0] sm:$0xff]
    %v426 = vld [vmem:[#allocation6 + $0x9f8] sm:$0xff]
    %v427 = vld [vmem:[#allocation6 + $0xa00] sm:$0xff]
    %v428 = vld [vmem:[#allocation6 + $0xa08] sm:$0xff]
    %v429 = vld [vmem:[#allocation6 + $0xa10] sm:$0xff]
    %v430 = vld [vmem:[#allocation6 + $0xa18] sm:$0xff]
    %v431 = vld [vmem:[#allocation6 + $0xa20] sm:$0xff]
    %v432 = vld [vmem:[#allocation6 + $0xa28] sm:$0xff]
    %v433 = vld [vmem:[#allocation6 + $0xa30] sm:$0xff]
    %v434 = vld [vmem:[#allocation6 + $0xa38] sm:$0xff]
    %v435 = vld [vmem:[#allocation6 + $0xa40] sm:$0xff]
    %v436 = vld [vmem:[#allocation6 + $0xa48] sm:$0xff]
    %v437 = vld [vmem:[#allocation6 + $0xa50] sm:$0xff]
    %v438 = vld [vmem:[#allocation6 + $0xa58] sm:$0xff]
    %v439 = vld [vmem:[#allocation6 + $0xa60] sm:$0xff]
    %v440 = vld [vmem:[#allocation6 + $0xa68] sm:$0xff]
    %v441 = vld [vmem:[#allocation6 + $0xa70] sm:$0xff]
    %v442 = vld [vmem:[#allocation6 + $0xa78] sm:$0xff]
    %v443 = vld [vmem:[#allocation6 + $0xa80] sm:$0xff]
    %v444 = vld [vmem:[#allocation6 + $0xa88] sm:$0xff]
    %v445 = vld [vmem:[#allocation6 + $0xa90] sm:$0xff]
    %v446 = vld [vmem:[#allocation6 + $0xa98] sm:$0xff]
    %v447 = vld [vmem:[#allocation6 + $0xaa0] sm:$0xff]
    %v448 = vld [vmem:[#allocation6 + $0xaa8] sm:$0xff]
    %v449 = vld [vmem:[#allocation6 + $0xab0] sm:$0xff]
    %v450 = vld [vmem:[#allocation6 + $0xab8] sm:$0xff]
    %v451 = vld [vmem:[#allocation6 + $0xac0] sm:$0xff]
    %v452 = vld [vmem:[#allocation6 + $0xac8] sm:$0xff]
    %v453 = vld [vmem:[#allocation6 + $0xad0] sm:$0xff]
    %v454 = vld [vmem:[#allocation6 + $0xad8] sm:$0xff]
    %v455 = vld [vmem:[#allocation6 + $0xae0] sm:$0xff]
    %v456 = vld [vmem:[#allocation6 + $0xae8] sm:$0xff]
    %v457 = vld [vmem:[#allocation6 + $0xaf0] sm:$0xff]
    %v458 = vld [vmem:[#allocation6 + $0xaf8] sm:$0xff]
    %v459 = vld [vmem:[#allocation6 + $0xb00] sm:$0xff]
    %v460 = vld [vmem:[#allocation6 + $0xb08] sm:$0xff]
    %v461 = vld [vmem:[#allocation6 + $0xb10] sm:$0xff]
    %v462 = vld [vmem:[#allocation6 + $0xb18] sm:$0xff]
    %v463 = vld [vmem:[#allocation6 + $0xb20] sm:$0xff]
    %v464 = vld [vmem:[#allocation6 + $0xb28] sm:$0xff]
    %v465 = vld [vmem:[#allocation6 + $0xb30] sm:$0xff]
    %v466 = vld [vmem:[#allocation6 + $0xb38] sm:$0xff]
    %v467 = vld [vmem:[#allocation6 + $0xb40] sm:$0xff]
    %v468 = vld [vmem:[#allocation6 + $0xb48] sm:$0xff]
    %v469 = vld [vmem:[#allocation6 + $0xb50] sm:$0xff]
    %v470 = vld [vmem:[#allocation6 + $0xb58] sm:$0xff]
    %v471 = vld [vmem:[#allocation6 + $0xb60] sm:$0xff]
    %v472 = vld [vmem:[#allocation6 + $0xb68] sm:$0xff]
    %v473 = vld [vmem:[#allocation6 + $0xb70] sm:$0xff]
    %v474 = vld [vmem:[#allocation6 + $0xb78] sm:$0xff]
    %v475 = vld [vmem:[#allocation6 + $0xb80] sm:$0xff]
    %v476 = vld [vmem:[#allocation6 + $0xb88] sm:$0xff]
    %v477 = vld [vmem:[#allocation6 + $0xb90] sm:$0xff]
    %v478 = vld [vmem:[#allocation6 + $0xb98] sm:$0xff]
    %v479 = vld [vmem:[#allocation6 + $0xba0] sm:$0xff]
    %v480 = vld [vmem:[#allocation6 + $0xba8] sm:$0xff]
    %v481 = vld [vmem:[#allocation6 + $0xbb0] sm:$0xff]
    %v482 = vld [vmem:[#allocation6 + $0xbb8] sm:$0xff]
    %v483 = vld [vmem:[#allocation6 + $0xbc0] sm:$0xff]
    %v484 = vld [vmem:[#allocation6 + $0xbc8] sm:$0xff]
    %v485 = vld [vmem:[#allocation6 + $0xbd0] sm:$0xff]
    %v486 = vld [vmem:[#allocation6 + $0xbd8] sm:$0xff]
    %v487 = vld [vmem:[#allocation6 + $0xbe0] sm:$0xff]
    %v488 = vld [vmem:[#allocation6 + $0xbe8] sm:$0xff]
    %v489 = vld [vmem:[#allocation6 + $0xbf0] sm:$0xff]
    %v490 = vld [vmem:[#allocation6 + $0xbf8] sm:$0xff]
    %v491 = vld [vmem:[#allocation6 + $0xc00] sm:$0xff]
    %v492 = vld [vmem:[#allocation6 + $0xc08] sm:$0xff]
    %v493 = vld [vmem:[#allocation6 + $0xc10] sm:$0xff]
    %v494 = vld [vmem:[#allocation6 + $0xc18] sm:$0xff]
    %v495 = vld [vmem:[#allocation6 + $0xc20] sm:$0xff]
    %v496 = vld [vmem:[#allocation6 + $0xc28] sm:$0xff]
    %v497 = vld [vmem:[#allocation6 + $0xc30] sm:$0xff]
    %v498 = vld [vmem:[#allocation6 + $0xc38] sm:$0xff]
    %v499 = vld [vmem:[#allocation6 + $0xc40] sm:$0xff]
    %v500 = vld [vmem:[#allocation6 + $0xc48] sm:$0xff]
    %v501 = vld [vmem:[#allocation6 + $0xc50] sm:$0xff]
    %v502 = vld [vmem:[#allocation6 + $0xc58] sm:$0xff]
    %v503 = vld [vmem:[#allocation6 + $0xc60] sm:$0xff]
    %v504 = vld [vmem:[#allocation6 + $0xc68] sm:$0xff]
    %v505 = vld [vmem:[#allocation6 + $0xc70] sm:$0xff]
    %v506 = vld [vmem:[#allocation6 + $0xc78] sm:$0xff]
    %v507 = vld [vmem:[#allocation6 + $0xc80] sm:$0xff]
    %v508 = vld [vmem:[#allocation6 + $0xc88] sm:$0xff]
    %v509 = vld [vmem:[#allocation6 + $0xc90] sm:$0xff]
    %v510 = vld [vmem:[#allocation6 + $0xc98] sm:$0xff]
    %v511 = vld [vmem:[#allocation6 + $0xca0] sm:$0xff]
    %v512 = vld [vmem:[#allocation6 + $0xca8] sm:$0xff]
    %v513 = vld [vmem:[#allocation6 + $0xcb0] sm:$0xff]
    %v514 = vld [vmem:[#allocation6 + $0xcb8] sm:$0xff]
    %v515 = vld [vmem:[#allocation6 + $0xcc0] sm:$0xff]
    %v516 = vld [vmem:[#allocation6 + $0xcc8] sm:$0xff]
    %v517 = vld [vmem:[#allocation6 + $0xcd0] sm:$0xff]
    %v518 = vld [vmem:[#allocation6 + $0xcd8] sm:$0xff]
    %v519 = vld [vmem:[#allocation6 + $0xce0] sm:$0xff]
    %v520 = vld [vmem:[#allocation6 + $0xce8] sm:$0xff]
    %v521 = vld [vmem:[#allocation6 + $0xcf0] sm:$0xff]
    %v522 = vld [vmem:[#allocation6 + $0xcf8] sm:$0xff]
    %v523 = vld [vmem:[#allocation6 + $0xd00] sm:$0xff]
    %v524 = vld [vmem:[#allocation6 + $0xd08] sm:$0xff]
    %v525 = vld [vmem:[#allocation6 + $0xd10] sm:$0xff]
    %v526 = vld [vmem:[#allocation6 + $0xd18] sm:$0xff]
    %v527 = vld [vmem:[#allocation6 + $0xd20] sm:$0xff]
    %v528 = vld [vmem:[#allocation6 + $0xd28] sm:$0xff]
    %v529 = vld [vmem:[#allocation6 + $0xd30] sm:$0xff]
    %v530 = vld [vmem:[#allocation6 + $0xd38] sm:$0xff]
    %v531 = vld [vmem:[#allocation6 + $0xd40] sm:$0xff]
    %v532 = vld [vmem:[#allocation6 + $0xd48] sm:$0xff]
    %v533 = vld [vmem:[#allocation6 + $0xd50] sm:$0xff]
    %v534 = vld [vmem:[#allocation6 + $0xd58] sm:$0xff]
    %v535 = vld [vmem:[#allocation6 + $0xd60] sm:$0xff]
    %v536 = vld [vmem:[#allocation6 + $0xd68] sm:$0xff]
    %v537 = vld [vmem:[#allocation6 + $0xd70] sm:$0xff]
    %v538 = vld [vmem:[#allocation6 + $0xd78] sm:$0xff]
    %v539 = vld [vmem:[#allocation6 + $0xd80] sm:$0xff]
    %v540 = vld [vmem:[#allocation6 + $0xd88] sm:$0xff]
    %v541 = vld [vmem:[#allocation6 + $0xd90] sm:$0xff]
    %v542 = vld [vmem:[#allocation6 + $0xd98] sm:$0xff]
    %v543 = vld [vmem:[#allocation6 + $0xda0] sm:$0xff]
    %v544 = vld [vmem:[#allocation6 + $0xda8] sm:$0xff]
    %v545 = vld [vmem:[#allocation6 + $0xdb0] sm:$0xff]
    %v546 = vld [vmem:[#allocation6 + $0xdb8] sm:$0xff]
    %v547 = vld [vmem:[#allocation6 + $0xdc0] sm:$0xff]
    %v548 = vld [vmem:[#allocation6 + $0xdc8] sm:$0xff]
    %v549 = vld [vmem:[#allocation6 + $0xdd0] sm:$0xff]
    %v550 = vld [vmem:[#allocation6 + $0xdd8] sm:$0xff]
    %v551 = vld [vmem:[#allocation6 + $0xde0] sm:$0xff]
    %v552 = vld [vmem:[#allocation6 + $0xde8] sm:$0xff]
    %v553 = vld [vmem:[#allocation6 + $0xdf0] sm:$0xff]
    %v554 = vld [vmem:[#allocation6 + $0xdf8] sm:$0xff]
    %v555 = vld [vmem:[#allocation6 + $0xe00] sm:$0xff]
    %v556 = vld [vmem:[#allocation6 + $0xe08] sm:$0xff]
    %v557 = vld [vmem:[#allocation6 + $0xe10] sm:$0xff]
    %v558 = vld [vmem:[#allocation6 + $0xe18] sm:$0xff]
    %v559 = vld [vmem:[#allocation6 + $0xe20] sm:$0xff]
    %v560 = vld [vmem:[#allocation6 + $0xe28] sm:$0xff]
    %v561 = vld [vmem:[#allocation6 + $0xe30] sm:$0xff]
    %v562 = vld [vmem:[#allocation6 + $0xe38] sm:$0xff]
    %v563 = vld [vmem:[#allocation6 + $0xe40] sm:$0xff]
    %v564 = vld [vmem:[#allocation6 + $0xe48] sm:$0xff]
    %v565 = vld [vmem:[#allocation6 + $0xe50] sm:$0xff]
    %v566 = vld [vmem:[#allocation6 + $0xe58] sm:$0xff]
    %v567 = vld [vmem:[#allocation6 + $0xe60] sm:$0xff]
    %v568 = vld [vmem:[#allocation6 + $0xe68] sm:$0xff]
    %v569 = vld [vmem:[#allocation6 + $0xe70] sm:$0xff]
    %v570 = vld [vmem:[#allocation6 + $0xe78] sm:$0xff]
    %v571 = vld [vmem:[#allocation6 + $0xe80] sm:$0xff]
    %v572 = vld [vmem:[#allocation6 + $0xe88] sm:$0xff]
    %v573 = vld [vmem:[#allocation6 + $0xe90] sm:$0xff]
    %v574 = vld [vmem:[#allocation6 + $0xe98] sm:$0xff]
    %v575 = vld [vmem:[#allocation6 + $0xea0] sm:$0xff]
    %v576 = vld [vmem:[#allocation6 + $0xea8] sm:$0xff]
    %v577 = vld [vmem:[#allocation6 + $0xeb0] sm:$0xff]
    %v578 = vld [vmem:[#allocation6 + $0xeb8] sm:$0xff]
    %v579 = vld [vmem:[#allocation6 + $0xec0] sm:$0xff]
    %v580 = vld [vmem:[#allocation6 + $0xec8] sm:$0xff]
    %v581 = vld [vmem:[#allocation6 + $0xed0] sm:$0xff]
    %v582 = vld [vmem:[#allocation6 + $0xed8] sm:$0xff]
    %v583 = vld [vmem:[#allocation6 + $0xee0] sm:$0xff]
    %v584 = vld [vmem:[#allocation6 + $0xee8] sm:$0xff]
    %v585 = vld [vmem:[#allocation6 + $0xef0] sm:$0xff]
    %v586 = vld [vmem:[#allocation6 + $0xef8] sm:$0xff]
    %v587 = vld [vmem:[#allocation6 + $0xf00] sm:$0xff]
    %v588 = vld [vmem:[#allocation6 + $0xf08] sm:$0xff]
    %v589 = vld [vmem:[#allocation6 + $0xf10] sm:$0xff]
    %v590 = vld [vmem:[#allocation6 + $0xf18] sm:$0xff]
    %v591 = vld [vmem:[#allocation6 + $0xf20] sm:$0xff]
    %v592 = vld [vmem:[#allocation6 + $0xf28] sm:$0xff]
    %v593 = vld [vmem:[#allocation6 + $0xf30] sm:$0xff]
    %v594 = vld [vmem:[#allocation6 + $0xf38] sm:$0xff]
    %v595 = vld [vmem:[#allocation6 + $0xf40] sm:$0xff]
    %v596 = vld [vmem:[#allocation6 + $0xf48] sm:$0xff]
    %v597 = vld [vmem:[#allocation6 + $0xf50] sm:$0xff]
    %v598 = vld [vmem:[#allocation6 + $0xf58] sm:$0xff]
    %v599 = vld [vmem:[#allocation6 + $0xf60] sm:$0xff]
    %v600 = vld [vmem:[#allocation6 + $0xf68] sm:$0xff]
    %v601 = vld [vmem:[#allocation6 + $0xf70] sm:$0xff]
    %v602 = vld [vmem:[#allocation6 + $0xf78] sm:$0xff]
    %v603 = vld [vmem:[#allocation6 + $0xf80] sm:$0xff]
    %v604 = vld [vmem:[#allocation6 + $0xf88] sm:$0xff]
    %v605 = vld [vmem:[#allocation6 + $0xf90] sm:$0xff]
    %v606 = vld [vmem:[#allocation6 + $0xf98] sm:$0xff]
    %v607 = vld [vmem:[#allocation6 + $0xfa0] sm:$0xff]
    %v608 = vld [vmem:[#allocation6 + $0xfa8] sm:$0xff]
    %v609 = vld [vmem:[#allocation6 + $0xfb0] sm:$0xff]
    %v610 = vld [vmem:[#allocation6 + $0xfb8] sm:$0xff]
    %v611 = vld [vmem:[#allocation6 + $0xfc0] sm:$0xff]
    %v612 = vld [vmem:[#allocation6 + $0xfc8] sm:$0xff]
    %v613 = vld [vmem:[#allocation6 + $0xfd0] sm:$0xff]
    %v614 = vld [vmem:[#allocation6 + $0xfd8] sm:$0xff]
    %v615 = vld [vmem:[#allocation6 + $0xfe0] sm:$0xff]
    %v616 = vld [vmem:[#allocation6 + $0xfe8] sm:$0xff]
    %v617 = vld [vmem:[#allocation6 + $0xff0] sm:$0xff]
    %v618 = vld [vmem:[#allocation6 + $0xff8] sm:$0xff]
    %v619 = vld [vmem:[#allocation6 + $0x1000] sm:$0xff]
    %v620 = vld [vmem:[#allocation6 + $0x1008] sm:$0xff]
    %v621 = vld [vmem:[#allocation6 + $0x1010] sm:$0xff]
    %v622 = vld [vmem:[#allocation6 + $0x1018] sm:$0xff]
    %v623 = vld [vmem:[#allocation6 + $0x1020] sm:$0xff]
    %v624 = vld [vmem:[#allocation6 + $0x1028] sm:$0xff]
    %v625 = vld [vmem:[#allocation6 + $0x1030] sm:$0xff]
    %v626 = vld [vmem:[#allocation6 + $0x1038] sm:$0xff]
    %v627 = vld [vmem:[#allocation6 + $0x1040] sm:$0xff]
    %v628 = vld [vmem:[#allocation6 + $0x1048] sm:$0xff]
    %v629 = vld [vmem:[#allocation6 + $0x1050] sm:$0xff]
    %v630 = vld [vmem:[#allocation6 + $0x1058] sm:$0xff]
    %v631 = vld [vmem:[#allocation6 + $0x1060] sm:$0xff]
    %v632 = vld [vmem:[#allocation6 + $0x1068] sm:$0xff]
    %v633 = vld [vmem:[#allocation6 + $0x1070] sm:$0xff]
    %v634 = vld [vmem:[#allocation6 + $0x1078] sm:$0xff]
    %v635 = vld [vmem:[#allocation6 + $0x1080] sm:$0xff]
    %v636 = vld [vmem:[#allocation6 + $0x1088] sm:$0xff]
    %v637 = vld [vmem:[#allocation6 + $0x1090] sm:$0xff]
    %v638 = vld [vmem:[#allocation6 + $0x1098] sm:$0xff]
    %v639 = vld [vmem:[#allocation6 + $0x10a0] sm:$0xff]
    %v640 = vld [vmem:[#allocation6 + $0x10a8] sm:$0xff]
    %v641 = vld [vmem:[#allocation6 + $0x10b0] sm:$0xff]
    %v642 = vld [vmem:[#allocation6 + $0x10b8] sm:$0xff]
    %v643 = vld [vmem:[#allocation6 + $0x10c0] sm:$0xff]
    %v644 = vld [vmem:[#allocation6 + $0x10c8] sm:$0xff]
    %v645 = vld [vmem:[#allocation6 + $0x10d0] sm:$0xff]
    %v646 = vld [vmem:[#allocation6 + $0x10d8] sm:$0xff]
    %v647 = vld [vmem:[#allocation6 + $0x10e0] sm:$0xff]
    %v648 = vld [vmem:[#allocation6 + $0x10e8] sm:$0xff]
    %v649 = vld [vmem:[#allocation6 + $0x10f0] sm:$0xff]
    %v650 = vld [vmem:[#allocation6 + $0x10f8] sm:$0xff]
    %v651 = vld [vmem:[#allocation6 + $0x1100] sm:$0xff]
    %v652 = vld [vmem:[#allocation6 + $0x1108] sm:$0xff]
    %v653 = vld [vmem:[#allocation6 + $0x1110] sm:$0xff]
    %v654 = vld [vmem:[#allocation6 + $0x1118] sm:$0xff]
    %v655 = vld [vmem:[#allocation6 + $0x1120] sm:$0xff]
    %v656 = vld [vmem:[#allocation6 + $0x1128] sm:$0xff]
    %v657 = vld [vmem:[#allocation6 + $0x1130] sm:$0xff]
    %v658 = vld [vmem:[#allocation6 + $0x1138] sm:$0xff]
    %v659 = vld [vmem:[#allocation6 + $0x1140] sm:$0xff]
    %v660 = vld [vmem:[#allocation6 + $0x1148] sm:$0xff]
    %v661 = vld [vmem:[#allocation6 + $0x1150] sm:$0xff]
    %v662 = vld [vmem:[#allocation6 + $0x1158] sm:$0xff]
    %v663 = vld [vmem:[#allocation6 + $0x1160] sm:$0xff]
    %v664 = vld [vmem:[#allocation6 + $0x1168] sm:$0xff]
    %v665 = vld [vmem:[#allocation6 + $0x1170] sm:$0xff]
    %v666 = vld [vmem:[#allocation6 + $0x1178] sm:$0xff]
    %v667 = vld [vmem:[#allocation6 + $0x1180] sm:$0xff]
    %v668 = vld [vmem:[#allocation6 + $0x1188] sm:$0xff]
    %v669 = vld [vmem:[#allocation6 + $0x1190] sm:$0xff]
    %v670 = vld [vmem:[#allocation6 + $0x1198] sm:$0xff]
    %v671 = vld [vmem:[#allocation6 + $0x11a0] sm:$0xff]
    %v672 = vld [vmem:[#allocation6 + $0x11a8] sm:$0xff]
    %v673 = vld [vmem:[#allocation6 + $0x11b0] sm:$0xff]
    %v674 = vld [vmem:[#allocation6 + $0x11b8] sm:$0xff]
    %v675 = vld [vmem:[#allocation6 + $0x11c0] sm:$0xff]
    %v676 = vld [vmem:[#allocation6 + $0x11c8] sm:$0xff]
    %v677 = vld [vmem:[#allocation6 + $0x11d0] sm:$0xff]
    %v678 = vld [vmem:[#allocation6 + $0x11d8] sm:$0xff]
    %v679 = vld [vmem:[#allocation6 + $0x11e0] sm:$0xff]
    %v680 = vld [vmem:[#allocation6 + $0x11e8] sm:$0xff]
    %v681 = vld [vmem:[#allocation6 + $0x11f0] sm:$0xff]
    %v682 = vld [vmem:[#allocation6 + $0x11f8] sm:$0xff]
    %v683 = vld [vmem:[#allocation6 + $0x1200] sm:$0xff]
    %v684 = vld [vmem:[#allocation6 + $0x1208] sm:$0xff]
    %v685 = vld [vmem:[#allocation6 + $0x1210] sm:$0xff]
    %v686 = vld [vmem:[#allocation6 + $0x1218] sm:$0xff]
    %v687 = vld [vmem:[#allocation6 + $0x1220] sm:$0xff]
    %v688 = vld [vmem:[#allocation6 + $0x1228] sm:$0xff]
    %v689 = vld [vmem:[#allocation6 + $0x1230] sm:$0xff]
    %v690 = vld [vmem:[#allocation6 + $0x1238] sm:$0xff]
    %v691 = vld [vmem:[#allocation6 + $0x1240] sm:$0xff]
    %v692 = vld [vmem:[#allocation6 + $0x1248] sm:$0xff]
    %v693 = vld [vmem:[#allocation6 + $0x1250] sm:$0xff]
    %v694 = vld [vmem:[#allocation6 + $0x1258] sm:$0xff]
    %v695 = vld [vmem:[#allocation6 + $0x1260] sm:$0xff]
    %v696 = vld [vmem:[#allocation6 + $0x1268] sm:$0xff]
    %v697 = vld [vmem:[#allocation6 + $0x1270] sm:$0xff]
    %v698 = vld [vmem:[#allocation6 + $0x1278] sm:$0xff]
    %v699 = vld [vmem:[#allocation6 + $0x1280] sm:$0xff]
    %v700 = vld [vmem:[#allocation6 + $0x1288] sm:$0xff]
    %v701 = vld [vmem:[#allocation6 + $0x1290] sm:$0xff]
    %v702 = vld [vmem:[#allocation6 + $0x1298] sm:$0xff]
    %v703 = vld [vmem:[#allocation6 + $0x12a0] sm:$0xff]
    %v704 = vld [vmem:[#allocation6 + $0x12a8] sm:$0xff]
    %v705 = vld [vmem:[#allocation6 + $0x12b0] sm:$0xff]
    %v706 = vld [vmem:[#allocation6 + $0x12b8] sm:$0xff]
    %v707 = vld [vmem:[#allocation6 + $0x12c0] sm:$0xff]
    %v708 = vld [vmem:[#allocation6 + $0x12c8] sm:$0xff]
    %v709 = vld [vmem:[#allocation6 + $0x12d0] sm:$0xff]
    %v710 = vld [vmem:[#allocation6 + $0x12d8] sm:$0xff]
    %v711 = vld [vmem:[#allocation6 + $0x12e0] sm:$0xff]
    %v712 = vld [vmem:[#allocation6 + $0x12e8] sm:$0xff]
    %v713 = vld [vmem:[#allocation6 + $0x12f0] sm:$0xff]
    %v714 = vld [vmem:[#allocation6 + $0x12f8] sm:$0xff]
    %v715 = vld [vmem:[#allocation6 + $0x1300] sm:$0xff]
    %v716 = vld [vmem:[#allocation6 + $0x1308] sm:$0xff]
    %v717 = vld [vmem:[#allocation6 + $0x1310] sm:$0xff]
    %v718 = vld [vmem:[#allocation6 + $0x1318] sm:$0xff]
    %v719 = vld [vmem:[#allocation6 + $0x1320] sm:$0xff]
    %v720 = vld [vmem:[#allocation6 + $0x1328] sm:$0xff]
    %v721 = vld [vmem:[#allocation6 + $0x1330] sm:$0xff]
    %v722 = vld [vmem:[#allocation6 + $0x1338] sm:$0xff]
    %v723 = vld [vmem:[#allocation6 + $0x1340] sm:$0xff]
    %v724 = vld [vmem:[#allocation6 + $0x1348] sm:$0xff]
    %v725 = vld [vmem:[#allocation6 + $0x1350] sm:$0xff]
    %v726 = vld [vmem:[#allocation6 + $0x1358] sm:$0xff]
    %v727 = vld [vmem:[#allocation6 + $0x1360] sm:$0xff]
    %v728 = vld [vmem:[#allocation6 + $0x1368] sm:$0xff]
    %v729 = vld [vmem:[#allocation6 + $0x1370] sm:$0xff]
    %v730 = vld [vmem:[#allocation6 + $0x1378] sm:$0xff]
    %v731 = vld [vmem:[#allocation6 + $0x1380] sm:$0xff]
    %v732 = vld [vmem:[#allocation6 + $0x1388] sm:$0xff]
    %v733 = vld [vmem:[#allocation6 + $0x1390] sm:$0xff]
    %v734 = vld [vmem:[#allocation6 + $0x1398] sm:$0xff]
    %v735 = vld [vmem:[#allocation6 + $0x13a0] sm:$0xff]
    %v736 = vld [vmem:[#allocation6 + $0x13a8] sm:$0xff]
    %v737 = vld [vmem:[#allocation6 + $0x13b0] sm:$0xff]
    %v738 = vld [vmem:[#allocation6 + $0x13b8] sm:$0xff]
    %v739 = vld [vmem:[#allocation6 + $0x13c0] sm:$0xff]
    %v740 = vld [vmem:[#allocation6 + $0x13c8] sm:$0xff]
    %v741 = vld [vmem:[#allocation6 + $0x13d0] sm:$0xff]
    %v742 = vld [vmem:[#allocation6 + $0x13d8] sm:$0xff]
    %v743 = vld [vmem:[#allocation6 + $0x13e0] sm:$0xff]
    %v744 = vld [vmem:[#allocation6 + $0x13e8] sm:$0xff]
    %v745 = vld [vmem:[#allocation6 + $0x13f0] sm:$0xff]
    %v746 = vld [vmem:[#allocation6 + $0x13f8] sm:$0xff]
    %v747 = vld [vmem:[#allocation6 + $0x1400] sm:$0xff]
    %v748 = vld [vmem:[#allocation6 + $0x1408] sm:$0xff]
    %v749 = vld [vmem:[#allocation6 + $0x1410] sm:$0xff]
    %v750 = vld [vmem:[#allocation6 + $0x1418] sm:$0xff]
    %v751 = vld [vmem:[#allocation6 + $0x1420] sm:$0xff]
    %v752 = vld [vmem:[#allocation6 + $0x1428] sm:$0xff]
    %v753 = vld [vmem:[#allocation6 + $0x1430] sm:$0xff]
    %v754 = vld [vmem:[#allocation6 + $0x1438] sm:$0xff]
    %v755 = vld [vmem:[#allocation6 + $0x1440] sm:$0xff]
    %v756 = vld [vmem:[#allocation6 + $0x1448] sm:$0xff]
    %v757 = vld [vmem:[#allocation6 + $0x1450] sm:$0xff]
    %v758 = vld [vmem:[#allocation6 + $0x1458] sm:$0xff]
    %v759 = vld [vmem:[#allocation6 + $0x1460] sm:$0xff]
    %v760 = vld [vmem:[#allocation6 + $0x1468] sm:$0xff]
    %v761 = vld [vmem:[#allocation6 + $0x1470] sm:$0xff]
    %v762 = vld [vmem:[#allocation6 + $0x1478] sm:$0xff]
    %v763 = vld [vmem:[#allocation6 + $0x1480] sm:$0xff]
    %v764 = vld [vmem:[#allocation6 + $0x1488] sm:$0xff]
    %v765 = vld [vmem:[#allocation6 + $0x1490] sm:$0xff]
    %v766 = vld [vmem:[#allocation6 + $0x1498] sm:$0xff]
    %v767 = vld [vmem:[#allocation6 + $0x14a0] sm:$0xff]
    %v768 = vld [vmem:[#allocation6 + $0x14a8] sm:$0xff]
    %v769 = vld [vmem:[#allocation6 + $0x14b0] sm:$0xff]
    %v770 = vld [vmem:[#allocation6 + $0x14b8] sm:$0xff]
    %v771 = vld [vmem:[#allocation6 + $0x14c0] sm:$0xff]
    %v772 = vld [vmem:[#allocation6 + $0x14c8] sm:$0xff]
    %v773 = vld [vmem:[#allocation6 + $0x14d0] sm:$0xff]
    %v774 = vld [vmem:[#allocation6 + $0x14d8] sm:$0xff]
    %v775 = vld [vmem:[#allocation6 + $0x14e0] sm:$0xff]
    %v776 = vld [vmem:[#allocation6 + $0x14e8] sm:$0xff]
    %v777 = vld [vmem:[#allocation6 + $0x14f0] sm:$0xff]
    %v778 = vld [vmem:[#allocation6 + $0x14f8] sm:$0xff]
    %v779 = vld [vmem:[#allocation6 + $0x1500] sm:$0xff]
    %v780 = vld [vmem:[#allocation6 + $0x1508] sm:$0xff]
    %v781 = vld [vmem:[#allocation6 + $0x1510] sm:$0xff]
    %v782 = vld [vmem:[#allocation6 + $0x1518] sm:$0xff]
    %v783 = vld [vmem:[#allocation6 + $0x1520] sm:$0xff]
    %v784 = vld [vmem:[#allocation6 + $0x1528] sm:$0xff]
    %v785 = vld [vmem:[#allocation6 + $0x1530] sm:$0xff]
    %v786 = vld [vmem:[#allocation6 + $0x1538] sm:$0xff]
    %v787 = vld [vmem:[#allocation6 + $0x1540] sm:$0xff]
    %v788 = vld [vmem:[#allocation6 + $0x1548] sm:$0xff]
    %v789 = vld [vmem:[#allocation6 + $0x1550] sm:$0xff]
    %v790 = vld [vmem:[#allocation6 + $0x1558] sm:$0xff]
    %v791 = vld [vmem:[#allocation6 + $0x1560] sm:$0xff]
    %v792 = vld [vmem:[#allocation6 + $0x1568] sm:$0xff]
    %v793 = vld [vmem:[#allocation6 + $0x1570] sm:$0xff]
    %v794 = vld [vmem:[#allocation6 + $0x1578] sm:$0xff]
    %v795 = vld [vmem:[#allocation6 + $0x1580] sm:$0xff]
    %v796 = vld [vmem:[#allocation6 + $0x1588] sm:$0xff]
    %v797 = vld [vmem:[#allocation6 + $0x1590] sm:$0xff]
    %v798 = vld [vmem:[#allocation6 + $0x1598] sm:$0xff]
    %v799 = vld [vmem:[#allocation6 + $0x15a0] sm:$0xff]
    %v800 = vld [vmem:[#allocation6 + $0x15a8] sm:$0xff]
    %v801 = vld [vmem:[#allocation6 + $0x15b0] sm:$0xff]
    %v802 = vld [vmem:[#allocation6 + $0x15b8] sm:$0xff]
    %v803 = vld [vmem:[#allocation6 + $0x15c0] sm:$0xff]
    %v804 = vld [vmem:[#allocation6 + $0x15c8] sm:$0xff]
    %v805 = vld [vmem:[#allocation6 + $0x15d0] sm:$0xff]
    %v806 = vld [vmem:[#allocation6 + $0x15d8] sm:$0xff]
    %v807 = vld [vmem:[#allocation6 + $0x15e0] sm:$0xff]
    %v808 = vld [vmem:[#allocation6 + $0x15e8] sm:$0xff]
    %v809 = vld [vmem:[#allocation6 + $0x15f0] sm:$0xff]
    %v810 = vld [vmem:[#allocation6 + $0x15f8] sm:$0xff]
    %v811 = vld [vmem:[#allocation6 + $0x1600] sm:$0xff]
    %v812 = vld [vmem:[#allocation6 + $0x1608] sm:$0xff]
    %v813 = vld [vmem:[#allocation6 + $0x1610] sm:$0xff]
    %v814 = vld [vmem:[#allocation6 + $0x1618] sm:$0xff]
    %v815 = vld [vmem:[#allocation6 + $0x1620] sm:$0xff]
    %v816 = vld [vmem:[#allocation6 + $0x1628] sm:$0xff]
    %v817 = vld [vmem:[#allocation6 + $0x1630] sm:$0xff]
    %v818 = vld [vmem:[#allocation6 + $0x1638] sm:$0xff]
    %v819 = vld [vmem:[#allocation6 + $0x1640] sm:$0xff]
    %v820 = vld [vmem:[#allocation6 + $0x1648] sm:$0xff]
    %v821 = vld [vmem:[#allocation6 + $0x1650] sm:$0xff]
    %v822 = vld [vmem:[#allocation6 + $0x1658] sm:$0xff]
    %v823 = vld [vmem:[#allocation6 + $0x1660] sm:$0xff]
    %v824 = vld [vmem:[#allocation6 + $0x1668] sm:$0xff]
    %v825 = vld [vmem:[#allocation6 + $0x1670] sm:$0xff]
    %v826 = vld [vmem:[#allocation6 + $0x1678] sm:$0xff]
    %v827 = vld [vmem:[#allocation6 + $0x1680] sm:$0xff]
    %v828 = vld [vmem:[#allocation6 + $0x1688] sm:$0xff]
    %v829 = vld [vmem:[#allocation6 + $0x1690] sm:$0xff]
    %v830 = vld [vmem:[#allocation6 + $0x1698] sm:$0xff]
    %v831 = vld [vmem:[#allocation6 + $0x16a0] sm:$0xff]
    %v832 = vld [vmem:[#allocation6 + $0x16a8] sm:$0xff]
    %v833 = vld [vmem:[#allocation6 + $0x16b0] sm:$0xff]
    %v834 = vld [vmem:[#allocation6 + $0x16b8] sm:$0xff]
    %v835 = vld [vmem:[#allocation6 + $0x16c0] sm:$0xff]
    %v836 = vld [vmem:[#allocation6 + $0x16c8] sm:$0xff]
    %v837 = vld [vmem:[#allocation6 + $0x16d0] sm:$0xff]
    %v838 = vld [vmem:[#allocation6 + $0x16d8] sm:$0xff]
    %v839 = vld [vmem:[#allocation6 + $0x16e0] sm:$0xff]
    %v840 = vld [vmem:[#allocation6 + $0x16e8] sm:$0xff]
    %v841 = vld [vmem:[#allocation6 + $0x16f0] sm:$0xff]
    %v842 = vld [vmem:[#allocation6 + $0x16f8] sm:$0xff]
    %v843 = vld [vmem:[#allocation6 + $0x1700] sm:$0xff]
    %v844 = vld [vmem:[#allocation6 + $0x1708] sm:$0xff]
    %v845 = vld [vmem:[#allocation6 + $0x1710] sm:$0xff]
    %v846 = vld [vmem:[#allocation6 + $0x1718] sm:$0xff]
    %v847 = vld [vmem:[#allocation6 + $0x1720] sm:$0xff]
    %v848 = vld [vmem:[#allocation6 + $0x1728] sm:$0xff]
    %v849 = vld [vmem:[#allocation6 + $0x1730] sm:$0xff]
    %v850 = vld [vmem:[#allocation6 + $0x1738] sm:$0xff]
    %v851 = vld [vmem:[#allocation6 + $0x1740] sm:$0xff]
    %v852 = vld [vmem:[#allocation6 + $0x1748] sm:$0xff]
    %v853 = vld [vmem:[#allocation6 + $0x1750] sm:$0xff]
    %v854 = vld [vmem:[#allocation6 + $0x1758] sm:$0xff]
    %v855 = vld [vmem:[#allocation6 + $0x1760] sm:$0xff]
    %v856 = vld [vmem:[#allocation6 + $0x1768] sm:$0xff]
    %v857 = vld [vmem:[#allocation6 + $0x1770] sm:$0xff]
    %v858 = vld [vmem:[#allocation6 + $0x1778] sm:$0xff]
    %v859 = vld [vmem:[#allocation6 + $0x1780] sm:$0xff]
    %v860 = vld [vmem:[#allocation6 + $0x1788] sm:$0xff]
    %v861 = vld [vmem:[#allocation6 + $0x1790] sm:$0xff]
    %v862 = vld [vmem:[#allocation6 + $0x1798] sm:$0xff]
    %v863 = vld [vmem:[#allocation6 + $0x17a0] sm:$0xff]
    %v864 = vld [vmem:[#allocation6 + $0x17a8] sm:$0xff]
    %v865 = vld [vmem:[#allocation6 + $0x17b0] sm:$0xff]
    %v866 = vld [vmem:[#allocation6 + $0x17b8] sm:$0xff]
    %v867 = vld [vmem:[#allocation6 + $0x17c0] sm:$0xff]
    %v868 = vld [vmem:[#allocation6 + $0x17c8] sm:$0xff]
    %v869 = vld [vmem:[#allocation6 + $0x17d0] sm:$0xff]
    %v870 = vld [vmem:[#allocation6 + $0x17d8] sm:$0xff]
    %v871 = vld [vmem:[#allocation6 + $0x17e0] sm:$0xff]
    %v872 = vld [vmem:[#allocation6 + $0x17e8] sm:$0xff]
    %v873 = vld [vmem:[#allocation6 + $0x17f0] sm:$0xff]
    %v874 = vld [vmem:[#allocation6 + $0x17f8] sm:$0xff]
    %875 = vmatprep.subr.mxu0 %v108
    %876 = vmatpush1.msra.mxu0 %v107
    %877 = vmatprep.subr.mxu0 %v114
    %878 = vmatpush1.msra.mxu0 %v113
    %879 = vmatprep.subr.mxu0 %v120
    %880 = vmatpush1.msra.mxu0 %v119
    %881 = vmatprep.subr.mxu0 %v126
    %882 = vmatpush1.msra.mxu0 %v125
    %883 = vmatprep.subr.mxu0 %v132
    %884 = vmatpush1.msra.mxu0 %v131
    %885 = vmatprep.subr.mxu0 %v138
    %886 = vmatpush1.msra.mxu0 %v137
    %887 = vmatprep.subr.mxu0 %v144
    %888 = vmatpush1.msra.mxu0 %v143
    %889 = vmatprep.subr.mxu0 %v150
    %890 = vmatpush1.msra.mxu0 %v149
    %891 = vmatprep.subr.mxu0 %v156
    %892 = vmatpush1.msra.mxu0 %v155
    %893 = vmatprep.subr.mxu0 %v162
    %894 = vmatpush1.msra.mxu0 %v161
    %895 = vmatprep.subr.mxu0 %v168
    %896 = vmatpush1.msra.mxu0 %v167
    %897 = vmatprep.subr.mxu0 %v174
    %898 = vmatpush1.msra.mxu0 %v173
    %899 = vmatprep.subr.mxu0 %v180
    %900 = vmatpush1.msra.mxu0 %v179
    %901 = vmatprep.subr.mxu0 %v186
    %902 = vmatpush1.msra.mxu0 %v185
    %903 = vmatprep.subr.mxu0 %v192
    %904 = vmatpush1.msra.mxu0 %v191
    %905 = vmatprep.subr.mxu0 %v198
    %906 = vmatpush1.msra.mxu0 %v197
    %907 = vmatprep.subr.mxu0 %v204
    %908 = vmatpush1.msra.mxu0 %v203
    %909 = vmatprep.subr.mxu0 %v210
    %910 = vmatpush1.msra.mxu0 %v209
    %911 = vmatprep.subr.mxu0 %v216
    %912 = vmatpush1.msra.mxu0 %v215
    %913 = vmatprep.subr.mxu0 %v222
    %914 = vmatpush1.msra.mxu0 %v221
    %915 = vmatprep.subr.mxu0 %v228
    %916 = vmatpush1.msra.mxu0 %v227
    %917 = vmatprep.subr.mxu0 %v234
    %918 = vmatpush1.msra.mxu0 %v233
    %919 = vmatprep.subr.mxu0 %v240
    %920 = vmatpush1.msra.mxu0 %v239
    %921 = vmatprep.subr.mxu0 %v246
    %922 = vmatpush1.msra.mxu0 %v245
    %923 = vmatprep.subr.mxu0 %v252
    %924 = vmatpush1.msra.mxu0 %v251
    %925 = vmatprep.subr.mxu0 %v258
    %926 = vmatpush1.msra.mxu0 %v257
    %927 = vmatprep.subr.mxu0 %v264
    %928 = vmatpush1.msra.mxu0 %v263
    %929 = vmatprep.subr.mxu0 %v270
    %930 = vmatpush1.msra.mxu0 %v269
    %931 = vmatprep.subr.mxu0 %v276
    %932 = vmatpush1.msra.mxu0 %v275
    %933 = vmatprep.subr.mxu0 %v282
    %934 = vmatpush1.msra.mxu0 %v281
    %935 = vmatprep.subr.mxu0 %v288
    %936 = vmatpush1.msra.mxu0 %v287
    %937 = vmatprep.subr.mxu0 %v294
    %938 = vmatpush1.msra.mxu0 %v293
    %939 = vmatprep.mubr.f32.mxu0 %v100
    %940 = vmatmul.mubr.f32.gmra.mrb[0].mxu0 %v99
    %v941 = vpop.f32.mrb[0].mxu0
    %v942 = vadd.f32 0.0, %v941
    %v943 = vpop.f32.mrb[0].mxu0
    %v944 = vadd.f32 0.0, %v943
    %945 = vdwg.mxu0
    %946 = vmatprep.subr.mxu0 %v300
    %947 = vmatpush1.msra.mxu0 %v299
    %948 = vmatprep.subr.mxu0 %v306
    %949 = vmatpush1.msra.mxu0 %v305
    %950 = vmatprep.subr.mxu0 %v312
    %951 = vmatpush1.msra.mxu0 %v311
    %952 = vmatprep.subr.mxu0 %v318
    %953 = vmatpush1.msra.mxu0 %v317
    %954 = vmatprep.subr.mxu0 %v324
    %955 = vmatpush1.msra.mxu0 %v323
    %956 = vmatprep.subr.mxu0 %v330
    %957 = vmatpush1.msra.mxu0 %v329
    %958 = vmatprep.subr.mxu0 %v336
    %959 = vmatpush1.msra.mxu0 %v335
    %960 = vmatprep.subr.mxu0 %v342
    %961 = vmatpush1.msra.mxu0 %v341
    %962 = vmatprep.subr.mxu0 %v348
    %963 = vmatpush1.msra.mxu0 %v347
    %964 = vmatprep.subr.mxu0 %v354
    %965 = vmatpush1.msra.mxu0 %v353
    %966 = vmatprep.subr.mxu0 %v360
    %967 = vmatpush1.msra.mxu0 %v359
    %968 = vmatprep.subr.mxu0 %v366
    %969 = vmatpush1.msra.mxu0 %v365
    %970 = vmatprep.subr.mxu0 %v372
    %971 = vmatpush1.msra.mxu0 %v371
    %972 = vmatprep.subr.mxu0 %v378
    %973 = vmatpush1.msra.mxu0 %v377
    %974 = vmatprep.subr.mxu0 %v384
    %975 = vmatpush1.msra.mxu0 %v383
    %976 = vmatprep.subr.mxu0 %v390
    %977 = vmatpush1.msra.mxu0 %v389
    %978 = vmatprep.subr.mxu0 %v396
    %979 = vmatpush1.msra.mxu0 %v395
    %980 = vmatprep.subr.mxu0 %v402
    %981 = vmatpush1.msra.mxu0 %v401
    %982 = vmatprep.subr.mxu0 %v408
    %983 = vmatpush1.msra.mxu0 %v407
    %984 = vmatprep.subr.mxu0 %v414
    %985 = vmatpush1.msra.mxu0 %v413
    %986 = vmatprep.subr.mxu0 %v420
    %987 = vmatpush1.msra.mxu0 %v419
    %988 = vmatprep.subr.mxu0 %v426
    %989 = vmatpush1.msra.mxu0 %v425
    %990 = vmatprep.subr.mxu0 %v432
    %991 = vmatpush1.msra.mxu0 %v431
    %992 = vmatprep.subr.mxu0 %v438
    %993 = vmatpush1.msra.mxu0 %v437
    %994 = vmatprep.subr.mxu0 %v444
    %995 = vmatpush1.msra.mxu0 %v443
    %996 = vmatprep.subr.mxu0 %v450
    %997 = vmatpush1.msra.mxu0 %v449
    %998 = vmatprep.subr.mxu0 %v456
    %999 = vmatpush1.msra.mxu0 %v455
    %1000 = vmatprep.subr.mxu0 %v462
    %1001 = vmatpush1.msra.mxu0 %v461
    %1002 = vmatprep.subr.mxu0 %v468
    %1003 = vmatpush1.msra.mxu0 %v467
    %1004 = vmatprep.subr.mxu0 %v474
    %1005 = vmatpush1.msra.mxu0 %v473
    %1006 = vmatprep.subr.mxu0 %v480
    %1007 = vmatpush1.msra.mxu0 %v479
    %1008 = vmatprep.subr.mxu0 %v486
    %1009 = vmatpush1.msra.mxu0 %v485
    %1010 = vmatprep.mubr.f32.mxu0 %v102
    %1011 = vmatmul.mubr.f32.gmra.mrb[0].mxu0 %v101
    %v1012 = vpop.f32.mrb[0].mxu0
    %v1013 = vadd.f32 %v942, %v1012
    %v1014 = vpop.f32.mrb[0].mxu0
    %v1015 = vadd.f32 %v944, %v1014
    %1016 = vdwg.mxu0
    %1017 = vmatprep.subr.mxu0 %v492
    %1018 = vmatpush1.msra.mxu0 %v491
    %1019 = vmatprep.subr.mxu0 %v498
    %1020 = vmatpush1.msra.mxu0 %v497
    %1021 = vmatprep.subr.mxu0 %v504
    %1022 = vmatpush1.msra.mxu0 %v503
    %1023 = vmatprep.subr.mxu0 %v510
    %1024 = vmatpush1.msra.mxu0 %v509
    %1025 = vmatprep.subr.mxu0 %v516
    %1026 = vmatpush1.msra.mxu0 %v515
    %1027 = vmatprep.subr.mxu0 %v522
    %1028 = vmatpush1.msra.mxu0 %v521
    %1029 = vmatprep.subr.mxu0 %v528
    %1030 = vmatpush1.msra.mxu0 %v527
    %1031 = vmatprep.subr.mxu0 %v534
    %1032 = vmatpush1.msra.mxu0 %v533
    %1033 = vmatprep.subr.mxu0 %v540
    %1034 = vmatpush1.msra.mxu0 %v539
    %1035 = vmatprep.subr.mxu0 %v546
    %1036 = vmatpush1.msra.mxu0 %v545
    %1037 = vmatprep.subr.mxu0 %v552
    %1038 = vmatpush1.msra.mxu0 %v551
    %1039 = vmatprep.subr.mxu0 %v558
    %1040 = vmatpush1.msra.mxu0 %v557
    %1041 = vmatprep.subr.mxu0 %v564
    %1042 = vmatpush1.msra.mxu0 %v563
    %1043 = vmatprep.subr.mxu0 %v570
    %1044 = vmatpush1.msra.mxu0 %v569
    %1045 = vmatprep.subr.mxu0 %v576
    %1046 = vmatpush1.msra.mxu0 %v575
    %1047 = vmatprep.subr.mxu0 %v582
    %1048 = vmatpush1.msra.mxu0 %v581
    %1049 = vmatprep.subr.mxu0 %v588
    %1050 = vmatpush1.msra.mxu0 %v587
    %1051 = vmatprep.subr.mxu0 %v594
    %1052 = vmatpush1.msra.mxu0 %v593
    %1053 = vmatprep.subr.mxu0 %v600
    %1054 = vmatpush1.msra.mxu0 %v599
    %1055 = vmatprep.subr.mxu0 %v606
    %1056 = vmatpush1.msra.mxu0 %v605
    %1057 = vmatprep.subr.mxu0 %v612
    %1058 = vmatpush1.msra.mxu0 %v611
    %1059 = vmatprep.subr.mxu0 %v618
    %1060 = vmatpush1.msra.mxu0 %v617
    %1061 = vmatprep.subr.mxu0 %v624
    %1062 = vmatpush1.msra.mxu0 %v623
    %1063 = vmatprep.subr.mxu0 %v630
    %1064 = vmatpush1.msra.mxu0 %v629
    %1065 = vmatprep.subr.mxu0 %v636
    %1066 = vmatpush1.msra.mxu0 %v635
    %1067 = vmatprep.subr.mxu0 %v642
    %1068 = vmatpush1.msra.mxu0 %v641
    %1069 = vmatprep.subr.mxu0 %v648
    %1070 = vmatpush1.msra.mxu0 %v647
    %1071 = vmatprep.subr.mxu0 %v654
    %1072 = vmatpush1.msra.mxu0 %v653
    %1073 = vmatprep.subr.mxu0 %v660
    %1074 = vmatpush1.msra.mxu0 %v659
    %1075 = vmatprep.subr.mxu0 %v666
    %1076 = vmatpush1.msra.mxu0 %v665
    %1077 = vmatprep.subr.mxu0 %v672
    %1078 = vmatpush1.msra.mxu0 %v671
    %1079 = vmatprep.subr.mxu0 %v678
    %1080 = vmatpush1.msra.mxu0 %v677
    %1081 = vmatprep.mubr.f32.mxu0 %v104
    %1082 = vmatmul.mubr.f32.gmra.mrb[0].mxu0 %v103
    %v1083 = vpop.f32.mrb[0].mxu0
    %v1084 = vadd.f32 %v1013, %v1083
    %v1085 = vpop.f32.mrb[0].mxu0
    %v1086 = vadd.f32 %v1015, %v1085
    %1087 = vdwg.mxu0
    %1088 = vmatprep.subr.mxu0 %v684
    %1089 = vmatpush1.msra.mxu0 %v683
    %1090 = vmatprep.subr.mxu0 %v690
    %1091 = vmatpush1.msra.mxu0 %v689
    %1092 = vmatprep.subr.mxu0 %v696
    %1093 = vmatpush1.msra.mxu0 %v695
    %1094 = vmatprep.subr.mxu0 %v702
    %1095 = vmatpush1.msra.mxu0 %v701
    %1096 = vmatprep.subr.mxu0 %v708
    %1097 = vmatpush1.msra.mxu0 %v707
    %1098 = vmatprep.subr.mxu0 %v714
    %1099 = vmatpush1.msra.mxu0 %v713
    %1100 = vmatprep.subr.mxu0 %v720
    %1101 = vmatpush1.msra.mxu0 %v719
    %1102 = vmatprep.subr.mxu0 %v726
    %1103 = vmatpush1.msra.mxu0 %v725
    %1104 = vmatprep.subr.mxu0 %v732
    %1105 = vmatpush1.msra.mxu0 %v731
    %1106 = vmatprep.subr.mxu0 %v738
    %1107 = vmatpush1.msra.mxu0 %v737
    %1108 = vmatprep.subr.mxu0 %v744
    %1109 = vmatpush1.msra.mxu0 %v743
    %1110 = vmatprep.subr.mxu0 %v750
    %1111 = vmatpush1.msra.mxu0 %v749
    %1112 = vmatprep.subr.mxu0 %v756
    %1113 = vmatpush1.msra.mxu0 %v755
    %1114 = vmatprep.subr.mxu0 %v762
    %1115 = vmatpush1.msra.mxu0 %v761
    %1116 = vmatprep.subr.mxu0 %v768
    %1117 = vmatpush1.msra.mxu0 %v767
    %1118 = vmatprep.subr.mxu0 %v774
    %1119 = vmatpush1.msra.mxu0 %v773
    %1120 = vmatprep.subr.mxu0 %v780
    %1121 = vmatpush1.msra.mxu0 %v779
    %1122 = vmatprep.subr.mxu0 %v786
    %1123 = vmatpush1.msra.mxu0 %v785
    %1124 = vmatprep.subr.mxu0 %v792
    %1125 = vmatpush1.msra.mxu0 %v791
    %1126 = vmatprep.subr.mxu0 %v798
    %1127 = vmatpush1.msra.mxu0 %v797
    %1128 = vmatprep.subr.mxu0 %v804
    %1129 = vmatpush1.msra.mxu0 %v803
    %1130 = vmatprep.subr.mxu0 %v810
    %1131 = vmatpush1.msra.mxu0 %v809
    %1132 = vmatprep.subr.mxu0 %v816
    %1133 = vmatpush1.msra.mxu0 %v815
    %1134 = vmatprep.subr.mxu0 %v822
    %1135 = vmatpush1.msra.mxu0 %v821
    %1136 = vmatprep.subr.mxu0 %v828
    %1137 = vmatpush1.msra.mxu0 %v827
    %1138 = vmatprep.subr.mxu0 %v834
    %1139 = vmatpush1.msra.mxu0 %v833
    %1140 = vmatprep.subr.mxu0 %v840
    %1141 = vmatpush1.msra.mxu0 %v839
    %1142 = vmatprep.subr.mxu0 %v846
    %1143 = vmatpush1.msra.mxu0 %v845
    %1144 = vmatprep.subr.mxu0 %v852
    %1145 = vmatpush1.msra.mxu0 %v851
    %1146 = vmatprep.subr.mxu0 %v858
    %1147 = vmatpush1.msra.mxu0 %v857
    %1148 = vmatprep.subr.mxu0 %v864
    %1149 = vmatpush1.msra.mxu0 %v863
    %1150 = vmatprep.subr.mxu0 %v870
    %1151 = vmatpush1.msra.mxu0 %v869
    %1152 = vmatprep.mubr.f32.mxu0 %v106
    %1153 = vmatmul.mubr.f32.gmra.mrb[0].mxu0 %v105
    %v1154 = vpop.f32.mrb[0].mxu0
    %v1155 = vadd.f32 %v1084, %v1154
    %v1156 = vpop.f32.mrb[0].mxu0
    %v1157 = vadd.f32 %v1086, %v1156
    %1158 = vdwg.mxu0
    %1159 = vmatprep.subr.mxu0 %v110
    %1160 = vmatpush1.msra.mxu0 %v109
    %1161 = vmatprep.subr.mxu0 %v116
    %1162 = vmatpush1.msra.mxu0 %v115
    %1163 = vmatprep.subr.mxu0 %v122
    %1164 = vmatpush1.msra.mxu0 %v121
    %1165 = vmatprep.subr.mxu0 %v128
    %1166 = vmatpush1.msra.mxu0 %v127
    %1167 = vmatprep.subr.mxu0 %v134
    %1168 = vmatpush1.msra.mxu0 %v133
    %1169 = vmatprep.subr.mxu0 %v140
    %1170 = vmatpush1.msra.mxu0 %v139
    %1171 = vmatprep.subr.mxu0 %v146
    %1172 = vmatpush1.msra.mxu0 %v145
    %1173 = vmatprep.subr.mxu0 %v152
    %1174 = vmatpush1.msra.mxu0 %v151
    %1175 = vmatprep.subr.mxu0 %v158
    %1176 = vmatpush1.msra.mxu0 %v157
    %1177 = vmatprep.subr.mxu0 %v164
    %1178 = vmatpush1.msra.mxu0 %v163
    %1179 = vmatprep.subr.mxu0 %v170
    %1180 = vmatpush1.msra.mxu0 %v169
    %1181 = vmatprep.subr.mxu0 %v176
    %1182 = vmatpush1.msra.mxu0 %v175
    %1183 = vmatprep.subr.mxu0 %v182
    %1184 = vmatpush1.msra.mxu0 %v181
    %1185 = vmatprep.subr.mxu0 %v188
    %1186 = vmatpush1.msra.mxu0 %v187
    %1187 = vmatprep.subr.mxu0 %v194
    %1188 = vmatpush1.msra.mxu0 %v193
    %1189 = vmatprep.subr.mxu0 %v200
    %1190 = vmatpush1.msra.mxu0 %v199
    %1191 = vmatprep.subr.mxu0 %v206
    %1192 = vmatpush1.msra.mxu0 %v205
    %1193 = vmatprep.subr.mxu0 %v212
    %1194 = vmatpush1.msra.mxu0 %v211
    %1195 = vmatprep.subr.mxu0 %v218
    %1196 = vmatpush1.msra.mxu0 %v217
    %1197 = vmatprep.subr.mxu0 %v224
    %1198 = vmatpush1.msra.mxu0 %v223
    %1199 = vmatprep.subr.mxu0 %v230
    %1200 = vmatpush1.msra.mxu0 %v229
    %1201 = vmatprep.subr.mxu0 %v236
    %1202 = vmatpush1.msra.mxu0 %v235
    %1203 = vmatprep.subr.mxu0 %v242
    %1204 = vmatpush1.msra.mxu0 %v241
    %1205 = vmatprep.subr.mxu0 %v248
    %1206 = vmatpush1.msra.mxu0 %v247
    %1207 = vmatprep.subr.mxu0 %v254
    %1208 = vmatpush1.msra.mxu0 %v253
    %1209 = vmatprep.subr.mxu0 %v260
    %1210 = vmatpush1.msra.mxu0 %v259
    %1211 = vmatprep.subr.mxu0 %v266
    %1212 = vmatpush1.msra.mxu0 %v265
    %1213 = vmatprep.subr.mxu0 %v272
    %1214 = vmatpush1.msra.mxu0 %v271
    %1215 = vmatprep.subr.mxu0 %v278
    %1216 = vmatpush1.msra.mxu0 %v277
    %1217 = vmatprep.subr.mxu0 %v284
    %1218 = vmatpush1.msra.mxu0 %v283
    %1219 = vmatprep.subr.mxu0 %v290
    %1220 = vmatpush1.msra.mxu0 %v289
    %1221 = vmatprep.subr.mxu0 %v296
    %1222 = vmatpush1.msra.mxu0 %v295
    %1223 = vmatprep.mubr.f32.mxu0 %v100
    %1224 = vmatmul.mubr.f32.gmra.mrb[0].mxu0 %v99
    %v1225 = vpop.f32.mrb[0].mxu0
    %v1226 = vadd.f32 0.0, %v1225
    %v1227 = vpop.f32.mrb[0].mxu0
    %v1228 = vadd.f32 0.0, %v1227
    %1229 = vdwg.mxu0
    %1230 = vmatprep.subr.mxu0 %v302
    %1231 = vmatpush1.msra.mxu0 %v301
    %1232 = vmatprep.subr.mxu0 %v308
    %1233 = vmatpush1.msra.mxu0 %v307
    %1234 = vmatprep.subr.mxu0 %v314
    %1235 = vmatpush1.msra.mxu0 %v313
    %1236 = vmatprep.subr.mxu0 %v320
    %1237 = vmatpush1.msra.mxu0 %v319
    %1238 = vmatprep.subr.mxu0 %v326
    %1239 = vmatpush1.msra.mxu0 %v325
    %1240 = vmatprep.subr.mxu0 %v332
    %1241 = vmatpush1.msra.mxu0 %v331
    %1242 = vmatprep.subr.mxu0 %v338
    %1243 = vmatpush1.msra.mxu0 %v337
    %1244 = vmatprep.subr.mxu0 %v344
    %1245 = vmatpush1.msra.mxu0 %v343
    %1246 = vmatprep.subr.mxu0 %v350
    %1247 = vmatpush1.msra.mxu0 %v349
    %1248 = vmatprep.subr.mxu0 %v356
    %1249 = vmatpush1.msra.mxu0 %v355
    %1250 = vmatprep.subr.mxu0 %v362
    %1251 = vmatpush1.msra.mxu0 %v361
    %1252 = vmatprep.subr.mxu0 %v368
    %1253 = vmatpush1.msra.mxu0 %v367
    %1254 = vmatprep.subr.mxu0 %v374
    %1255 = vmatpush1.msra.mxu0 %v373
    %1256 = vmatprep.subr.mxu0 %v380
    %1257 = vmatpush1.msra.mxu0 %v379
    %1258 = vmatprep.subr.mxu0 %v386
    %1259 = vmatpush1.msra.mxu0 %v385
    %1260 = vmatprep.subr.mxu0 %v392
    %1261 = vmatpush1.msra.mxu0 %v391
    %1262 = vmatprep.subr.mxu0 %v398
    %1263 = vmatpush1.msra.mxu0 %v397
    %1264 = vmatprep.subr.mxu0 %v404
    %1265 = vmatpush1.msra.mxu0 %v403
    %1266 = vmatprep.subr.mxu0 %v410
    %1267 = vmatpush1.msra.mxu0 %v409
    %1268 = vmatprep.subr.mxu0 %v416
    %1269 = vmatpush1.msra.mxu0 %v415
    %1270 = vmatprep.subr.mxu0 %v422
    %1271 = vmatpush1.msra.mxu0 %v421
    %1272 = vmatprep.subr.mxu0 %v428
    %1273 = vmatpush1.msra.mxu0 %v427
    %1274 = vmatprep.subr.mxu0 %v434
    %1275 = vmatpush1.msra.mxu0 %v433
    %1276 = vmatprep.subr.mxu0 %v440
    %1277 = vmatpush1.msra.mxu0 %v439
    %1278 = vmatprep.subr.mxu0 %v446
    %1279 = vmatpush1.msra.mxu0 %v445
    %1280 = vmatprep.subr.mxu0 %v452
    %1281 = vmatpush1.msra.mxu0 %v451
    %1282 = vmatprep.subr.mxu0 %v458
    %1283 = vmatpush1.msra.mxu0 %v457
    %1284 = vmatprep.subr.mxu0 %v464
    %1285 = vmatpush1.msra.mxu0 %v463
    %1286 = vmatprep.subr.mxu0 %v470
    %1287 = vmatpush1.msra.mxu0 %v469
    %1288 = vmatprep.subr.mxu0 %v476
    %1289 = vmatpush1.msra.mxu0 %v475
    %1290 = vmatprep.subr.mxu0 %v482
    %1291 = vmatpush1.msra.mxu0 %v481
    %1292 = vmatprep.subr.mxu0 %v488
    %1293 = vmatpush1.msra.mxu0 %v487
    %1294 = vmatprep.mubr.f32.mxu0 %v102
    %1295 = vmatmul.mubr.f32.gmra.mrb[0].mxu0 %v101
    %v1296 = vpop.f32.mrb[0].mxu0
    %v1297 = vadd.f32 %v1226, %v1296
    %v1298 = vpop.f32.mrb[0].mxu0
    %v1299 = vadd.f32 %v1228, %v1298
    %1300 = vdwg.mxu0
    %1301 = vmatprep.subr.mxu0 %v494
    %1302 = vmatpush1.msra.mxu0 %v493
    %1303 = vmatprep.subr.mxu0 %v500
    %1304 = vmatpush1.msra.mxu0 %v499
    %1305 = vmatprep.subr.mxu0 %v506
    %1306 = vmatpush1.msra.mxu0 %v505
    %1307 = vmatprep.subr.mxu0 %v512
    %1308 = vmatpush1.msra.mxu0 %v511
    %1309 = vmatprep.subr.mxu0 %v518
    %1310 = vmatpush1.msra.mxu0 %v517
    %1311 = vmatprep.subr.mxu0 %v524
    %1312 = vmatpush1.msra.mxu0 %v523
    %1313 = vmatprep.subr.mxu0 %v530
    %1314 = vmatpush1.msra.mxu0 %v529
    %1315 = vmatprep.subr.mxu0 %v536
    %1316 = vmatpush1.msra.mxu0 %v535
    %1317 = vmatprep.subr.mxu0 %v542
    %1318 = vmatpush1.msra.mxu0 %v541
    %1319 = vmatprep.subr.mxu0 %v548
    %1320 = vmatpush1.msra.mxu0 %v547
    %1321 = vmatprep.subr.mxu0 %v554
    %1322 = vmatpush1.msra.mxu0 %v553
    %1323 = vmatprep.subr.mxu0 %v560
    %1324 = vmatpush1.msra.mxu0 %v559
    %1325 = vmatprep.subr.mxu0 %v566
    %1326 = vmatpush1.msra.mxu0 %v565
    %1327 = vmatprep.subr.mxu0 %v572
    %1328 = vmatpush1.msra.mxu0 %v571
    %1329 = vmatprep.subr.mxu0 %v578
    %1330 = vmatpush1.msra.mxu0 %v577
    %1331 = vmatprep.subr.mxu0 %v584
    %1332 = vmatpush1.msra.mxu0 %v583
    %1333 = vmatprep.subr.mxu0 %v590
    %1334 = vmatpush1.msra.mxu0 %v589
    %1335 = vmatprep.subr.mxu0 %v596
    %1336 = vmatpush1.msra.mxu0 %v595
    %1337 = vmatprep.subr.mxu0 %v602
    %1338 = vmatpush1.msra.mxu0 %v601
    %1339 = vmatprep.subr.mxu0 %v608
    %1340 = vmatpush1.msra.mxu0 %v607
    %1341 = vmatprep.subr.mxu0 %v614
    %1342 = vmatpush1.msra.mxu0 %v613
    %1343 = vmatprep.subr.mxu0 %v620
    %1344 = vmatpush1.msra.mxu0 %v619
    %1345 = vmatprep.subr.mxu0 %v626
    %1346 = vmatpush1.msra.mxu0 %v625
    %1347 = vmatprep.subr.mxu0 %v632
    %1348 = vmatpush1.msra.mxu0 %v631
    %1349 = vmatprep.subr.mxu0 %v638
    %1350 = vmatpush1.msra.mxu0 %v637
    %1351 = vmatprep.subr.mxu0 %v644
    %1352 = vmatpush1.msra.mxu0 %v643
    %1353 = vmatprep.subr.mxu0 %v650
    %1354 = vmatpush1.msra.mxu0 %v649
    %1355 = vmatprep.subr.mxu0 %v656
    %1356 = vmatpush1.msra.mxu0 %v655
    %1357 = vmatprep.subr.mxu0 %v662
    %1358 = vmatpush1.msra.mxu0 %v661
    %1359 = vmatprep.subr.mxu0 %v668
    %1360 = vmatpush1.msra.mxu0 %v667
    %1361 = vmatprep.subr.mxu0 %v674
    %1362 = vmatpush1.msra.mxu0 %v673
    %1363 = vmatprep.subr.mxu0 %v680
    %1364 = vmatpush1.msra.mxu0 %v679
    %1365 = vmatprep.mubr.f32.mxu0 %v104
    %1366 = vmatmul.mubr.f32.gmra.mrb[0].mxu0 %v103
    %v1367 = vpop.f32.mrb[0].mxu0
    %v1368 = vadd.f32 %v1297, %v1367
    %v1369 = vpop.f32.mrb[0].mxu0
    %v1370 = vadd.f32 %v1299, %v1369
    %1371 = vdwg.mxu0
    %1372 = vmatprep.subr.mxu0 %v686
    %1373 = vmatpush1.msra.mxu0 %v685
    %1374 = vmatprep.subr.mxu0 %v692
    %1375 = vmatpush1.msra.mxu0 %v691
    %1376 = vmatprep.subr.mxu0 %v698
    %1377 = vmatpush1.msra.mxu0 %v697
    %1378 = vmatprep.subr.mxu0 %v704
    %1379 = vmatpush1.msra.mxu0 %v703
    %1380 = vmatprep.subr.mxu0 %v710
    %1381 = vmatpush1.msra.mxu0 %v709
    %1382 = vmatprep.subr.mxu0 %v716
    %1383 = vmatpush1.msra.mxu0 %v715
    %1384 = vmatprep.subr.mxu0 %v722
    %1385 = vmatpush1.msra.mxu0 %v721
    %1386 = vmatprep.subr.mxu0 %v728
    %1387 = vmatpush1.msra.mxu0 %v727
    %1388 = vmatprep.subr.mxu0 %v734
    %1389 = vmatpush1.msra.mxu0 %v733
    %1390 = vmatprep.subr.mxu0 %v740
    %1391 = vmatpush1.msra.mxu0 %v739
    %1392 = vmatprep.subr.mxu0 %v746
    %1393 = vmatpush1.msra.mxu0 %v745
    %1394 = vmatprep.subr.mxu0 %v752
    %1395 = vmatpush1.msra.mxu0 %v751
    %1396 = vmatprep.subr.mxu0 %v758
    %1397 = vmatpush1.msra.mxu0 %v757
    %1398 = vmatprep.subr.mxu0 %v764
    %1399 = vmatpush1.msra.mxu0 %v763
    %1400 = vmatprep.subr.mxu0 %v770
    %1401 = vmatpush1.msra.mxu0 %v769
    %1402 = vmatprep.subr.mxu0 %v776
    %1403 = vmatpush1.msra.mxu0 %v775
    %1404 = vmatprep.subr.mxu0 %v782
    %1405 = vmatpush1.msra.mxu0 %v781
    %1406 = vmatprep.subr.mxu0 %v788
    %1407 = vmatpush1.msra.mxu0 %v787
    %1408 = vmatprep.subr.mxu0 %v794
    %1409 = vmatpush1.msra.mxu0 %v793
    %1410 = vmatprep.subr.mxu0 %v800
    %1411 = vmatpush1.msra.mxu0 %v799
    %1412 = vmatprep.subr.mxu0 %v806
    %1413 = vmatpush1.msra.mxu0 %v805
    %1414 = vmatprep.subr.mxu0 %v812
    %1415 = vmatpush1.msra.mxu0 %v811
    %1416 = vmatprep.subr.mxu0 %v818
    %1417 = vmatpush1.msra.mxu0 %v817
    %1418 = vmatprep.subr.mxu0 %v824
    %1419 = vmatpush1.msra.mxu0 %v823
    %1420 = vmatprep.subr.mxu0 %v830
    %1421 = vmatpush1.msra.mxu0 %v829
    %1422 = vmatprep.subr.mxu0 %v836
    %1423 = vmatpush1.msra.mxu0 %v835
    %1424 = vmatprep.subr.mxu0 %v842
    %1425 = vmatpush1.msra.mxu0 %v841
    %1426 = vmatprep.subr.mxu0 %v848
    %1427 = vmatpush1.msra.mxu0 %v847
    %1428 = vmatprep.subr.mxu0 %v854
    %1429 = vmatpush1.msra.mxu0 %v853
    %1430 = vmatprep.subr.mxu0 %v860
    %1431 = vmatpush1.msra.mxu0 %v859
    %1432 = vmatprep.subr.mxu0 %v866
    %1433 = vmatpush1.msra.mxu0 %v865
    %1434 = vmatprep.subr.mxu0 %v872
    %1435 = vmatpush1.msra.mxu0 %v871
    %1436 = vmatprep.mubr.f32.mxu0 %v106
    %1437 = vmatmul.mubr.f32.gmra.mrb[0].mxu0 %v105
    %v1438 = vpop.f32.mrb[0].mxu0
    %v1439 = vadd.f32 %v1368, %v1438
    %v1440 = vpop.f32.mrb[0].mxu0
    %v1441 = vadd.f32 %v1370, %v1440
    %1442 = vdwg.mxu0
    %1443 = vmatprep.subr.mxu0 %v112
    %1444 = vmatpush1.msra.mxu0 %v111
    %1445 = vmatprep.subr.mxu0 %v118
    %1446 = vmatpush1.msra.mxu0 %v117
    %1447 = vmatprep.subr.mxu0 %v124
    %1448 = vmatpush1.msra.mxu0 %v123
    %1449 = vmatprep.subr.mxu0 %v130
    %1450 = vmatpush1.msra.mxu0 %v129
    %1451 = vmatprep.subr.mxu0 %v136
    %1452 = vmatpush1.msra.mxu0 %v135
    %1453 = vmatprep.subr.mxu0 %v142
    %1454 = vmatpush1.msra.mxu0 %v141
    %1455 = vmatprep.subr.mxu0 %v148
    %1456 = vmatpush1.msra.mxu0 %v147
    %1457 = vmatprep.subr.mxu0 %v154
    %1458 = vmatpush1.msra.mxu0 %v153
    %1459 = vmatprep.subr.mxu0 %v160
    %1460 = vmatpush1.msra.mxu0 %v159
    %1461 = vmatprep.subr.mxu0 %v166
    %1462 = vmatpush1.msra.mxu0 %v165
    %1463 = vmatprep.subr.mxu0 %v172
    %1464 = vmatpush1.msra.mxu0 %v171
    %1465 = vmatprep.subr.mxu0 %v178
    %1466 = vmatpush1.msra.mxu0 %v177
    %1467 = vmatprep.subr.mxu0 %v184
    %1468 = vmatpush1.msra.mxu0 %v183
    %1469 = vmatprep.subr.mxu0 %v190
    %1470 = vmatpush1.msra.mxu0 %v189
    %1471 = vmatprep.subr.mxu0 %v196
    %1472 = vmatpush1.msra.mxu0 %v195
    %1473 = vmatprep.subr.mxu0 %v202
    %1474 = vmatpush1.msra.mxu0 %v201
    %1475 = vmatprep.subr.mxu0 %v208
    %1476 = vmatpush1.msra.mxu0 %v207
    %1477 = vmatprep.subr.mxu0 %v214
    %1478 = vmatpush1.msra.mxu0 %v213
    %1479 = vmatprep.subr.mxu0 %v220
    %1480 = vmatpush1.msra.mxu0 %v219
    %1481 = vmatprep.subr.mxu0 %v226
    %1482 = vmatpush1.msra.mxu0 %v225
    %1483 = vmatprep.subr.mxu0 %v232
    %1484 = vmatpush1.msra.mxu0 %v231
    %1485 = vmatprep.subr.mxu0 %v238
    %1486 = vmatpush1.msra.mxu0 %v237
    %1487 = vmatprep.subr.mxu0 %v244
    %1488 = vmatpush1.msra.mxu0 %v243
    %1489 = vmatprep.subr.mxu0 %v250
    %1490 = vmatpush1.msra.mxu0 %v249
    %1491 = vmatprep.subr.mxu0 %v256
    %1492 = vmatpush1.msra.mxu0 %v255
    %1493 = vmatprep.subr.mxu0 %v262
    %1494 = vmatpush1.msra.mxu0 %v261
    %1495 = vmatprep.subr.mxu0 %v268
    %1496 = vmatpush1.msra.mxu0 %v267
    %1497 = vmatprep.subr.mxu0 %v274
    %1498 = vmatpush1.msra.mxu0 %v273
    %1499 = vmatprep.subr.mxu0 %v280
    %1500 = vmatpush1.msra.mxu0 %v279
    %1501 = vmatprep.subr.mxu0 %v286
    %1502 = vmatpush1.msra.mxu0 %v285
    %1503 = vmatprep.subr.mxu0 %v292
    %1504 = vmatpush1.msra.mxu0 %v291
    %1505 = vmatprep.subr.mxu0 %v298
    %1506 = vmatpush1.msra.mxu0 %v297
    %1507 = vmatprep.mubr.f32.mxu0 %v100
    %1508 = vmatmul.mubr.f32.gmra.mrb[0].mxu0 %v99
    %v1509 = vpop.f32.mrb[0].mxu0
    %v1510 = vadd.f32 0.0, %v1509
    %v1511 = vpop.f32.mrb[0].mxu0
    %v1512 = vadd.f32 0.0, %v1511
    %1513 = vdwg.mxu0
    %1514 = vmatprep.subr.mxu0 %v304
    %1515 = vmatpush1.msra.mxu0 %v303
    %1516 = vmatprep.subr.mxu0 %v310
    %1517 = vmatpush1.msra.mxu0 %v309
    %1518 = vmatprep.subr.mxu0 %v316
    %1519 = vmatpush1.msra.mxu0 %v315
    %1520 = vmatprep.subr.mxu0 %v322
    %1521 = vmatpush1.msra.mxu0 %v321
    %1522 = vmatprep.subr.mxu0 %v328
    %1523 = vmatpush1.msra.mxu0 %v327
    %1524 = vmatprep.subr.mxu0 %v334
    %1525 = vmatpush1.msra.mxu0 %v333
    %1526 = vmatprep.subr.mxu0 %v340
    %1527 = vmatpush1.msra.mxu0 %v339
    %1528 = vmatprep.subr.mxu0 %v346
    %1529 = vmatpush1.msra.mxu0 %v345
    %1530 = vmatprep.subr.mxu0 %v352
    %1531 = vmatpush1.msra.mxu0 %v351
    %1532 = vmatprep.subr.mxu0 %v358
    %1533 = vmatpush1.msra.mxu0 %v357
    %1534 = vmatprep.subr.mxu0 %v364
    %1535 = vmatpush1.msra.mxu0 %v363
    %1536 = vmatprep.subr.mxu0 %v370
    %1537 = vmatpush1.msra.mxu0 %v369
    %1538 = vmatprep.subr.mxu0 %v376
    %1539 = vmatpush1.msra.mxu0 %v375
    %1540 = vmatprep.subr.mxu0 %v382
    %1541 = vmatpush1.msra.mxu0 %v381
    %1542 = vmatprep.subr.mxu0 %v388
    %1543 = vmatpush1.msra.mxu0 %v387
    %1544 = vmatprep.subr.mxu0 %v394
    %1545 = vmatpush1.msra.mxu0 %v393
    %1546 = vmatprep.subr.mxu0 %v400
    %1547 = vmatpush1.msra.mxu0 %v399
    %1548 = vmatprep.subr.mxu0 %v406
    %1549 = vmatpush1.msra.mxu0 %v405
    %1550 = vmatprep.subr.mxu0 %v412
    %1551 = vmatpush1.msra.mxu0 %v411
    %1552 = vmatprep.subr.mxu0 %v418
    %1553 = vmatpush1.msra.mxu0 %v417
    %1554 = vmatprep.subr.mxu0 %v424
    %1555 = vmatpush1.msra.mxu0 %v423
    %1556 = vmatprep.subr.mxu0 %v430
    %1557 = vmatpush1.msra.mxu0 %v429
    %1558 = vmatprep.subr.mxu0 %v436
    %1559 = vmatpush1.msra.mxu0 %v435
    %1560 = vmatprep.subr.mxu0 %v442
    %1561 = vmatpush1.msra.mxu0 %v441
    %1562 = vmatprep.subr.mxu0 %v448
    %1563 = vmatpush1.msra.mxu0 %v447
    %1564 = vmatprep.subr.mxu0 %v454
    %1565 = vmatpush1.msra.mxu0 %v453
    %1566 = vmatprep.subr.mxu0 %v460
    %1567 = vmatpush1.msra.mxu0 %v459
    %1568 = vmatprep.subr.mxu0 %v466
    %1569 = vmatpush1.msra.mxu0 %v465
    %1570 = vmatprep.subr.mxu0 %v472
    %1571 = vmatpush1.msra.mxu0 %v471
    %1572 = vmatprep.subr.mxu0 %v478
    %1573 = vmatpush1.msra.mxu0 %v477
    %1574 = vmatprep.subr.mxu0 %v484
    %1575 = vmatpush1.msra.mxu0 %v483
    %1576 = vmatprep.subr.mxu0 %v490
    %1577 = vmatpush1.msra.mxu0 %v489
    %1578 = vmatprep.mubr.f32.mxu0 %v102
    %1579 = vmatmul.mubr.f32.gmra.mrb[0].mxu0 %v101
    %v1580 = vpop.f32.mrb[0].mxu0
    %v1581 = vadd.f32 %v1510, %v1580
    %v1582 = vpop.f32.mrb[0].mxu0
    %v1583 = vadd.f32 %v1512, %v1582
    %1584 = vdwg.mxu0
    %1585 = vmatprep.subr.mxu0 %v496
    %1586 = vmatpush1.msra.mxu0 %v495
    %1587 = vmatprep.subr.mxu0 %v502
    %1588 = vmatpush1.msra.mxu0 %v501
    %1589 = vmatprep.subr.mxu0 %v508
    %1590 = vmatpush1.msra.mxu0 %v507
    %1591 = vmatprep.subr.mxu0 %v514
    %1592 = vmatpush1.msra.mxu0 %v513
    %1593 = vmatprep.subr.mxu0 %v520
    %1594 = vmatpush1.msra.mxu0 %v519
    %1595 = vmatprep.subr.mxu0 %v526
    %1596 = vmatpush1.msra.mxu0 %v525
    %1597 = vmatprep.subr.mxu0 %v532
    %1598 = vmatpush1.msra.mxu0 %v531
    %1599 = vmatprep.subr.mxu0 %v538
    %1600 = vmatpush1.msra.mxu0 %v537
    %1601 = vmatprep.subr.mxu0 %v544
    %1602 = vmatpush1.msra.mxu0 %v543
    %1603 = vmatprep.subr.mxu0 %v550
    %1604 = vmatpush1.msra.mxu0 %v549
    %1605 = vmatprep.subr.mxu0 %v556
    %1606 = vmatpush1.msra.mxu0 %v555
    %1607 = vmatprep.subr.mxu0 %v562
    %1608 = vmatpush1.msra.mxu0 %v561
    %1609 = vmatprep.subr.mxu0 %v568
    %1610 = vmatpush1.msra.mxu0 %v567
    %1611 = vmatprep.subr.mxu0 %v574
    %1612 = vmatpush1.msra.mxu0 %v573
    %1613 = vmatprep.subr.mxu0 %v580
    %1614 = vmatpush1.msra.mxu0 %v579
    %1615 = vmatprep.subr.mxu0 %v586
    %1616 = vmatpush1.msra.mxu0 %v585
    %1617 = vmatprep.subr.mxu0 %v592
    %1618 = vmatpush1.msra.mxu0 %v591
    %1619 = vmatprep.subr.mxu0 %v598
    %1620 = vmatpush1.msra.mxu0 %v597
    %1621 = vmatprep.subr.mxu0 %v604
    %1622 = vmatpush1.msra.mxu0 %v603
    %1623 = vmatprep.subr.mxu0 %v610
    %1624 = vmatpush1.msra.mxu0 %v609
    %1625 = vmatprep.subr.mxu0 %v616
    %1626 = vmatpush1.msra.mxu0 %v615
    %1627 = vmatprep.subr.mxu0 %v622
    %1628 = vmatpush1.msra.mxu0 %v621
    %1629 = vmatprep.subr.mxu0 %v628
    %1630 = vmatpush1.msra.mxu0 %v627
    %1631 = vmatprep.subr.mxu0 %v634
    %1632 = vmatpush1.msra.mxu0 %v633
    %1633 = vmatprep.subr.mxu0 %v640
    %1634 = vmatpush1.msra.mxu0 %v639
    %1635 = vmatprep.subr.mxu0 %v646
    %1636 = vmatpush1.msra.mxu0 %v645
    %1637 = vmatprep.subr.mxu0 %v652
    %1638 = vmatpush1.msra.mxu0 %v651
    %1639 = vmatprep.subr.mxu0 %v658
    %1640 = vmatpush1.msra.mxu0 %v657
    %1641 = vmatprep.subr.mxu0 %v664
    %1642 = vmatpush1.msra.mxu0 %v663
    %1643 = vmatprep.subr.mxu0 %v670
    %1644 = vmatpush1.msra.mxu0 %v669
    %1645 = vmatprep.subr.mxu0 %v676
    %1646 = vmatpush1.msra.mxu0 %v675
    %1647 = vmatprep.subr.mxu0 %v682
    %1648 = vmatpush1.msra.mxu0 %v681
    %1649 = vmatprep.mubr.f32.mxu0 %v104
    %1650 = vmatmul.mubr.f32.gmra.mrb[0].mxu0 %v103
    %v1651 = vpop.f32.mrb[0].mxu0
    %v1652 = vadd.f32 %v1581, %v1651
    %v1653 = vpop.f32.mrb[0].mxu0
    %v1654 = vadd.f32 %v1583, %v1653
    %1655 = vdwg.mxu0
    %1656 = vmatprep.subr.mxu0 %v688
    %1657 = vmatpush1.msra.mxu0 %v687
    %1658 = vmatprep.subr.mxu0 %v694
    %1659 = vmatpush1.msra.mxu0 %v693
    %1660 = vmatprep.subr.mxu0 %v700
    %1661 = vmatpush1.msra.mxu0 %v699
    %1662 = vmatprep.subr.mxu0 %v706
    %1663 = vmatpush1.msra.mxu0 %v705
    %1664 = vmatprep.subr.mxu0 %v712
    %1665 = vmatpush1.msra.mxu0 %v711
    %1666 = vmatprep.subr.mxu0 %v718
    %1667 = vmatpush1.msra.mxu0 %v717
    %1668 = vmatprep.subr.mxu0 %v724
    %1669 = vmatpush1.msra.mxu0 %v723
    %1670 = vmatprep.subr.mxu0 %v730
    %1671 = vmatpush1.msra.mxu0 %v729
    %1672 = vmatprep.subr.mxu0 %v736
    %1673 = vmatpush1.msra.mxu0 %v735
    %1674 = vmatprep.subr.mxu0 %v742
    %1675 = vmatpush1.msra.mxu0 %v741
    %1676 = vmatprep.subr.mxu0 %v748
    %1677 = vmatpush1.msra.mxu0 %v747
    %1678 = vmatprep.subr.mxu0 %v754
    %1679 = vmatpush1.msra.mxu0 %v753
    %1680 = vmatprep.subr.mxu0 %v760
    %1681 = vmatpush1.msra.mxu0 %v759
    %1682 = vmatprep.subr.mxu0 %v766
    %1683 = vmatpush1.msra.mxu0 %v765
    %1684 = vmatprep.subr.mxu0 %v772
    %1685 = vmatpush1.msra.mxu0 %v771
    %1686 = vmatprep.subr.mxu0 %v778
    %1687 = vmatpush1.msra.mxu0 %v777
    %1688 = vmatprep.subr.mxu0 %v784
    %1689 = vmatpush1.msra.mxu0 %v783
    %1690 = vmatprep.subr.mxu0 %v790
    %1691 = vmatpush1.msra.mxu0 %v789
    %1692 = vmatprep.subr.mxu0 %v796
    %1693 = vmatpush1.msra.mxu0 %v795
    %1694 = vmatprep.subr.mxu0 %v802
    %1695 = vmatpush1.msra.mxu0 %v801
    %1696 = vmatprep.subr.mxu0 %v808
    %1697 = vmatpush1.msra.mxu0 %v807
    %1698 = vmatprep.subr.mxu0 %v814
    %1699 = vmatpush1.msra.mxu0 %v813
    %1700 = vmatprep.subr.mxu0 %v820
    %1701 = vmatpush1.msra.mxu0 %v819
    %1702 = vmatprep.subr.mxu0 %v826
    %1703 = vmatpush1.msra.mxu0 %v825
    %1704 = vmatprep.subr.mxu0 %v832
    %1705 = vmatpush1.msra.mxu0 %v831
    %1706 = vmatprep.subr.mxu0 %v838
    %1707 = vmatpush1.msra.mxu0 %v837
    %1708 = vmatprep.subr.mxu0 %v844
    %1709 = vmatpush1.msra.mxu0 %v843
    %1710 = vmatprep.subr.mxu0 %v850
    %1711 = vmatpush1.msra.mxu0 %v849
    %1712 = vmatprep.subr.mxu0 %v856
    %1713 = vmatpush1.msra.mxu0 %v855
    %1714 = vmatprep.subr.mxu0 %v862
    %1715 = vmatpush1.msra.mxu0 %v861
    %1716 = vmatprep.subr.mxu0 %v868
    %1717 = vmatpush1.msra.mxu0 %v867
    %1718 = vmatprep.subr.mxu0 %v874
    %1719 = vmatpush1.msra.mxu0 %v873
    %1720 = vmatprep.mubr.f32.mxu0 %v106
    %1721 = vmatmul.mubr.f32.gmra.mrb[0].mxu0 %v105
    %v1722 = vpop.f32.mrb[0].mxu0
    %v1723 = vadd.f32 %v1652, %v1722
    %v1724 = vpop.f32.mrb[0].mxu0
    %v1725 = vadd.f32 %v1654, %v1724
    %1726 = vdwg.mxu0
    %v1727 = vadd.f32 %v93, %v1155
    %v1728 = vadd.f32 %v94, %v1157
    %v1729 = vadd.f32 %v95, %v1439
    %v1730 = vadd.f32 %v96, %v1441
    %v1731 = vadd.f32 %v97, %v1723
    %v1732 = vadd.f32 %v98, %v1725
    %1733 = vst [vmem:[#allocation2] sm:$0xff] %v1727
    %1734 = vst [vmem:[#allocation2 + $0x8] sm:$0xff] %v1728
    %1735 = vst [vmem:[#allocation2 + $0x10] sm:$0xff] %v1729
    %1736 = vst [vmem:[#allocation2 + $0x18] sm:$0xff] %v1730
    %1737 = vst [vmem:[#allocation2 + $0x20] sm:$0xff] %v1731
    %1738 = vst [vmem:[#allocation2 + $0x28] sm:$0xff] %v1732
    // Predicated region
    $region46: #{tpu_custom_call.1} parent=1 // pred_check
      %p1739 = pneg %p83
    $region47: #{tpu_custom_call.1} parent=1 // pred_check_branch
      %1741 = sbr.rel (%p1739) target = $region49
    $region48: #{tpu_custom_call.1} parent=1 // pred_region
      %v1742 = vld [vmem:[#allocation2] sm:$0xff]
      %v1743 = vld [vmem:[#allocation2 + $0x8] sm:$0xff]
      %v1744 = vld [vmem:[#allocation2 + $0x10] sm:$0xff]
      %v1745 = vld [vmem:[#allocation2 + $0x18] sm:$0xff]
      %v1746 = vld [vmem:[#allocation2 + $0x20] sm:$0xff]
      %v1747 = vld [vmem:[#allocation2 + $0x28] sm:$0xff]
      %v1748 = vld [vmem:[#allocation8] sm:$0x3f]
      %v1750 = vlaneseq
      %v1751 = vshrl.u32 %v1750, 7
      %v1752 = vsub.s32 0, %v1751
      %v1753 = vrot.slane %v1748, %v1752
      %v1754 = vlaneseq
      %v1755 = vshrl.u32 %v1754, 7
      %v1756 = vsub.s32 1, %v1755
      %v1757 = vrot.slane %v1748, %v1756
      %v1758 = vlaneseq
      %v1759 = vshrl.u32 %v1758, 7
      %v1760 = vsub.s32 2, %v1759
      %v1761 = vrot.slane %v1748, %v1760
      %v1762 = vlaneseq
      %v1763 = vshrl.u32 %v1762, 7
      %v1764 = vsub.s32 3, %v1763
      %v1765 = vrot.slane %v1748, %v1764
      %v1766 = vlaneseq
      %v1767 = vshrl.u32 %v1766, 7
      %v1768 = vsub.s32 4, %v1767
      %v1769 = vrot.slane %v1748, %v1768
      %v1770 = vlaneseq
      %v1771 = vshrl.u32 %v1770, 7
      %v1772 = vsub.s32 5, %v1771
      %v1773 = vrot.slane %v1748, %v1772
      %v1780 = vadd.f32 %v1742, %v1753
      %v1781 = vadd.f32 %v1743, %v1757
      %v1782 = vadd.f32 %v1744, %v1761
      %v1783 = vadd.f32 %v1745, %v1765
      %v1784 = vadd.f32 %v1746, %v1769
      %v1785 = vadd.f32 %v1747, %v1773
      %v1786 = vmax.f32 %v1780, 0.0
      %v1787 = vmax.f32 %v1781, 0.0
      %v1788 = vmax.f32 %v1782, 0.0
      %v1789 = vmax.f32 %v1783, 0.0
      %v1790 = vmax.f32 %v1784, 0.0
      %v1791 = vmax.f32 %v1785, 0.0
      %v1792 = vld [vmem:[#allocation9] sm:$0xff]
      %v1793 = vld [vmem:[#allocation9 + $0x8] sm:$0xff]
      %v1794 = vld [vmem:[#allocation9 + $0x10] sm:$0xff]
      %v1795 = vld [vmem:[#allocation9 + $0x18] sm:$0xff]
      %v1796 = vld [vmem:[#allocation9 + $0x20] sm:$0xff]
      %v1797 = vld [vmem:[#allocation9 + $0x28] sm:$0xff]
      %v1798 = vld [vmem:[#allocation9 + $0x30] sm:$0xff]
      %v1799 = vld [vmem:[#allocation9 + $0x38] sm:$0xff]
      %v1800 = vld [vmem:[#allocation9 + $0x40] sm:$0xff]
      %v1801 = vld [vmem:[#allocation9 + $0x48] sm:$0xff]
      %v1802 = vld [vmem:[#allocation9 + $0x50] sm:$0xff]
      %v1803 = vld [vmem:[#allocation9 + $0x58] sm:$0xff]
      %v1804 = vld [vmem:[#allocation9 + $0x60] sm:$0xff]
      %v1805 = vld [vmem:[#allocation9 + $0x68] sm:$0xff]
      %v1806 = vld [vmem:[#allocation9 + $0x70] sm:$0xff]
      %v1807 = vld [vmem:[#allocation9 + $0x78] sm:$0xff]
      %v1808 = vld [vmem:[#allocation9 + $0x80] sm:$0xff]
      %v1809 = vld [vmem:[#allocation9 + $0x88] sm:$0xff]
      %v1810 = vld [vmem:[#allocation9 + $0x90] sm:$0xff]
      %v1811 = vld [vmem:[#allocation9 + $0x98] sm:$0xff]
      %v1812 = vld [vmem:[#allocation9 + $0xa0] sm:$0xff]
      %v1813 = vld [vmem:[#allocation9 + $0xa8] sm:$0xff]
      %v1814 = vld [vmem:[#allocation9 + $0xb0] sm:$0xff]
      %v1815 = vld [vmem:[#allocation9 + $0xb8] sm:$0xff]
      %v1816 = vld [vmem:[#allocation9 + $0xc0] sm:$0xff]
      %v1817 = vld [vmem:[#allocation9 + $0xc8] sm:$0xff]
      %v1818 = vld [vmem:[#allocation9 + $0xd0] sm:$0xff]
      %v1819 = vld [vmem:[#allocation9 + $0xd8] sm:$0xff]
      %v1820 = vld [vmem:[#allocation9 + $0xe0] sm:$0xff]
      %v1821 = vld [vmem:[#allocation9 + $0xe8] sm:$0xff]
      %v1822 = vld [vmem:[#allocation9 + $0xf0] sm:$0xff]
      %v1823 = vld [vmem:[#allocation9 + $0xf8] sm:$0xff]
      %v1824 = vld [vmem:[#allocation9 + $0x100] sm:$0xff]
      %v1825 = vld [vmem:[#allocation9 + $0x108] sm:$0xff]
      %v1826 = vld [vmem:[#allocation9 + $0x110] sm:$0xff]
      %v1827 = vld [vmem:[#allocation9 + $0x118] sm:$0xff]
      %v1828 = vld [vmem:[#allocation9 + $0x120] sm:$0xff]
      %v1829 = vld [vmem:[#allocation9 + $0x128] sm:$0xff]
      %v1830 = vld [vmem:[#allocation9 + $0x130] sm:$0xff]
      %v1831 = vld [vmem:[#allocation9 + $0x138] sm:$0xff]
      %v1832 = vld [vmem:[#allocation9 + $0x140] sm:$0xff]
      %v1833 = vld [vmem:[#allocation9 + $0x148] sm:$0xff]
      %v1834 = vld [vmem:[#allocation9 + $0x150] sm:$0xff]
      %v1835 = vld [vmem:[#allocation9 + $0x158] sm:$0xff]
      %v1836 = vld [vmem:[#allocation9 + $0x160] sm:$0xff]
      %v1837 = vld [vmem:[#allocation9 + $0x168] sm:$0xff]
      %v1838 = vld [vmem:[#allocation9 + $0x170] sm:$0xff]
      %v1839 = vld [vmem:[#allocation9 + $0x178] sm:$0xff]
      %v1840 = vld [vmem:[#allocation9 + $0x180] sm:$0xff]
      %v1841 = vld [vmem:[#allocation9 + $0x188] sm:$0xff]
      %v1842 = vld [vmem:[#allocation9 + $0x190] sm:$0xff]
      %v1843 = vld [vmem:[#allocation9 + $0x198] sm:$0xff]
      %v1844 = vld [vmem:[#allocation9 + $0x1a0] sm:$0xff]
      %v1845 = vld [vmem:[#allocation9 + $0x1a8] sm:$0xff]
      %v1846 = vld [vmem:[#allocation9 + $0x1b0] sm:$0xff]
      %v1847 = vld [vmem:[#allocation9 + $0x1b8] sm:$0xff]
      %v1848 = vld [vmem:[#allocation9 + $0x1c0] sm:$0xff]
      %v1849 = vld [vmem:[#allocation9 + $0x1c8] sm:$0xff]
      %v1850 = vld [vmem:[#allocation9 + $0x1d0] sm:$0xff]
      %v1851 = vld [vmem:[#allocation9 + $0x1d8] sm:$0xff]
      %v1852 = vld [vmem:[#allocation9 + $0x1e0] sm:$0xff]
      %v1853 = vld [vmem:[#allocation9 + $0x1e8] sm:$0xff]
      %v1854 = vld [vmem:[#allocation9 + $0x1f0] sm:$0xff]
      %v1855 = vld [vmem:[#allocation9 + $0x1f8] sm:$0xff]
      %v1856 = vld [vmem:[#allocation9 + $0x200] sm:$0xff]
      %v1857 = vld [vmem:[#allocation9 + $0x208] sm:$0xff]
      %v1858 = vld [vmem:[#allocation9 + $0x210] sm:$0xff]
      %v1859 = vld [vmem:[#allocation9 + $0x218] sm:$0xff]
      %v1860 = vld [vmem:[#allocation9 + $0x220] sm:$0xff]
      %v1861 = vld [vmem:[#allocation9 + $0x228] sm:$0xff]
      %v1862 = vld [vmem:[#allocation9 + $0x230] sm:$0xff]
      %v1863 = vld [vmem:[#allocation9 + $0x238] sm:$0xff]
      %v1864 = vld [vmem:[#allocation9 + $0x240] sm:$0xff]
      %v1865 = vld [vmem:[#allocation9 + $0x248] sm:$0xff]
      %v1866 = vld [vmem:[#allocation9 + $0x250] sm:$0xff]
      %v1867 = vld [vmem:[#allocation9 + $0x258] sm:$0xff]
      %v1868 = vld [vmem:[#allocation9 + $0x260] sm:$0xff]
      %v1869 = vld [vmem:[#allocation9 + $0x268] sm:$0xff]
      %v1870 = vld [vmem:[#allocation9 + $0x270] sm:$0xff]
      %v1871 = vld [vmem:[#allocation9 + $0x278] sm:$0xff]
      %v1872 = vld [vmem:[#allocation9 + $0x280] sm:$0xff]
      %v1873 = vld [vmem:[#allocation9 + $0x288] sm:$0xff]
      %v1874 = vld [vmem:[#allocation9 + $0x290] sm:$0xff]
      %v1875 = vld [vmem:[#allocation9 + $0x298] sm:$0xff]
      %v1876 = vld [vmem:[#allocation9 + $0x2a0] sm:$0xff]
      %v1877 = vld [vmem:[#allocation9 + $0x2a8] sm:$0xff]
      %v1878 = vld [vmem:[#allocation9 + $0x2b0] sm:$0xff]
      %v1879 = vld [vmem:[#allocation9 + $0x2b8] sm:$0xff]
      %v1880 = vld [vmem:[#allocation9 + $0x2c0] sm:$0xff]
      %v1881 = vld [vmem:[#allocation9 + $0x2c8] sm:$0xff]
      %v1882 = vld [vmem:[#allocation9 + $0x2d0] sm:$0xff]
      %v1883 = vld [vmem:[#allocation9 + $0x2d8] sm:$0xff]
      %v1884 = vld [vmem:[#allocation9 + $0x2e0] sm:$0xff]
      %v1885 = vld [vmem:[#allocation9 + $0x2e8] sm:$0xff]
      %v1886 = vld [vmem:[#allocation9 + $0x2f0] sm:$0xff]
      %v1887 = vld [vmem:[#allocation9 + $0x2f8] sm:$0xff]
      %v1888 = vld [vmem:[#allocation9 + $0x300] sm:$0xff]
      %v1889 = vld [vmem:[#allocation9 + $0x308] sm:$0xff]
      %v1890 = vld [vmem:[#allocation9 + $0x310] sm:$0xff]
      %v1891 = vld [vmem:[#allocation9 + $0x318] sm:$0xff]
      %v1892 = vld [vmem:[#allocation9 + $0x320] sm:$0xff]
      %v1893 = vld [vmem:[#allocation9 + $0x328] sm:$0xff]
      %v1894 = vld [vmem:[#allocation9 + $0x330] sm:$0xff]
      %v1895 = vld [vmem:[#allocation9 + $0x338] sm:$0xff]
      %v1896 = vld [vmem:[#allocation9 + $0x340] sm:$0xff]
      %v1897 = vld [vmem:[#allocation9 + $0x348] sm:$0xff]
      %v1898 = vld [vmem:[#allocation9 + $0x350] sm:$0xff]
      %v1899 = vld [vmem:[#allocation9 + $0x358] sm:$0xff]
      %v1900 = vld [vmem:[#allocation9 + $0x360] sm:$0xff]
      %v1901 = vld [vmem:[#allocation9 + $0x368] sm:$0xff]
      %v1902 = vld [vmem:[#allocation9 + $0x370] sm:$0xff]
      %v1903 = vld [vmem:[#allocation9 + $0x378] sm:$0xff]
      %v1904 = vld [vmem:[#allocation9 + $0x380] sm:$0xff]
      %v1905 = vld [vmem:[#allocation9 + $0x388] sm:$0xff]
      %v1906 = vld [vmem:[#allocation9 + $0x390] sm:$0xff]
      %v1907 = vld [vmem:[#allocation9 + $0x398] sm:$0xff]
      %v1908 = vld [vmem:[#allocation9 + $0x3a0] sm:$0xff]
      %v1909 = vld [vmem:[#allocation9 + $0x3a8] sm:$0xff]
      %v1910 = vld [vmem:[#allocation9 + $0x3b0] sm:$0xff]
      %v1911 = vld [vmem:[#allocation9 + $0x3b8] sm:$0xff]
      %v1912 = vld [vmem:[#allocation9 + $0x3c0] sm:$0xff]
      %v1913 = vld [vmem:[#allocation9 + $0x3c8] sm:$0xff]
      %v1914 = vld [vmem:[#allocation9 + $0x3d0] sm:$0xff]
      %v1915 = vld [vmem:[#allocation9 + $0x3d8] sm:$0xff]
      %v1916 = vld [vmem:[#allocation9 + $0x3e0] sm:$0xff]
      %v1917 = vld [vmem:[#allocation9 + $0x3e8] sm:$0xff]
      %v1918 = vld [vmem:[#allocation9 + $0x3f0] sm:$0xff]
      %v1919 = vld [vmem:[#allocation9 + $0x3f8] sm:$0xff]
      %v1920 = vld [vmem:[#allocation9 + $0x400] sm:$0xff]
      %v1921 = vld [vmem:[#allocation9 + $0x408] sm:$0xff]
      %v1922 = vld [vmem:[#allocation9 + $0x410] sm:$0xff]
      %v1923 = vld [vmem:[#allocation9 + $0x418] sm:$0xff]
      %v1924 = vld [vmem:[#allocation9 + $0x420] sm:$0xff]
      %v1925 = vld [vmem:[#allocation9 + $0x428] sm:$0xff]
      %v1926 = vld [vmem:[#allocation9 + $0x430] sm:$0xff]
      %v1927 = vld [vmem:[#allocation9 + $0x438] sm:$0xff]
      %v1928 = vld [vmem:[#allocation9 + $0x440] sm:$0xff]
      %v1929 = vld [vmem:[#allocation9 + $0x448] sm:$0xff]
      %v1930 = vld [vmem:[#allocation9 + $0x450] sm:$0xff]
      %v1931 = vld [vmem:[#allocation9 + $0x458] sm:$0xff]
      %v1932 = vld [vmem:[#allocation9 + $0x460] sm:$0xff]
      %v1933 = vld [vmem:[#allocation9 + $0x468] sm:$0xff]
      %v1934 = vld [vmem:[#allocation9 + $0x470] sm:$0xff]
      %v1935 = vld [vmem:[#allocation9 + $0x478] sm:$0xff]
      %v1936 = vld [vmem:[#allocation9 + $0x480] sm:$0xff]
      %v1937 = vld [vmem:[#allocation9 + $0x488] sm:$0xff]
      %v1938 = vld [vmem:[#allocation9 + $0x490] sm:$0xff]
      %v1939 = vld [vmem:[#allocation9 + $0x498] sm:$0xff]
      %v1940 = vld [vmem:[#allocation9 + $0x4a0] sm:$0xff]
      %v1941 = vld [vmem:[#allocation9 + $0x4a8] sm:$0xff]
      %v1942 = vld [vmem:[#allocation9 + $0x4b0] sm:$0xff]
      %v1943 = vld [vmem:[#allocation9 + $0x4b8] sm:$0xff]
      %v1944 = vld [vmem:[#allocation9 + $0x4c0] sm:$0xff]
      %v1945 = vld [vmem:[#allocation9 + $0x4c8] sm:$0xff]
      %v1946 = vld [vmem:[#allocation9 + $0x4d0] sm:$0xff]
      %v1947 = vld [vmem:[#allocation9 + $0x4d8] sm:$0xff]
      %v1948 = vld [vmem:[#allocation9 + $0x4e0] sm:$0xff]
      %v1949 = vld [vmem:[#allocation9 + $0x4e8] sm:$0xff]
      %v1950 = vld [vmem:[#allocation9 + $0x4f0] sm:$0xff]
      %v1951 = vld [vmem:[#allocation9 + $0x4f8] sm:$0xff]
      %v1952 = vld [vmem:[#allocation9 + $0x500] sm:$0xff]
      %v1953 = vld [vmem:[#allocation9 + $0x508] sm:$0xff]
      %v1954 = vld [vmem:[#allocation9 + $0x510] sm:$0xff]
      %v1955 = vld [vmem:[#allocation9 + $0x518] sm:$0xff]
      %v1956 = vld [vmem:[#allocation9 + $0x520] sm:$0xff]
      %v1957 = vld [vmem:[#allocation9 + $0x528] sm:$0xff]
      %v1958 = vld [vmem:[#allocation9 + $0x530] sm:$0xff]
      %v1959 = vld [vmem:[#allocation9 + $0x538] sm:$0xff]
      %v1960 = vld [vmem:[#allocation9 + $0x540] sm:$0xff]
      %v1961 = vld [vmem:[#allocation9 + $0x548] sm:$0xff]
      %v1962 = vld [vmem:[#allocation9 + $0x550] sm:$0xff]
      %v1963 = vld [vmem:[#allocation9 + $0x558] sm:$0xff]
      %v1964 = vld [vmem:[#allocation9 + $0x560] sm:$0xff]
      %v1965 = vld [vmem:[#allocation9 + $0x568] sm:$0xff]
      %v1966 = vld [vmem:[#allocation9 + $0x570] sm:$0xff]
      %v1967 = vld [vmem:[#allocation9 + $0x578] sm:$0xff]
      %v1968 = vld [vmem:[#allocation9 + $0x580] sm:$0xff]
      %v1969 = vld [vmem:[#allocation9 + $0x588] sm:$0xff]
      %v1970 = vld [vmem:[#allocation9 + $0x590] sm:$0xff]
      %v1971 = vld [vmem:[#allocation9 + $0x598] sm:$0xff]
      %v1972 = vld [vmem:[#allocation9 + $0x5a0] sm:$0xff]
      %v1973 = vld [vmem:[#allocation9 + $0x5a8] sm:$0xff]
      %v1974 = vld [vmem:[#allocation9 + $0x5b0] sm:$0xff]
      %v1975 = vld [vmem:[#allocation9 + $0x5b8] sm:$0xff]
      %v1976 = vld [vmem:[#allocation9 + $0x5c0] sm:$0xff]
      %v1977 = vld [vmem:[#allocation9 + $0x5c8] sm:$0xff]
      %v1978 = vld [vmem:[#allocation9 + $0x5d0] sm:$0xff]
      %v1979 = vld [vmem:[#allocation9 + $0x5d8] sm:$0xff]
      %v1980 = vld [vmem:[#allocation9 + $0x5e0] sm:$0xff]
      %v1981 = vld [vmem:[#allocation9 + $0x5e8] sm:$0xff]
      %v1982 = vld [vmem:[#allocation9 + $0x5f0] sm:$0xff]
      %v1983 = vld [vmem:[#allocation9 + $0x5f8] sm:$0xff]
      %v1984 = vld [vmem:[#allocation9 + $0x600] sm:$0xff]
      %v1985 = vld [vmem:[#allocation9 + $0x608] sm:$0xff]
      %v1986 = vld [vmem:[#allocation9 + $0x610] sm:$0xff]
      %v1987 = vld [vmem:[#allocation9 + $0x618] sm:$0xff]
      %v1988 = vld [vmem:[#allocation9 + $0x620] sm:$0xff]
      %v1989 = vld [vmem:[#allocation9 + $0x628] sm:$0xff]
      %v1990 = vld [vmem:[#allocation9 + $0x630] sm:$0xff]
      %v1991 = vld [vmem:[#allocation9 + $0x638] sm:$0xff]
      %v1992 = vld [vmem:[#allocation9 + $0x640] sm:$0xff]
      %v1993 = vld [vmem:[#allocation9 + $0x648] sm:$0xff]
      %v1994 = vld [vmem:[#allocation9 + $0x650] sm:$0xff]
      %v1995 = vld [vmem:[#allocation9 + $0x658] sm:$0xff]
      %v1996 = vld [vmem:[#allocation9 + $0x660] sm:$0xff]
      %v1997 = vld [vmem:[#allocation9 + $0x668] sm:$0xff]
      %v1998 = vld [vmem:[#allocation9 + $0x670] sm:$0xff]
      %v1999 = vld [vmem:[#allocation9 + $0x678] sm:$0xff]
      %v2000 = vld [vmem:[#allocation9 + $0x680] sm:$0xff]
      %v2001 = vld [vmem:[#allocation9 + $0x688] sm:$0xff]
      %v2002 = vld [vmem:[#allocation9 + $0x690] sm:$0xff]
      %v2003 = vld [vmem:[#allocation9 + $0x698] sm:$0xff]
      %v2004 = vld [vmem:[#allocation9 + $0x6a0] sm:$0xff]
      %v2005 = vld [vmem:[#allocation9 + $0x6a8] sm:$0xff]
      %v2006 = vld [vmem:[#allocation9 + $0x6b0] sm:$0xff]
      %v2007 = vld [vmem:[#allocation9 + $0x6b8] sm:$0xff]
      %v2008 = vld [vmem:[#allocation9 + $0x6c0] sm:$0xff]
      %v2009 = vld [vmem:[#allocation9 + $0x6c8] sm:$0xff]
      %v2010 = vld [vmem:[#allocation9 + $0x6d0] sm:$0xff]
      %v2011 = vld [vmem:[#allocation9 + $0x6d8] sm:$0xff]
      %v2012 = vld [vmem:[#allocation9 + $0x6e0] sm:$0xff]
      %v2013 = vld [vmem:[#allocation9 + $0x6e8] sm:$0xff]
      %v2014 = vld [vmem:[#allocation9 + $0x6f0] sm:$0xff]
      %v2015 = vld [vmem:[#allocation9 + $0x6f8] sm:$0xff]
      %v2016 = vld [vmem:[#allocation9 + $0x700] sm:$0xff]
      %v2017 = vld [vmem:[#allocation9 + $0x708] sm:$0xff]
      %v2018 = vld [vmem:[#allocation9 + $0x710] sm:$0xff]
      %v2019 = vld [vmem:[#allocation9 + $0x718] sm:$0xff]
      %v2020 = vld [vmem:[#allocation9 + $0x720] sm:$0xff]
      %v2021 = vld [vmem:[#allocation9 + $0x728] sm:$0xff]
      %v2022 = vld [vmem:[#allocation9 + $0x730] sm:$0xff]
      %v2023 = vld [vmem:[#allocation9 + $0x738] sm:$0xff]
      %v2024 = vld [vmem:[#allocation9 + $0x740] sm:$0xff]
      %v2025 = vld [vmem:[#allocation9 + $0x748] sm:$0xff]
      %v2026 = vld [vmem:[#allocation9 + $0x750] sm:$0xff]
      %v2027 = vld [vmem:[#allocation9 + $0x758] sm:$0xff]
      %v2028 = vld [vmem:[#allocation9 + $0x760] sm:$0xff]
      %v2029 = vld [vmem:[#allocation9 + $0x768] sm:$0xff]
      %v2030 = vld [vmem:[#allocation9 + $0x770] sm:$0xff]
      %v2031 = vld [vmem:[#allocation9 + $0x778] sm:$0xff]
      %v2032 = vld [vmem:[#allocation9 + $0x780] sm:$0xff]
      %v2033 = vld [vmem:[#allocation9 + $0x788] sm:$0xff]
      %v2034 = vld [vmem:[#allocation9 + $0x790] sm:$0xff]
      %v2035 = vld [vmem:[#allocation9 + $0x798] sm:$0xff]
      %v2036 = vld [vmem:[#allocation9 + $0x7a0] sm:$0xff]
      %v2037 = vld [vmem:[#allocation9 + $0x7a8] sm:$0xff]
      %v2038 = vld [vmem:[#allocation9 + $0x7b0] sm:$0xff]
      %v2039 = vld [vmem:[#allocation9 + $0x7b8] sm:$0xff]
      %v2040 = vld [vmem:[#allocation9 + $0x7c0] sm:$0xff]
      %v2041 = vld [vmem:[#allocation9 + $0x7c8] sm:$0xff]
      %v2042 = vld [vmem:[#allocation9 + $0x7d0] sm:$0xff]
      %v2043 = vld [vmem:[#allocation9 + $0x7d8] sm:$0xff]
      %v2044 = vld [vmem:[#allocation9 + $0x7e0] sm:$0xff]
      %v2045 = vld [vmem:[#allocation9 + $0x7e8] sm:$0xff]
      %v2046 = vld [vmem:[#allocation9 + $0x7f0] sm:$0xff]
      %v2047 = vld [vmem:[#allocation9 + $0x7f8] sm:$0xff]
      %v2048 = vld [vmem:[#allocation9 + $0x800] sm:$0xff]
      %v2049 = vld [vmem:[#allocation9 + $0x808] sm:$0xff]
      %v2050 = vld [vmem:[#allocation9 + $0x810] sm:$0xff]
      %v2051 = vld [vmem:[#allocation9 + $0x818] sm:$0xff]
      %v2052 = vld [vmem:[#allocation9 + $0x820] sm:$0xff]
      %v2053 = vld [vmem:[#allocation9 + $0x828] sm:$0xff]
      %v2054 = vld [vmem:[#allocation9 + $0x830] sm:$0xff]
      %v2055 = vld [vmem:[#allocation9 + $0x838] sm:$0xff]
      %v2056 = vld [vmem:[#allocation9 + $0x840] sm:$0xff]
      %v2057 = vld [vmem:[#allocation9 + $0x848] sm:$0xff]
      %v2058 = vld [vmem:[#allocation9 + $0x850] sm:$0xff]
      %v2059 = vld [vmem:[#allocation9 + $0x858] sm:$0xff]
      %v2060 = vld [vmem:[#allocation9 + $0x860] sm:$0xff]
      %v2061 = vld [vmem:[#allocation9 + $0x868] sm:$0xff]
      %v2062 = vld [vmem:[#allocation9 + $0x870] sm:$0xff]
      %v2063 = vld [vmem:[#allocation9 + $0x878] sm:$0xff]
      %v2064 = vld [vmem:[#allocation9 + $0x880] sm:$0xff]
      %v2065 = vld [vmem:[#allocation9 + $0x888] sm:$0xff]
      %v2066 = vld [vmem:[#allocation9 + $0x890] sm:$0xff]
      %v2067 = vld [vmem:[#allocation9 + $0x898] sm:$0xff]
      %v2068 = vld [vmem:[#allocation9 + $0x8a0] sm:$0xff]
      %v2069 = vld [vmem:[#allocation9 + $0x8a8] sm:$0xff]
      %v2070 = vld [vmem:[#allocation9 + $0x8b0] sm:$0xff]
      %v2071 = vld [vmem:[#allocation9 + $0x8b8] sm:$0xff]
      %v2072 = vld [vmem:[#allocation9 + $0x8c0] sm:$0xff]
      %v2073 = vld [vmem:[#allocation9 + $0x8c8] sm:$0xff]
      %v2074 = vld [vmem:[#allocation9 + $0x8d0] sm:$0xff]
      %v2075 = vld [vmem:[#allocation9 + $0x8d8] sm:$0xff]
      %v2076 = vld [vmem:[#allocation9 + $0x8e0] sm:$0xff]
      %v2077 = vld [vmem:[#allocation9 + $0x8e8] sm:$0xff]
      %v2078 = vld [vmem:[#allocation9 + $0x8f0] sm:$0xff]
      %v2079 = vld [vmem:[#allocation9 + $0x8f8] sm:$0xff]
      %v2080 = vld [vmem:[#allocation9 + $0x900] sm:$0xff]
      %v2081 = vld [vmem:[#allocation9 + $0x908] sm:$0xff]
      %v2082 = vld [vmem:[#allocation9 + $0x910] sm:$0xff]
      %v2083 = vld [vmem:[#allocation9 + $0x918] sm:$0xff]
      %v2084 = vld [vmem:[#allocation9 + $0x920] sm:$0xff]
      %v2085 = vld [vmem:[#allocation9 + $0x928] sm:$0xff]
      %v2086 = vld [vmem:[#allocation9 + $0x930] sm:$0xff]
      %v2087 = vld [vmem:[#allocation9 + $0x938] sm:$0xff]
      %v2088 = vld [vmem:[#allocation9 + $0x940] sm:$0xff]
      %v2089 = vld [vmem:[#allocation9 + $0x948] sm:$0xff]
      %v2090 = vld [vmem:[#allocation9 + $0x950] sm:$0xff]
      %v2091 = vld [vmem:[#allocation9 + $0x958] sm:$0xff]
      %v2092 = vld [vmem:[#allocation9 + $0x960] sm:$0xff]
      %v2093 = vld [vmem:[#allocation9 + $0x968] sm:$0xff]
      %v2094 = vld [vmem:[#allocation9 + $0x970] sm:$0xff]
      %v2095 = vld [vmem:[#allocation9 + $0x978] sm:$0xff]
      %v2096 = vld [vmem:[#allocation9 + $0x980] sm:$0xff]
      %v2097 = vld [vmem:[#allocation9 + $0x988] sm:$0xff]
      %v2098 = vld [vmem:[#allocation9 + $0x990] sm:$0xff]
      %v2099 = vld [vmem:[#allocation9 + $0x998] sm:$0xff]
      %v2100 = vld [vmem:[#allocation9 + $0x9a0] sm:$0xff]
      %v2101 = vld [vmem:[#allocation9 + $0x9a8] sm:$0xff]
      %v2102 = vld [vmem:[#allocation9 + $0x9b0] sm:$0xff]
      %v2103 = vld [vmem:[#allocation9 + $0x9b8] sm:$0xff]
      %v2104 = vld [vmem:[#allocation9 + $0x9c0] sm:$0xff]
      %v2105 = vld [vmem:[#allocation9 + $0x9c8] sm:$0xff]
      %v2106 = vld [vmem:[#allocation9 + $0x9d0] sm:$0xff]
      %v2107 = vld [vmem:[#allocation9 + $0x9d8] sm:$0xff]
      %v2108 = vld [vmem:[#allocation9 + $0x9e0] sm:$0xff]
      %v2109 = vld [vmem:[#allocation9 + $0x9e8] sm:$0xff]
      %v2110 = vld [vmem:[#allocation9 + $0x9f0] sm:$0xff]
      %v2111 = vld [vmem:[#allocation9 + $0x9f8] sm:$0xff]
      %v2112 = vld [vmem:[#allocation9 + $0xa00] sm:$0xff]
      %v2113 = vld [vmem:[#allocation9 + $0xa08] sm:$0xff]
      %v2114 = vld [vmem:[#allocation9 + $0xa10] sm:$0xff]
      %v2115 = vld [vmem:[#allocation9 + $0xa18] sm:$0xff]
      %v2116 = vld [vmem:[#allocation9 + $0xa20] sm:$0xff]
      %v2117 = vld [vmem:[#allocation9 + $0xa28] sm:$0xff]
      %v2118 = vld [vmem:[#allocation9 + $0xa30] sm:$0xff]
      %v2119 = vld [vmem:[#allocation9 + $0xa38] sm:$0xff]
      %v2120 = vld [vmem:[#allocation9 + $0xa40] sm:$0xff]
      %v2121 = vld [vmem:[#allocation9 + $0xa48] sm:$0xff]
      %v2122 = vld [vmem:[#allocation9 + $0xa50] sm:$0xff]
      %v2123 = vld [vmem:[#allocation9 + $0xa58] sm:$0xff]
      %v2124 = vld [vmem:[#allocation9 + $0xa60] sm:$0xff]
      %v2125 = vld [vmem:[#allocation9 + $0xa68] sm:$0xff]
      %v2126 = vld [vmem:[#allocation9 + $0xa70] sm:$0xff]
      %v2127 = vld [vmem:[#allocation9 + $0xa78] sm:$0xff]
      %v2128 = vld [vmem:[#allocation9 + $0xa80] sm:$0xff]
      %v2129 = vld [vmem:[#allocation9 + $0xa88] sm:$0xff]
      %v2130 = vld [vmem:[#allocation9 + $0xa90] sm:$0xff]
      %v2131 = vld [vmem:[#allocation9 + $0xa98] sm:$0xff]
      %v2132 = vld [vmem:[#allocation9 + $0xaa0] sm:$0xff]
      %v2133 = vld [vmem:[#allocation9 + $0xaa8] sm:$0xff]
      %v2134 = vld [vmem:[#allocation9 + $0xab0] sm:$0xff]
      %v2135 = vld [vmem:[#allocation9 + $0xab8] sm:$0xff]
      %v2136 = vld [vmem:[#allocation9 + $0xac0] sm:$0xff]
      %v2137 = vld [vmem:[#allocation9 + $0xac8] sm:$0xff]
      %v2138 = vld [vmem:[#allocation9 + $0xad0] sm:$0xff]
      %v2139 = vld [vmem:[#allocation9 + $0xad8] sm:$0xff]
      %v2140 = vld [vmem:[#allocation9 + $0xae0] sm:$0xff]
      %v2141 = vld [vmem:[#allocation9 + $0xae8] sm:$0xff]
      %v2142 = vld [vmem:[#allocation9 + $0xaf0] sm:$0xff]
      %v2143 = vld [vmem:[#allocation9 + $0xaf8] sm:$0xff]
      %v2144 = vld [vmem:[#allocation9 + $0xb00] sm:$0xff]
      %v2145 = vld [vmem:[#allocation9 + $0xb08] sm:$0xff]
      %v2146 = vld [vmem:[#allocation9 + $0xb10] sm:$0xff]
      %v2147 = vld [vmem:[#allocation9 + $0xb18] sm:$0xff]
      %v2148 = vld [vmem:[#allocation9 + $0xb20] sm:$0xff]
      %v2149 = vld [vmem:[#allocation9 + $0xb28] sm:$0xff]
      %v2150 = vld [vmem:[#allocation9 + $0xb30] sm:$0xff]
      %v2151 = vld [vmem:[#allocation9 + $0xb38] sm:$0xff]
      %v2152 = vld [vmem:[#allocation9 + $0xb40] sm:$0xff]
      %v2153 = vld [vmem:[#allocation9 + $0xb48] sm:$0xff]
      %v2154 = vld [vmem:[#allocation9 + $0xb50] sm:$0xff]
      %v2155 = vld [vmem:[#allocation9 + $0xb58] sm:$0xff]
      %v2156 = vld [vmem:[#allocation9 + $0xb60] sm:$0xff]
      %v2157 = vld [vmem:[#allocation9 + $0xb68] sm:$0xff]
      %v2158 = vld [vmem:[#allocation9 + $0xb70] sm:$0xff]
      %v2159 = vld [vmem:[#allocation9 + $0xb78] sm:$0xff]
      %v2160 = vld [vmem:[#allocation9 + $0xb80] sm:$0xff]
      %v2161 = vld [vmem:[#allocation9 + $0xb88] sm:$0xff]
      %v2162 = vld [vmem:[#allocation9 + $0xb90] sm:$0xff]
      %v2163 = vld [vmem:[#allocation9 + $0xb98] sm:$0xff]
      %v2164 = vld [vmem:[#allocation9 + $0xba0] sm:$0xff]
      %v2165 = vld [vmem:[#allocation9 + $0xba8] sm:$0xff]
      %v2166 = vld [vmem:[#allocation9 + $0xbb0] sm:$0xff]
      %v2167 = vld [vmem:[#allocation9 + $0xbb8] sm:$0xff]
      %v2168 = vld [vmem:[#allocation9 + $0xbc0] sm:$0xff]
      %v2169 = vld [vmem:[#allocation9 + $0xbc8] sm:$0xff]
      %v2170 = vld [vmem:[#allocation9 + $0xbd0] sm:$0xff]
      %v2171 = vld [vmem:[#allocation9 + $0xbd8] sm:$0xff]
      %v2172 = vld [vmem:[#allocation9 + $0xbe0] sm:$0xff]
      %v2173 = vld [vmem:[#allocation9 + $0xbe8] sm:$0xff]
      %v2174 = vld [vmem:[#allocation9 + $0xbf0] sm:$0xff]
      %v2175 = vld [vmem:[#allocation9 + $0xbf8] sm:$0xff]
      %v2176 = vld [vmem:[#allocation11] sm:$0xf]
      %v2178 = vlaneseq
      %v2179 = vshrl.u32 %v2178, 7
      %v2180 = vsub.s32 0, %v2179
      %v2181 = vrot.slane %v2176, %v2180
      %v2182 = vlaneseq
      %v2183 = vshrl.u32 %v2182, 7
      %v2184 = vsub.s32 1, %v2183
      %v2185 = vrot.slane %v2176, %v2184
      %v2186 = vlaneseq
      %v2187 = vshrl.u32 %v2186, 7
      %v2188 = vsub.s32 2, %v2187
      %v2189 = vrot.slane %v2176, %v2188
      %v2190 = vlaneseq
      %v2191 = vshrl.u32 %v2190, 7
      %v2192 = vsub.s32 3, %v2191
      %v2193 = vrot.slane %v2176, %v2192
      %2198 = vmatprep.subr.mxu0 %v1793
      %2199 = vmatpush1.msra.mxu0 %v1792
      %2200 = vmatprep.subr.mxu0 %v1797
      %2201 = vmatpush1.msra.mxu0 %v1796
      %2202 = vmatprep.subr.mxu0 %v1801
      %2203 = vmatpush1.msra.mxu0 %v1800
      %2204 = vmatprep.subr.mxu0 %v1805
      %2205 = vmatpush1.msra.mxu0 %v1804
      %2206 = vmatprep.subr.mxu0 %v1809
      %2207 = vmatpush1.msra.mxu0 %v1808
      %2208 = vmatprep.subr.mxu0 %v1813
      %2209 = vmatpush1.msra.mxu0 %v1812
      %2210 = vmatprep.subr.mxu0 %v1817
      %2211 = vmatpush1.msra.mxu0 %v1816
      %2212 = vmatprep.subr.mxu0 %v1821
      %2213 = vmatpush1.msra.mxu0 %v1820
      %2214 = vmatprep.subr.mxu0 %v1825
      %2215 = vmatpush1.msra.mxu0 %v1824
      %2216 = vmatprep.subr.mxu0 %v1829
      %2217 = vmatpush1.msra.mxu0 %v1828
      %2218 = vmatprep.subr.mxu0 %v1833
      %2219 = vmatpush1.msra.mxu0 %v1832
      %2220 = vmatprep.subr.mxu0 %v1837
      %2221 = vmatpush1.msra.mxu0 %v1836
      %2222 = vmatprep.subr.mxu0 %v1841
      %2223 = vmatpush1.msra.mxu0 %v1840
      %2224 = vmatprep.subr.mxu0 %v1845
      %2225 = vmatpush1.msra.mxu0 %v1844
      %2226 = vmatprep.subr.mxu0 %v1849
      %2227 = vmatpush1.msra.mxu0 %v1848
      %2228 = vmatprep.subr.mxu0 %v1853
      %2229 = vmatpush1.msra.mxu0 %v1852
      %2230 = vmatprep.subr.mxu0 %v1857
      %2231 = vmatpush1.msra.mxu0 %v1856
      %2232 = vmatprep.subr.mxu0 %v1861
      %2233 = vmatpush1.msra.mxu0 %v1860
      %2234 = vmatprep.subr.mxu0 %v1865
      %2235 = vmatpush1.msra.mxu0 %v1864
      %2236 = vmatprep.subr.mxu0 %v1869
      %2237 = vmatpush1.msra.mxu0 %v1868
      %2238 = vmatprep.subr.mxu0 %v1873
      %2239 = vmatpush1.msra.mxu0 %v1872
      %2240 = vmatprep.subr.mxu0 %v1877
      %2241 = vmatpush1.msra.mxu0 %v1876
      %2242 = vmatprep.subr.mxu0 %v1881
      %2243 = vmatpush1.msra.mxu0 %v1880
      %2244 = vmatprep.subr.mxu0 %v1885
      %2245 = vmatpush1.msra.mxu0 %v1884
      %2246 = vmatprep.subr.mxu0 %v1889
      %2247 = vmatpush1.msra.mxu0 %v1888
      %2248 = vmatprep.subr.mxu0 %v1893
      %2249 = vmatpush1.msra.mxu0 %v1892
      %2250 = vmatprep.subr.mxu0 %v1897
      %2251 = vmatpush1.msra.mxu0 %v1896
      %2252 = vmatprep.subr.mxu0 %v1901
      %2253 = vmatpush1.msra.mxu0 %v1900
      %2254 = vmatprep.subr.mxu0 %v1905
      %2255 = vmatpush1.msra.mxu0 %v1904
      %2256 = vmatprep.subr.mxu0 %v1909
      %2257 = vmatpush1.msra.mxu0 %v1908
      %2258 = vmatprep.subr.mxu0 %v1913
      %2259 = vmatpush1.msra.mxu0 %v1912
      %2260 = vmatprep.subr.mxu0 %v1917
      %2261 = vmatpush1.msra.mxu0 %v1916
      %2262 = vmatprep.mubr.f32.mxu0 %v1787
      %2263 = vmatmul.mubr.f32.gmra.mrb[0].mxu0 %v1786
      %v2264 = vpop.f32.mrb[0].mxu0
      %v2265 = vadd.f32 %v2181, %v2264
      %v2266 = vpop.f32.mrb[0].mxu0
      %v2267 = vadd.f32 %v2185, %v2266
      %2268 = vdwg.mxu0
      %2269 = vmatprep.subr.mxu0 %v1921
      %2270 = vmatpush1.msra.mxu0 %v1920
      %2271 = vmatprep.subr.mxu0 %v1925
      %2272 = vmatpush1.msra.mxu0 %v1924
      %2273 = vmatprep.subr.mxu0 %v1929
      %2274 = vmatpush1.msra.mxu0 %v1928
      %2275 = vmatprep.subr.mxu0 %v1933
      %2276 = vmatpush1.msra.mxu0 %v1932
      %2277 = vmatprep.subr.mxu0 %v1937
      %2278 = vmatpush1.msra.mxu0 %v1936
      %2279 = vmatprep.subr.mxu0 %v1941
      %2280 = vmatpush1.msra.mxu0 %v1940
      %2281 = vmatprep.subr.mxu0 %v1945
      %2282 = vmatpush1.msra.mxu0 %v1944
      %2283 = vmatprep.subr.mxu0 %v1949
      %2284 = vmatpush1.msra.mxu0 %v1948
      %2285 = vmatprep.subr.mxu0 %v1953
      %2286 = vmatpush1.msra.mxu0 %v1952
      %2287 = vmatprep.subr.mxu0 %v1957
      %2288 = vmatpush1.msra.mxu0 %v1956
      %2289 = vmatprep.subr.mxu0 %v1961
      %2290 = vmatpush1.msra.mxu0 %v1960
      %2291 = vmatprep.subr.mxu0 %v1965
      %2292 = vmatpush1.msra.mxu0 %v1964
      %2293 = vmatprep.subr.mxu0 %v1969
      %2294 = vmatpush1.msra.mxu0 %v1968
      %2295 = vmatprep.subr.mxu0 %v1973
      %2296 = vmatpush1.msra.mxu0 %v1972
      %2297 = vmatprep.subr.mxu0 %v1977
      %2298 = vmatpush1.msra.mxu0 %v1976
      %2299 = vmatprep.subr.mxu0 %v1981
      %2300 = vmatpush1.msra.mxu0 %v1980
      %2301 = vmatprep.subr.mxu0 %v1985
      %2302 = vmatpush1.msra.mxu0 %v1984
      %2303 = vmatprep.subr.mxu0 %v1989
      %2304 = vmatpush1.msra.mxu0 %v1988
      %2305 = vmatprep.subr.mxu0 %v1993
      %2306 = vmatpush1.msra.mxu0 %v1992
      %2307 = vmatprep.subr.mxu0 %v1997
      %2308 = vmatpush1.msra.mxu0 %v1996
      %2309 = vmatprep.subr.mxu0 %v2001
      %2310 = vmatpush1.msra.mxu0 %v2000
      %2311 = vmatprep.subr.mxu0 %v2005
      %2312 = vmatpush1.msra.mxu0 %v2004
      %2313 = vmatprep.subr.mxu0 %v2009
      %2314 = vmatpush1.msra.mxu0 %v2008
      %2315 = vmatprep.subr.mxu0 %v2013
      %2316 = vmatpush1.msra.mxu0 %v2012
      %2317 = vmatprep.subr.mxu0 %v2017
      %2318 = vmatpush1.msra.mxu0 %v2016
      %2319 = vmatprep.subr.mxu0 %v2021
      %2320 = vmatpush1.msra.mxu0 %v2020
      %2321 = vmatprep.subr.mxu0 %v2025
      %2322 = vmatpush1.msra.mxu0 %v2024
      %2323 = vmatprep.subr.mxu0 %v2029
      %2324 = vmatpush1.msra.mxu0 %v2028
      %2325 = vmatprep.subr.mxu0 %v2033
      %2326 = vmatpush1.msra.mxu0 %v2032
      %2327 = vmatprep.subr.mxu0 %v2037
      %2328 = vmatpush1.msra.mxu0 %v2036
      %2329 = vmatprep.subr.mxu0 %v2041
      %2330 = vmatpush1.msra.mxu0 %v2040
      %2331 = vmatprep.subr.mxu0 %v2045
      %2332 = vmatpush1.msra.mxu0 %v2044
      %2333 = vmatprep.mubr.f32.mxu0 %v1789
      %2334 = vmatmul.mubr.f32.gmra.mrb[0].mxu0 %v1788
      %v2335 = vpop.f32.mrb[0].mxu0
      %v2336 = vadd.f32 %v2265, %v2335
      %v2337 = vpop.f32.mrb[0].mxu0
      %v2338 = vadd.f32 %v2267, %v2337
      %2339 = vdwg.mxu0
      %2340 = vmatprep.subr.mxu0 %v2049
      %2341 = vmatpush1.msra.mxu0 %v2048
      %2342 = vmatprep.subr.mxu0 %v2053
      %2343 = vmatpush1.msra.mxu0 %v2052
      %2344 = vmatprep.subr.mxu0 %v2057
      %2345 = vmatpush1.msra.mxu0 %v2056
      %2346 = vmatprep.subr.mxu0 %v2061
      %2347 = vmatpush1.msra.mxu0 %v2060
      %2348 = vmatprep.subr.mxu0 %v2065
      %2349 = vmatpush1.msra.mxu0 %v2064
      %2350 = vmatprep.subr.mxu0 %v2069
      %2351 = vmatpush1.msra.mxu0 %v2068
      %2352 = vmatprep.subr.mxu0 %v2073
      %2353 = vmatpush1.msra.mxu0 %v2072
      %2354 = vmatprep.subr.mxu0 %v2077
      %2355 = vmatpush1.msra.mxu0 %v2076
      %2356 = vmatprep.subr.mxu0 %v2081
      %2357 = vmatpush1.msra.mxu0 %v2080
      %2358 = vmatprep.subr.mxu0 %v2085
      %2359 = vmatpush1.msra.mxu0 %v2084
      %2360 = vmatprep.subr.mxu0 %v2089
      %2361 = vmatpush1.msra.mxu0 %v2088
      %2362 = vmatprep.subr.mxu0 %v2093
      %2363 = vmatpush1.msra.mxu0 %v2092
      %2364 = vmatprep.subr.mxu0 %v2097
      %2365 = vmatpush1.msra.mxu0 %v2096
      %2366 = vmatprep.subr.mxu0 %v2101
      %2367 = vmatpush1.msra.mxu0 %v2100
      %2368 = vmatprep.subr.mxu0 %v2105
      %2369 = vmatpush1.msra.mxu0 %v2104
      %2370 = vmatprep.subr.mxu0 %v2109
      %2371 = vmatpush1.msra.mxu0 %v2108
      %2372 = vmatprep.subr.mxu0 %v2113
      %2373 = vmatpush1.msra.mxu0 %v2112
      %2374 = vmatprep.subr.mxu0 %v2117
      %2375 = vmatpush1.msra.mxu0 %v2116
      %2376 = vmatprep.subr.mxu0 %v2121
      %2377 = vmatpush1.msra.mxu0 %v2120
      %2378 = vmatprep.subr.mxu0 %v2125
      %2379 = vmatpush1.msra.mxu0 %v2124
      %2380 = vmatprep.subr.mxu0 %v2129
      %2381 = vmatpush1.msra.mxu0 %v2128
      %2382 = vmatprep.subr.mxu0 %v2133
      %2383 = vmatpush1.msra.mxu0 %v2132
      %2384 = vmatprep.subr.mxu0 %v2137
      %2385 = vmatpush1.msra.mxu0 %v2136
      %2386 = vmatprep.subr.mxu0 %v2141
      %2387 = vmatpush1.msra.mxu0 %v2140
      %2388 = vmatprep.subr.mxu0 %v2145
      %2389 = vmatpush1.msra.mxu0 %v2144
      %2390 = vmatprep.subr.mxu0 %v2149
      %2391 = vmatpush1.msra.mxu0 %v2148
      %2392 = vmatprep.subr.mxu0 %v2153
      %2393 = vmatpush1.msra.mxu0 %v2152
      %2394 = vmatprep.subr.mxu0 %v2157
      %2395 = vmatpush1.msra.mxu0 %v2156
      %2396 = vmatprep.subr.mxu0 %v2161
      %2397 = vmatpush1.msra.mxu0 %v2160
      %2398 = vmatprep.subr.mxu0 %v2165
      %2399 = vmatpush1.msra.mxu0 %v2164
      %2400 = vmatprep.subr.mxu0 %v2169
      %2401 = vmatpush1.msra.mxu0 %v2168
      %2402 = vmatprep.subr.mxu0 %v2173
      %2403 = vmatpush1.msra.mxu0 %v2172
      %2404 = vmatprep.mubr.f32.mxu0 %v1791
      %2405 = vmatmul.mubr.f32.gmra.mrb[0].mxu0 %v1790
      %v2406 = vpop.f32.mrb[0].mxu0
      %v2407 = vadd.f32 %v2336, %v2406
      %v2408 = vpop.f32.mrb[0].mxu0
      %v2409 = vadd.f32 %v2338, %v2408
      %2410 = vdwg.mxu0
      %2411 = vmatprep.subr.mxu0 %v1795
      %2412 = vmatpush1.msra.mxu0 %v1794
      %2413 = vmatprep.subr.mxu0 %v1799
      %2414 = vmatpush1.msra.mxu0 %v1798
      %2415 = vmatprep.subr.mxu0 %v1803
      %2416 = vmatpush1.msra.mxu0 %v1802
      %2417 = vmatprep.subr.mxu0 %v1807
      %2418 = vmatpush1.msra.mxu0 %v1806
      %2419 = vmatprep.subr.mxu0 %v1811
      %2420 = vmatpush1.msra.mxu0 %v1810
      %2421 = vmatprep.subr.mxu0 %v1815
      %2422 = vmatpush1.msra.mxu0 %v1814
      %2423 = vmatprep.subr.mxu0 %v1819
      %2424 = vmatpush1.msra.mxu0 %v1818
      %2425 = vmatprep.subr.mxu0 %v1823
      %2426 = vmatpush1.msra.mxu0 %v1822
      %2427 = vmatprep.subr.mxu0 %v1827
      %2428 = vmatpush1.msra.mxu0 %v1826
      %2429 = vmatprep.subr.mxu0 %v1831
      %2430 = vmatpush1.msra.mxu0 %v1830
      %2431 = vmatprep.subr.mxu0 %v1835
      %2432 = vmatpush1.msra.mxu0 %v1834
      %2433 = vmatprep.subr.mxu0 %v1839
      %2434 = vmatpush1.msra.mxu0 %v1838
      %2435 = vmatprep.subr.mxu0 %v1843
      %2436 = vmatpush1.msra.mxu0 %v1842
      %2437 = vmatprep.subr.mxu0 %v1847
      %2438 = vmatpush1.msra.mxu0 %v1846
      %2439 = vmatprep.subr.mxu0 %v1851
      %2440 = vmatpush1.msra.mxu0 %v1850
      %2441 = vmatprep.subr.mxu0 %v1855
      %2442 = vmatpush1.msra.mxu0 %v1854
      %2443 = vmatprep.subr.mxu0 %v1859
      %2444 = vmatpush1.msra.mxu0 %v1858
      %2445 = vmatprep.subr.mxu0 %v1863
      %2446 = vmatpush1.msra.mxu0 %v1862
      %2447 = vmatprep.subr.mxu0 %v1867
      %2448 = vmatpush1.msra.mxu0 %v1866
      %2449 = vmatprep.subr.mxu0 %v1871
      %2450 = vmatpush1.msra.mxu0 %v1870
      %2451 = vmatprep.subr.mxu0 %v1875
      %2452 = vmatpush1.msra.mxu0 %v1874
      %2453 = vmatprep.subr.mxu0 %v1879
      %2454 = vmatpush1.msra.mxu0 %v1878
      %2455 = vmatprep.subr.mxu0 %v1883
      %2456 = vmatpush1.msra.mxu0 %v1882
      %2457 = vmatprep.subr.mxu0 %v1887
      %2458 = vmatpush1.msra.mxu0 %v1886
      %2459 = vmatprep.subr.mxu0 %v1891
      %2460 = vmatpush1.msra.mxu0 %v1890
      %2461 = vmatprep.subr.mxu0 %v1895
      %2462 = vmatpush1.msra.mxu0 %v1894
      %2463 = vmatprep.subr.mxu0 %v1899
      %2464 = vmatpush1.msra.mxu0 %v1898
      %2465 = vmatprep.subr.mxu0 %v1903
      %2466 = vmatpush1.msra.mxu0 %v1902
      %2467 = vmatprep.subr.mxu0 %v1907
      %2468 = vmatpush1.msra.mxu0 %v1906
      %2469 = vmatprep.subr.mxu0 %v1911
      %2470 = vmatpush1.msra.mxu0 %v1910
      %2471 = vmatprep.subr.mxu0 %v1915
      %2472 = vmatpush1.msra.mxu0 %v1914
      %2473 = vmatprep.subr.mxu0 %v1919
      %2474 = vmatpush1.msra.mxu0 %v1918
      %2475 = vmatprep.mubr.f32.mxu0 %v1787
      %2476 = vmatmul.mubr.f32.gmra.mrb[0].mxu0 %v1786
      %v2477 = vpop.f32.mrb[0].mxu0
      %v2478 = vadd.f32 %v2189, %v2477
      %v2479 = vpop.f32.mrb[0].mxu0
      %v2480 = vadd.f32 %v2193, %v2479
      %2481 = vdwg.mxu0
      %2482 = vmatprep.subr.mxu0 %v1923
      %2483 = vmatpush1.msra.mxu0 %v1922
      %2484 = vmatprep.subr.mxu0 %v1927
      %2485 = vmatpush1.msra.mxu0 %v1926
      %2486 = vmatprep.subr.mxu0 %v1931
      %2487 = vmatpush1.msra.mxu0 %v1930
      %2488 = vmatprep.subr.mxu0 %v1935
      %2489 = vmatpush1.msra.mxu0 %v1934
      %2490 = vmatprep.subr.mxu0 %v1939
      %2491 = vmatpush1.msra.mxu0 %v1938
      %2492 = vmatprep.subr.mxu0 %v1943
      %2493 = vmatpush1.msra.mxu0 %v1942
      %2494 = vmatprep.subr.mxu0 %v1947
      %2495 = vmatpush1.msra.mxu0 %v1946
      %2496 = vmatprep.subr.mxu0 %v1951
      %2497 = vmatpush1.msra.mxu0 %v1950
      %2498 = vmatprep.subr.mxu0 %v1955
      %2499 = vmatpush1.msra.mxu0 %v1954
      %2500 = vmatprep.subr.mxu0 %v1959
      %2501 = vmatpush1.msra.mxu0 %v1958
      %2502 = vmatprep.subr.mxu0 %v1963
      %2503 = vmatpush1.msra.mxu0 %v1962
      %2504 = vmatprep.subr.mxu0 %v1967
      %2505 = vmatpush1.msra.mxu0 %v1966
      %2506 = vmatprep.subr.mxu0 %v1971
      %2507 = vmatpush1.msra.mxu0 %v1970
      %2508 = vmatprep.subr.mxu0 %v1975
      %2509 = vmatpush1.msra.mxu0 %v1974
      %2510 = vmatprep.subr.mxu0 %v1979
      %2511 = vmatpush1.msra.mxu0 %v1978
      %2512 = vmatprep.subr.mxu0 %v1983
      %2513 = vmatpush1.msra.mxu0 %v1982
      %2514 = vmatprep.subr.mxu0 %v1987
      %2515 = vmatpush1.msra.mxu0 %v1986
      %2516 = vmatprep.subr.mxu0 %v1991
      %2517 = vmatpush1.msra.mxu0 %v1990
      %2518 = vmatprep.subr.mxu0 %v1995
      %2519 = vmatpush1.msra.mxu0 %v1994
      %2520 = vmatprep.subr.mxu0 %v1999
      %2521 = vmatpush1.msra.mxu0 %v1998
      %2522 = vmatprep.subr.mxu0 %v2003
      %2523 = vmatpush1.msra.mxu0 %v2002
      %2524 = vmatprep.subr.mxu0 %v2007
      %2525 = vmatpush1.msra.mxu0 %v2006
      %2526 = vmatprep.subr.mxu0 %v2011
      %2527 = vmatpush1.msra.mxu0 %v2010
      %2528 = vmatprep.subr.mxu0 %v2015
      %2529 = vmatpush1.msra.mxu0 %v2014
      %2530 = vmatprep.subr.mxu0 %v2019
      %2531 = vmatpush1.msra.mxu0 %v2018
      %2532 = vmatprep.subr.mxu0 %v2023
      %2533 = vmatpush1.msra.mxu0 %v2022
      %2534 = vmatprep.subr.mxu0 %v2027
      %2535 = vmatpush1.msra.mxu0 %v2026
      %2536 = vmatprep.subr.mxu0 %v2031
      %2537 = vmatpush1.msra.mxu0 %v2030
      %2538 = vmatprep.subr.mxu0 %v2035
      %2539 = vmatpush1.msra.mxu0 %v2034
      %2540 = vmatprep.subr.mxu0 %v2039
      %2541 = vmatpush1.msra.mxu0 %v2038
      %2542 = vmatprep.subr.mxu0 %v2043
      %2543 = vmatpush1.msra.mxu0 %v2042
      %2544 = vmatprep.subr.mxu0 %v2047
      %2545 = vmatpush1.msra.mxu0 %v2046
      %2546 = vmatprep.mubr.f32.mxu0 %v1789
      %2547 = vmatmul.mubr.f32.gmra.mrb[0].mxu0 %v1788
      %v2548 = vpop.f32.mrb[0].mxu0
      %v2549 = vadd.f32 %v2478, %v2548
      %v2550 = vpop.f32.mrb[0].mxu0
      %v2551 = vadd.f32 %v2480, %v2550
      %2552 = vdwg.mxu0
      %2553 = vmatprep.subr.mxu0 %v2051
      %2554 = vmatpush1.msra.mxu0 %v2050
      %2555 = vmatprep.subr.mxu0 %v2055
      %2556 = vmatpush1.msra.mxu0 %v2054
      %2557 = vmatprep.subr.mxu0 %v2059
      %2558 = vmatpush1.msra.mxu0 %v2058
      %2559 = vmatprep.subr.mxu0 %v2063
      %2560 = vmatpush1.msra.mxu0 %v2062
      %2561 = vmatprep.subr.mxu0 %v2067
      %2562 = vmatpush1.msra.mxu0 %v2066
      %2563 = vmatprep.subr.mxu0 %v2071
      %2564 = vmatpush1.msra.mxu0 %v2070
      %2565 = vmatprep.subr.mxu0 %v2075
      %2566 = vmatpush1.msra.mxu0 %v2074
      %2567 = vmatprep.subr.mxu0 %v2079
      %2568 = vmatpush1.msra.mxu0 %v2078
      %2569 = vmatprep.subr.mxu0 %v2083
      %2570 = vmatpush1.msra.mxu0 %v2082
      %2571 = vmatprep.subr.mxu0 %v2087
      %2572 = vmatpush1.msra.mxu0 %v2086
      %2573 = vmatprep.subr.mxu0 %v2091
      %2574 = vmatpush1.msra.mxu0 %v2090
      %2575 = vmatprep.subr.mxu0 %v2095
      %2576 = vmatpush1.msra.mxu0 %v2094
      %2577 = vmatprep.subr.mxu0 %v2099
      %2578 = vmatpush1.msra.mxu0 %v2098
      %2579 = vmatprep.subr.mxu0 %v2103
      %2580 = vmatpush1.msra.mxu0 %v2102
      %2581 = vmatprep.subr.mxu0 %v2107
      %2582 = vmatpush1.msra.mxu0 %v2106
      %2583 = vmatprep.subr.mxu0 %v2111
      %2584 = vmatpush1.msra.mxu0 %v2110
      %2585 = vmatprep.subr.mxu0 %v2115
      %2586 = vmatpush1.msra.mxu0 %v2114
      %2587 = vmatprep.subr.mxu0 %v2119
      %2588 = vmatpush1.msra.mxu0 %v2118
      %2589 = vmatprep.subr.mxu0 %v2123
      %2590 = vmatpush1.msra.mxu0 %v2122
      %2591 = vmatprep.subr.mxu0 %v2127
      %2592 = vmatpush1.msra.mxu0 %v2126
      %2593 = vmatprep.subr.mxu0 %v2131
      %2594 = vmatpush1.msra.mxu0 %v2130
      %2595 = vmatprep.subr.mxu0 %v2135
      %2596 = vmatpush1.msra.mxu0 %v2134
      %2597 = vmatprep.subr.mxu0 %v2139
      %2598 = vmatpush1.msra.mxu0 %v2138
      %2599 = vmatprep.subr.mxu0 %v2143
      %2600 = vmatpush1.msra.mxu0 %v2142
      %2601 = vmatprep.subr.mxu0 %v2147
      %2602 = vmatpush1.msra.mxu0 %v2146
      %2603 = vmatprep.subr.mxu0 %v2151
      %2604 = vmatpush1.msra.mxu0 %v2150
      %2605 = vmatprep.subr.mxu0 %v2155
      %2606 = vmatpush1.msra.mxu0 %v2154
      %2607 = vmatprep.subr.mxu0 %v2159
      %2608 = vmatpush1.msra.mxu0 %v2158
      %2609 = vmatprep.subr.mxu0 %v2163
      %2610 = vmatpush1.msra.mxu0 %v2162
      %2611 = vmatprep.subr.mxu0 %v2167
      %2612 = vmatpush1.msra.mxu0 %v2166
      %2613 = vmatprep.subr.mxu0 %v2171
      %2614 = vmatpush1.msra.mxu0 %v2170
      %2615 = vmatprep.subr.mxu0 %v2175
      %2616 = vmatpush1.msra.mxu0 %v2174
      %2617 = vmatprep.mubr.f32.mxu0 %v1791
      %2618 = vmatmul.mubr.f32.gmra.mrb[0].mxu0 %v1790
      %v2619 = vpop.f32.mrb[0].mxu0
      %v2620 = vadd.f32 %v2549, %v2619
      %v2621 = vpop.f32.mrb[0].mxu0
      %v2622 = vadd.f32 %v2551, %v2621
      %2623 = vdwg.mxu0
      %v2624 = vmax.f32 %v2407, 0.0
      %v2625 = vmax.f32 %v2409, 0.0
      %v2626 = vmax.f32 %v2620, 0.0
      %v2627 = vmax.f32 %v2622, 0.0
      %2628 = vst [vmem:[#allocation12] sm:$0xff] %v2624
      %2629 = vst [vmem:[#allocation12 + $0x8] sm:$0xff] %v2625
      %2630 = vst [vmem:[#allocation12 + $0x10] sm:$0xff] %v2626
      %2631 = vst [vmem:[#allocation12 + $0x18] sm:$0xff] %v2627
    $region49: #{tpu_custom_call.1} parent=1 // pred_fallthru
      _
    // Predicated region
    $region50: #{tpu_custom_call.1} parent=1 // pred_check
      _
    $region51: #{tpu_custom_call.1} parent=1 // pred_check_branch
      %2633 = sbr.rel (0) target = $region53
    $region52: #{tpu_custom_call.1} parent=1 // pred_region
      %s2635 = ssub.s32 512, 512
      %2636 = vsyncadd [#allocation5], %s2635
      %s2638 = sshll.u32 [#allocation12], 4
      %s2639 = int_to_ptr.vmem [resolvable:$true] %s2638
      %2641 = dma.vmem_to_hbm [thread:$0]  %s2639, 512, %s5, [#allocation5]
    $region53: #{tpu_custom_call.1} parent=1 // pred_fallthru
      _
    // Predicated region
    $region54: #{tpu_custom_call.1} parent=1 // pred_check
      _
    $region55: #{tpu_custom_call.1} parent=1 // pred_check_branch
      %2643 = sbr.rel (0) target = $region57
    $region56: #{tpu_custom_call.1} parent=1 // pred_region
      %2644 = dma.done [#allocation5], 512
    $region57: #{tpu_custom_call.1} parent=1 // pred_fallthru
      _
    %2645 = vsyncpa [#allocation4], 1
    %2646 = vsyncpa [#allocation7], 1
    %2647 = vsyncpa [#allocation10], 1
    %2648 = vsyncpa [#allocation5], 1

</llo_original>
